<compile_context>
chip_gen: v5e
topology: v5e:2x2
jax: 0.10.0
libtpu: 0.0.40
codegen_flags: <defaults>
</compile_context>

<pallas_src>
import math
import jax
import jax.numpy as jnp
from jax.experimental import pallas as pl
from jax.experimental.pallas import tpu as pltpu

# ---- problem sizes (what the module implies: feature_ratio = sqrt(256/4) = 8)
B = 2              # batch
FEATURE_DIM = 4    # conv in-channels
H = W = 8          # spatial
HW = H * W
STATE_DIM = FEATURE_DIM * H * W                       # 256
CONV_OUT = 32
FLAT_DIM = int(STATE_DIM * CONV_OUT / FEATURE_DIM)    # 32*H*W = 2048
HIDDEN = 32        # hidden_state_dim (small for the demo)
GLANE = 128        # per-gate lane block (aligned slices)
OUT_LANES = 2 * GLANE   # output slab: lanes 0:128 hidden, 128:130 action


# ---------------------------- fused Pallas kernel ----------------------------
def _actor_critic_kernel(x_ref, cw_ref, fcw_ref, fcb_ref,
                         wg_ref, bg_ref, bhn_ref, aw_ref, ab_ref, out_ref):
    f32 = jnp.float32

    # Hoist the four per-channel [B, HW] lane slabs of x once.
    xc = [x_ref[:, c * HW:(c + 1) * HW] for c in range(FEATURE_DIM)]
    bsz = xc[0].shape[0]

    # 1x1 conv + ReLU + Flatten + Linear, with NO block-diagonal weight:
    # for each conv output channel o, y_o = relu(sum_c conv_w[o,c] * x_c)
    # (VPU FMAs on [B,64] slabs, conv weights are SMEM scalars), then
    # accumulate enc += y_o @ fcw_t[o*HW:(o+1)*HW, :]  (channel-major flatten
    # order == PyTorch nn.Flatten, so fcw_t needs no permutation).
    acc = jnp.zeros((bsz, HIDDEN), f32)
    for o in range(CONV_OUT):
        y_o = xc[0] * cw_ref[o * FEATURE_DIM + 0]
        for c in range(1, FEATURE_DIM):
            y_o = y_o + xc[c] * cw_ref[o * FEATURE_DIM + c]
        y_o = jnp.maximum(y_o, 0.0)
        acc = acc + jnp.dot(y_o, fcw_ref[o * HW:(o + 1) * HW, :],
                            preferred_element_type=f32)
    enc = jnp.maximum(acc + fcb_ref[...], 0.0)                       # [B, HIDDEN]

    # Single-step GRU with h0 == 0 (restart_batch=True).  One concatenated
    # input-gate matmul; each gate padded to its own 128-lane block so all
    # slices are lane-tile aligned.  r/z biases already include b_hh; the
    # n-gate hidden bias enters via r * b_hn.  Padded lanes: g==0 -> r=z=0.5,
    # n=tanh(0)=0 -> h==0 exactly on lanes HIDDEN:128.
    g = jnp.dot(enc, wg_ref[...], preferred_element_type=f32) + bg_ref[...]   # [B, 3*128]
    r = jax.nn.sigmoid(g[:, 0:GLANE])
    z = jax.nn.sigmoid(g[:, GLANE:2 * GLANE])
    n = jnp.tanh(g[:, 2 * GLANE:3 * GLANE] + r * bhn_ref[...])
    h = (1.0 - z) * n                                                # + z*h0, h0 == 0

    # Actor head: Linear(HIDDEN, 2) + Sigmoid -> action_mean.  actor weight is
    # zero-padded to [128, 2] so h's full 128-lane vreg feeds the MXU directly.
    act = jax.nn.sigmoid(
        jnp.dot(h, aw_ref[...], preferred_element_type=f32) + ab_ref[...])    # [B, 2]

    # Output slab [B, 256]: aligned full-tile store of h (lanes 32:128 are
    # exact zeros), then one masked 2-lane store for the action.
    out_ref[:, 0:GLANE] = h
    out_ref[:, GLANE:GLANE + 2] = act
    # TODO(synk): critic head / MultivariateNormal sampling (training=True path)
    # are not part of the deterministic act() output and are omitted.


def _vmem_spec():
    return pl.BlockSpec(memory_space=pltpu.MemorySpace.VMEM)


def _smem_spec():
    return pl.BlockSpec(memory_space=pltpu.MemorySpace.SMEM)


# ----------------------- one-time parameter preparation ----------------------
def prepare_params(p):
    """Hoist ALL weight plumbing out of the per-call path (run once)."""
    f32 = jnp.float32

    # Raw 1x1 conv weights, flat row-major (o, c) -> SMEM scalars in-kernel.
    conv_w_flat = p['conv_w'].reshape(-1).astype(f32)              # [CONV_OUT*FEATURE_DIM]

    fcw_t = p['fc_w'].T.astype(f32)                                # [FLAT_DIM, HIDDEN]
    fc_b = p['fc_b'].reshape(1, HIDDEN).astype(f32)

    # GRU input-gate weights, one 128-lane block per gate (r | z | n).
    w_ih_t = p['w_ih'].T                                           # [HIDDEN, 3*HIDDEN]
    w_gates = jnp.zeros((HIDDEN, 3 * GLANE), f32)
    b_gates = jnp.zeros((1, 3 * GLANE), f32)
    for gi in range(3):
        w_gates = w_gates.at[:, gi * GLANE:gi * GLANE + HIDDEN].set(
            w_ih_t[:, gi * HIDDEN:(gi + 1) * HIDDEN])
    # r/z biases: b_ih + b_hh ; n gate: only b_in here (b_hn goes inside r*(.)).
    b_gates = b_gates.at[0, 0:HIDDEN].set(p['b_ih'][0:HIDDEN] + p['b_hh'][0:HIDDEN])
    b_gates = b_gates.at[0, GLANE:GLANE + HIDDEN].set(
        p['b_ih'][HIDDEN:2 * HIDDEN] + p['b_hh'][HIDDEN:2 * HIDDEN])
    b_gates = b_gates.at[0, 2 * GLANE:2 * GLANE + HIDDEN].set(
        p['b_ih'][2 * HIDDEN:3 * HIDDEN])

    b_hn = jnp.zeros((1, GLANE), f32).at[0, 0:HIDDEN].set(p['b_hh'][2 * HIDDEN:])

    actor_w_pad = jnp.zeros((GLANE, 2), f32).at[0:HIDDEN, :].set(p['actor_w'].T)
    actor_b = p['actor_b'].reshape(1, 2).astype(f32)

    return dict(conv_w_flat=conv_w_flat, fcw_t=fcw_t, fc_b=fc_b,
                w_gates=w_gates, b_gates=b_gates, b_hn=b_hn,
                actor_w_pad=actor_w_pad, actor_b=actor_b)


# ---------------------------------- wrapper ----------------------------------
def actor_critic_act(x_nchw, prep):
    """Deterministic ActorCritic.act (restart_batch=True, training=False).

    Returns (action_mean [B,2], hidden [B,HIDDEN])."""
    Bx = x_nchw.shape[0]
    # Free, contiguous reshape: NCHW -> [B, C*H*W] (channel-major flatten).
    x_flat = x_nchw.reshape(Bx, FEATURE_DIM * HW)

    slab = pl.pallas_call(
        _actor_critic_kernel,
        out_shape=jax.ShapeDtypeStruct((Bx, OUT_LANES), jnp.float32),
        in_specs=[_vmem_spec(), _smem_spec()] + [_vmem_spec()] * 7,
        out_specs=_vmem_spec(),
    )(x_flat, prep['conv_w_flat'], prep['fcw_t'], prep['fc_b'],
      prep['w_gates'], prep['b_gates'], prep['b_hn'],
      prep['actor_w_pad'], prep['actor_b'])

    hidden = slab[:, :HIDDEN]
    action = slab[:, GLANE:GLANE + 2]
    return action, hidden


# --------------------- deterministic parameter init --------------------------
def init_params(key):
    ks = jax.random.split(key, 9)

    def u(k, shape, fan_in):
        bound = 1.0 / math.sqrt(fan_in)
        return jax.random.uniform(k, shape, jnp.float32, -bound, bound)

    return {
        'conv_w':  u(ks[0], (CONV_OUT, FEATURE_DIM), FEATURE_DIM),   # 1x1 conv, no bias
        'fc_w':    u(ks[1], (HIDDEN, FLAT_DIM), FLAT_DIM),
        'fc_b':    u(ks[2], (HIDDEN,), FLAT_DIM),
        'w_ih':    u(ks[3], (3 * HIDDEN, HIDDEN), HIDDEN),
        'w_hh':    u(ks[4], (3 * HIDDEN, HIDDEN), HIDDEN),
        'b_ih':    u(ks[5], (3 * HIDDEN,), HIDDEN),
        'b_hh':    u(ks[6], (3 * HIDDEN,), HIDDEN),
        'actor_w': u(ks[7], (2, HIDDEN), HIDDEN),
        'actor_b': u(ks[8], (2,), HIDDEN),
    }


# ------------------------- pure-JAX reference --------------------------------
def reference_act(x_nchw, p):
    y = jnp.einsum('oc,bchw->bohw', p['conv_w'], x_nchw)
    y = jnp.maximum(y, 0.0)
    flat = y.reshape(x_nchw.shape[0], -1)                       # PyTorch Flatten order
    enc = jnp.maximum(flat @ p['fc_w'].T + p['fc_b'], 0.0)
    h0 = jnp.zeros((x_nchw.shape[0], HIDDEN), jnp.float32)
    gi = enc @ p['w_ih'].T + p['b_ih']
    gh = h0 @ p['w_hh'].T + p['b_hh']
    i_r, i_z, i_n = jnp.split(gi, 3, axis=1)
    h_r, h_z, h_n = jnp.split(gh, 3, axis=1)
    r = jax.nn.sigmoid(i_r + h_r)
    z = jax.nn.sigmoid(i_z + h_z)
    n = jnp.tanh(i_n + r * h_n)
    h = (1.0 - z) * n + z * h0
    act = jax.nn.sigmoid(h @ p['actor_w'].T + p['actor_b'])
    return act, h


if __name__ == "__main__":
    key = jax.random.PRNGKey(0)
    kx, kp = jax.random.split(key)
    x = jax.random.normal(kx, (B, FEATURE_DIM, H, W), jnp.float32)
    params = init_params(kp)

    # One-time weight preparation (hoisted out of the per-call path).
    prep = jax.block_until_ready(prepare_params(params))

    act_fn = jax.jit(actor_critic_act)
    action, hidden = jax.block_until_ready(act_fn(x, prep))

    ref_action, ref_hidden = reference_act(x, params)
    assert jnp.allclose(action, ref_action, atol=1e-4, rtol=1e-4)
    assert jnp.allclose(hidden, ref_hidden, atol=1e-4, rtol=1e-4)
    print("KERNEL_OK")
</pallas_src>

<mosaic_0001>
module attributes {stable_mosaic.version = 11 : i64} {
  func.func @_actor_critic_kernel(%arg0: memref<2x256xf32, #tpu.memory_space<vmem>>, %arg1: memref<128xf32, #tpu.memory_space<smem>>, %arg2: memref<2048x32xf32, #tpu.memory_space<vmem>>, %arg3: memref<1x32xf32, #tpu.memory_space<vmem>>, %arg4: memref<32x384xf32, #tpu.memory_space<vmem>>, %arg5: memref<1x384xf32, #tpu.memory_space<vmem>>, %arg6: memref<1x128xf32, #tpu.memory_space<vmem>>, %arg7: memref<128x2xf32, #tpu.memory_space<vmem>>, %arg8: memref<1x2xf32, #tpu.memory_space<vmem>>, %arg9: memref<2x256xf32, #tpu.memory_space<vmem>>) attributes {dimension_semantics = [], scalar_prefetch = 0 : i64, scratch_operands = 0 : i64, tpu.core_type = #tpu.core_type<tc>} {
    %c0 = arith.constant 0 : index
    %c0_0 = arith.constant 0 : index
    %0 = vector.load %arg0[%c0, %c0_0] : memref<2x256xf32, #tpu.memory_space<vmem>>, vector<2x64xf32>
    %c0_1 = arith.constant 0 : index
    %c64 = arith.constant 64 : index
    %1 = vector.load %arg0[%c0_1, %c64] : memref<2x256xf32, #tpu.memory_space<vmem>>, vector<2x64xf32>
    %c0_2 = arith.constant 0 : index
    %c128 = arith.constant 128 : index
    %2 = vector.load %arg0[%c0_2, %c128] : memref<2x256xf32, #tpu.memory_space<vmem>>, vector<2x64xf32>
    %c0_3 = arith.constant 0 : index
    %c192 = arith.constant 192 : index
    %3 = vector.load %arg0[%c0_3, %c192] : memref<2x256xf32, #tpu.memory_space<vmem>>, vector<2x64xf32>
    %cst = arith.constant 0.000000e+00 : f32
    %4 = vector.broadcast %cst : f32 to vector<2x32xf32>
    %c0_4 = arith.constant 0 : index
    %5 = memref.load %arg1[%c0_4] : memref<128xf32, #tpu.memory_space<smem>>
    %6 = vector.broadcast %5 : f32 to vector<2x64xf32>
    %7 = arith.mulf %0, %6 : vector<2x64xf32>
    %c1 = arith.constant 1 : index
    %8 = memref.load %arg1[%c1] : memref<128xf32, #tpu.memory_space<smem>>
    %9 = vector.broadcast %8 : f32 to vector<2x64xf32>
    %10 = arith.mulf %1, %9 : vector<2x64xf32>
    %11 = arith.addf %7, %10 : vector<2x64xf32>
    %c2 = arith.constant 2 : index
    %12 = memref.load %arg1[%c2] : memref<128xf32, #tpu.memory_space<smem>>
    %13 = vector.broadcast %12 : f32 to vector<2x64xf32>
    %14 = arith.mulf %2, %13 : vector<2x64xf32>
    %15 = arith.addf %11, %14 : vector<2x64xf32>
    %c3 = arith.constant 3 : index
    %16 = memref.load %arg1[%c3] : memref<128xf32, #tpu.memory_space<smem>>
    %17 = vector.broadcast %16 : f32 to vector<2x64xf32>
    %18 = arith.mulf %3, %17 : vector<2x64xf32>
    %19 = arith.addf %15, %18 : vector<2x64xf32>
    %cst_5 = arith.constant 0.000000e+00 : f32
    %20 = vector.broadcast %cst_5 : f32 to vector<2x64xf32>
    %21 = arith.maximumf %19, %20 : vector<2x64xf32>
    %c0_6 = arith.constant 0 : index
    %c0_7 = arith.constant 0 : index
    %22 = vector.load %arg2[%c0_6, %c0_7] : memref<2048x32xf32, #tpu.memory_space<vmem>>, vector<64x32xf32>
    %cst_8 = arith.constant dense<0.000000e+00> : vector<2x32xf32>
    %23 = tpu.matmul %21, %22, %cst_8 {dimension_numbers = #tpu.dot_dimension_numbers<[1], [0], [0], [1], [0, 0, 1, 1], [], []>} : vector<2x64xf32>, vector<64x32xf32>, vector<2x32xf32> -> vector<2x32xf32>
    %24 = arith.addf %4, %23 : vector<2x32xf32>
    %c4 = arith.constant 4 : index
    %25 = memref.load %arg1[%c4] : memref<128xf32, #tpu.memory_space<smem>>
    %26 = vector.broadcast %25 : f32 to vector<2x64xf32>
    %27 = arith.mulf %0, %26 : vector<2x64xf32>
    %c5 = arith.constant 5 : index
    %28 = memref.load %arg1[%c5] : memref<128xf32, #tpu.memory_space<smem>>
    %29 = vector.broadcast %28 : f32 to vector<2x64xf32>
    %30 = arith.mulf %1, %29 : vector<2x64xf32>
    %31 = arith.addf %27, %30 : vector<2x64xf32>
    %c6 = arith.constant 6 : index
    %32 = memref.load %arg1[%c6] : memref<128xf32, #tpu.memory_space<smem>>
    %33 = vector.broadcast %32 : f32 to vector<2x64xf32>
    %34 = arith.mulf %2, %33 : vector<2x64xf32>
    %35 = arith.addf %31, %34 : vector<2x64xf32>
    %c7 = arith.constant 7 : index
    %36 = memref.load %arg1[%c7] : memref<128xf32, #tpu.memory_space<smem>>
    %37 = vector.broadcast %36 : f32 to vector<2x64xf32>
    %38 = arith.mulf %3, %37 : vector<2x64xf32>
    %39 = arith.addf %35, %38 : vector<2x64xf32>
    %cst_9 = arith.constant 0.000000e+00 : f32
    %40 = vector.broadcast %cst_9 : f32 to vector<2x64xf32>
    %41 = arith.maximumf %39, %40 : vector<2x64xf32>
    %c64_10 = arith.constant 64 : index
    %c0_11 = arith.constant 0 : index
    %42 = vector.load %arg2[%c64_10, %c0_11] : memref<2048x32xf32, #tpu.memory_space<vmem>>, vector<64x32xf32>
    %cst_12 = arith.constant dense<0.000000e+00> : vector<2x32xf32>
    %43 = tpu.matmul %41, %42, %cst_12 {dimension_numbers = #tpu.dot_dimension_numbers<[1], [0], [0], [1], [0, 0, 1, 1], [], []>} : vector<2x64xf32>, vector<64x32xf32>, vector<2x32xf32> -> vector<2x32xf32>
    %44 = arith.addf %24, %43 : vector<2x32xf32>
    %c8 = arith.constant 8 : index
    %45 = memref.load %arg1[%c8] : memref<128xf32, #tpu.memory_space<smem>>
    %46 = vector.broadcast %45 : f32 to vector<2x64xf32>
    %47 = arith.mulf %0, %46 : vector<2x64xf32>
    %c9 = arith.constant 9 : index
    %48 = memref.load %arg1[%c9] : memref<128xf32, #tpu.memory_space<smem>>
    %49 = vector.broadcast %48 : f32 to vector<2x64xf32>
    %50 = arith.mulf %1, %49 : vector<2x64xf32>
    %51 = arith.addf %47, %50 : vector<2x64xf32>
    %c10 = arith.constant 10 : index
    %52 = memref.load %arg1[%c10] : memref<128xf32, #tpu.memory_space<smem>>
    %53 = vector.broadcast %52 : f32 to vector<2x64xf32>
    %54 = arith.mulf %2, %53 : vector<2x64xf32>
    %55 = arith.addf %51, %54 : vector<2x64xf32>
    %c11 = arith.constant 11 : index
    %56 = memref.load %arg1[%c11] : memref<128xf32, #tpu.memory_space<smem>>
    %57 = vector.broadcast %56 : f32 to vector<2x64xf32>
    %58 = arith.mulf %3, %57 : vector<2x64xf32>
    %59 = arith.addf %55, %58 : vector<2x64xf32>
    %cst_13 = arith.constant 0.000000e+00 : f32
    %60 = vector.broadcast %cst_13 : f32 to vector<2x64xf32>
    %61 = arith.maximumf %59, %60 : vector<2x64xf32>
    %c128_14 = arith.constant 128 : index
    %c0_15 = arith.constant 0 : index
    %62 = vector.load %arg2[%c128_14, %c0_15] : memref<2048x32xf32, #tpu.memory_space<vmem>>, vector<64x32xf32>
    %cst_16 = arith.constant dense<0.000000e+00> : vector<2x32xf32>
    %63 = tpu.matmul %61, %62, %cst_16 {dimension_numbers = #tpu.dot_dimension_numbers<[1], [0], [0], [1], [0, 0, 1, 1], [], []>} : vector<2x64xf32>, vector<64x32xf32>, vector<2x32xf32> -> vector<2x32xf32>
    %64 = arith.addf %44, %63 : vector<2x32xf32>
    %c12 = arith.constant 12 : index
    %65 = memref.load %arg1[%c12] : memref<128xf32, #tpu.memory_space<smem>>
    %66 = vector.broadcast %65 : f32 to vector<2x64xf32>
    %67 = arith.mulf %0, %66 : vector<2x64xf32>
    %c13 = arith.constant 13 : index
    %68 = memref.load %arg1[%c13] : memref<128xf32, #tpu.memory_space<smem>>
    %69 = vector.broadcast %68 : f32 to vector<2x64xf32>
    %70 = arith.mulf %1, %69 : vector<2x64xf32>
    %71 = arith.addf %67, %70 : vector<2x64xf32>
    %c14 = arith.constant 14 : index
    %72 = memref.load %arg1[%c14] : memref<128xf32, #tpu.memory_space<smem>>
    %73 = vector.broadcast %72 : f32 to vector<2x64xf32>
    %74 = arith.mulf %2, %73 : vector<2x64xf32>
    %75 = arith.addf %71, %74 : vector<2x64xf32>
    %c15 = arith.constant 15 : index
    %76 = memref.load %arg1[%c15] : memref<128xf32, #tpu.memory_space<smem>>
    %77 = vector.broadcast %76 : f32 to vector<2x64xf32>
    %78 = arith.mulf %3, %77 : vector<2x64xf32>
    %79 = arith.addf %75, %78 : vector<2x64xf32>
    %cst_17 = arith.constant 0.000000e+00 : f32
    %80 = vector.broadcast %cst_17 : f32 to vector<2x64xf32>
    %81 = arith.maximumf %79, %80 : vector<2x64xf32>
    %c192_18 = arith.constant 192 : index
    %c0_19 = arith.constant 0 : index
    %82 = vector.load %arg2[%c192_18, %c0_19] : memref<2048x32xf32, #tpu.memory_space<vmem>>, vector<64x32xf32>
    %cst_20 = arith.constant dense<0.000000e+00> : vector<2x32xf32>
    %83 = tpu.matmul %81, %82, %cst_20 {dimension_numbers = #tpu.dot_dimension_numbers<[1], [0], [0], [1], [0, 0, 1, 1], [], []>} : vector<2x64xf32>, vector<64x32xf32>, vector<2x32xf32> -> vector<2x32xf32>
    %84 = arith.addf %64, %83 : vector<2x32xf32>
    %c16 = arith.constant 16 : index
    %85 = memref.load %arg1[%c16] : memref<128xf32, #tpu.memory_space<smem>>
    %86 = vector.broadcast %85 : f32 to vector<2x64xf32>
    %87 = arith.mulf %0, %86 : vector<2x64xf32>
    %c17 = arith.constant 17 : index
    %88 = memref.load %arg1[%c17] : memref<128xf32, #tpu.memory_space<smem>>
    %89 = vector.broadcast %88 : f32 to vector<2x64xf32>
    %90 = arith.mulf %1, %89 : vector<2x64xf32>
    %91 = arith.addf %87, %90 : vector<2x64xf32>
    %c18 = arith.constant 18 : index
    %92 = memref.load %arg1[%c18] : memref<128xf32, #tpu.memory_space<smem>>
    %93 = vector.broadcast %92 : f32 to vector<2x64xf32>
    %94 = arith.mulf %2, %93 : vector<2x64xf32>
    %95 = arith.addf %91, %94 : vector<2x64xf32>
    %c19 = arith.constant 19 : index
    %96 = memref.load %arg1[%c19] : memref<128xf32, #tpu.memory_space<smem>>
    %97 = vector.broadcast %96 : f32 to vector<2x64xf32>
    %98 = arith.mulf %3, %97 : vector<2x64xf32>
    %99 = arith.addf %95, %98 : vector<2x64xf32>
    %cst_21 = arith.constant 0.000000e+00 : f32
    %100 = vector.broadcast %cst_21 : f32 to vector<2x64xf32>
    %101 = arith.maximumf %99, %100 : vector<2x64xf32>
    %c256 = arith.constant 256 : index
    %c0_22 = arith.constant 0 : index
    %102 = vector.load %arg2[%c256, %c0_22] : memref<2048x32xf32, #tpu.memory_space<vmem>>, vector<64x32xf32>
    %cst_23 = arith.constant dense<0.000000e+00> : vector<2x32xf32>
    %103 = tpu.matmul %101, %102, %cst_23 {dimension_numbers = #tpu.dot_dimension_numbers<[1], [0], [0], [1], [0, 0, 1, 1], [], []>} : vector<2x64xf32>, vector<64x32xf32>, vector<2x32xf32> -> vector<2x32xf32>
    %104 = arith.addf %84, %103 : vector<2x32xf32>
    %c20 = arith.constant 20 : index
    %105 = memref.load %arg1[%c20] : memref<128xf32, #tpu.memory_space<smem>>
    %106 = vector.broadcast %105 : f32 to vector<2x64xf32>
    %107 = arith.mulf %0, %106 : vector<2x64xf32>
    %c21 = arith.constant 21 : index
    %108 = memref.load %arg1[%c21] : memref<128xf32, #tpu.memory_space<smem>>
    %109 = vector.broadcast %108 : f32 to vector<2x64xf32>
    %110 = arith.mulf %1, %109 : vector<2x64xf32>
    %111 = arith.addf %107, %110 : vector<2x64xf32>
    %c22 = arith.constant 22 : index
    %112 = memref.load %arg1[%c22] : memref<128xf32, #tpu.memory_space<smem>>
    %113 = vector.broadcast %112 : f32 to vector<2x64xf32>
    %114 = arith.mulf %2, %113 : vector<2x64xf32>
    %115 = arith.addf %111, %114 : vector<2x64xf32>
    %c23 = arith.constant 23 : index
    %116 = memref.load %arg1[%c23] : memref<128xf32, #tpu.memory_space<smem>>
    %117 = vector.broadcast %116 : f32 to vector<2x64xf32>
    %118 = arith.mulf %3, %117 : vector<2x64xf32>
    %119 = arith.addf %115, %118 : vector<2x64xf32>
    %cst_24 = arith.constant 0.000000e+00 : f32
    %120 = vector.broadcast %cst_24 : f32 to vector<2x64xf32>
    %121 = arith.maximumf %119, %120 : vector<2x64xf32>
    %c320 = arith.constant 320 : index
    %c0_25 = arith.constant 0 : index
    %122 = vector.load %arg2[%c320, %c0_25] : memref<2048x32xf32, #tpu.memory_space<vmem>>, vector<64x32xf32>
    %cst_26 = arith.constant dense<0.000000e+00> : vector<2x32xf32>
    %123 = tpu.matmul %121, %122, %cst_26 {dimension_numbers = #tpu.dot_dimension_numbers<[1], [0], [0], [1], [0, 0, 1, 1], [], []>} : vector<2x64xf32>, vector<64x32xf32>, vector<2x32xf32> -> vector<2x32xf32>
    %124 = arith.addf %104, %123 : vector<2x32xf32>
    %c24 = arith.constant 24 : index
    %125 = memref.load %arg1[%c24] : memref<128xf32, #tpu.memory_space<smem>>
    %126 = vector.broadcast %125 : f32 to vector<2x64xf32>
    %127 = arith.mulf %0, %126 : vector<2x64xf32>
    %c25 = arith.constant 25 : index
    %128 = memref.load %arg1[%c25] : memref<128xf32, #tpu.memory_space<smem>>
    %129 = vector.broadcast %128 : f32 to vector<2x64xf32>
    %130 = arith.mulf %1, %129 : vector<2x64xf32>
    %131 = arith.addf %127, %130 : vector<2x64xf32>
    %c26 = arith.constant 26 : index
    %132 = memref.load %arg1[%c26] : memref<128xf32, #tpu.memory_space<smem>>
    %133 = vector.broadcast %132 : f32 to vector<2x64xf32>
    %134 = arith.mulf %2, %133 : vector<2x64xf32>
    %135 = arith.addf %131, %134 : vector<2x64xf32>
    %c27 = arith.constant 27 : index
    %136 = memref.load %arg1[%c27] : memref<128xf32, #tpu.memory_space<smem>>
    %137 = vector.broadcast %136 : f32 to vector<2x64xf32>
    %138 = arith.mulf %3, %137 : vector<2x64xf32>
    %139 = arith.addf %135, %138 : vector<2x64xf32>
    %cst_27 = arith.constant 0.000000e+00 : f32
    %140 = vector.broadcast %cst_27 : f32 to vector<2x64xf32>
    %141 = arith.maximumf %139, %140 : vector<2x64xf32>
    %c384 = arith.constant 384 : index
    %c0_28 = arith.constant 0 : index
    %142 = vector.load %arg2[%c384, %c0_28] : memref<2048x32xf32, #tpu.memory_space<vmem>>, vector<64x32xf32>
    %cst_29 = arith.constant dense<0.000000e+00> : vector<2x32xf32>
    %143 = tpu.matmul %141, %142, %cst_29 {dimension_numbers = #tpu.dot_dimension_numbers<[1], [0], [0], [1], [0, 0, 1, 1], [], []>} : vector<2x64xf32>, vector<64x32xf32>, vector<2x32xf32> -> vector<2x32xf32>
    %144 = arith.addf %124, %143 : vector<2x32xf32>
    %c28 = arith.constant 28 : index
    %145 = memref.load %arg1[%c28] : memref<128xf32, #tpu.memory_space<smem>>
    %146 = vector.broadcast %145 : f32 to vector<2x64xf32>
    %147 = arith.mulf %0, %146 : vector<2x64xf32>
    %c29 = arith.constant 29 : index
    %148 = memref.load %arg1[%c29] : memref<128xf32, #tpu.memory_space<smem>>
    %149 = vector.broadcast %148 : f32 to vector<2x64xf32>
    %150 = arith.mulf %1, %149 : vector<2x64xf32>
    %151 = arith.addf %147, %150 : vector<2x64xf32>
    %c30 = arith.constant 30 : index
    %152 = memref.load %arg1[%c30] : memref<128xf32, #tpu.memory_space<smem>>
    %153 = vector.broadcast %152 : f32 to vector<2x64xf32>
    %154 = arith.mulf %2, %153 : vector<2x64xf32>
    %155 = arith.addf %151, %154 : vector<2x64xf32>
    %c31 = arith.constant 31 : index
    %156 = memref.load %arg1[%c31] : memref<128xf32, #tpu.memory_space<smem>>
    %157 = vector.broadcast %156 : f32 to vector<2x64xf32>
    %158 = arith.mulf %3, %157 : vector<2x64xf32>
    %159 = arith.addf %155, %158 : vector<2x64xf32>
    %cst_30 = arith.constant 0.000000e+00 : f32
    %160 = vector.broadcast %cst_30 : f32 to vector<2x64xf32>
    %161 = arith.maximumf %159, %160 : vector<2x64xf32>
    %c448 = arith.constant 448 : index
    %c0_31 = arith.constant 0 : index
    %162 = vector.load %arg2[%c448, %c0_31] : memref<2048x32xf32, #tpu.memory_space<vmem>>, vector<64x32xf32>
    %cst_32 = arith.constant dense<0.000000e+00> : vector<2x32xf32>
    %163 = tpu.matmul %161, %162, %cst_32 {dimension_numbers = #tpu.dot_dimension_numbers<[1], [0], [0], [1], [0, 0, 1, 1], [], []>} : vector<2x64xf32>, vector<64x32xf32>, vector<2x32xf32> -> vector<2x32xf32>
    %164 = arith.addf %144, %163 : vector<2x32xf32>
    %c32 = arith.constant 32 : index
    %165 = memref.load %arg1[%c32] : memref<128xf32, #tpu.memory_space<smem>>
    %166 = vector.broadcast %165 : f32 to vector<2x64xf32>
    %167 = arith.mulf %0, %166 : vector<2x64xf32>
    %c33 = arith.constant 33 : index
    %168 = memref.load %arg1[%c33] : memref<128xf32, #tpu.memory_space<smem>>
    %169 = vector.broadcast %168 : f32 to vector<2x64xf32>
    %170 = arith.mulf %1, %169 : vector<2x64xf32>
    %171 = arith.addf %167, %170 : vector<2x64xf32>
    %c34 = arith.constant 34 : index
    %172 = memref.load %arg1[%c34] : memref<128xf32, #tpu.memory_space<smem>>
    %173 = vector.broadcast %172 : f32 to vector<2x64xf32>
    %174 = arith.mulf %2, %173 : vector<2x64xf32>
    %175 = arith.addf %171, %174 : vector<2x64xf32>
    %c35 = arith.constant 35 : index
    %176 = memref.load %arg1[%c35] : memref<128xf32, #tpu.memory_space<smem>>
    %177 = vector.broadcast %176 : f32 to vector<2x64xf32>
    %178 = arith.mulf %3, %177 : vector<2x64xf32>
    %179 = arith.addf %175, %178 : vector<2x64xf32>
    %cst_33 = arith.constant 0.000000e+00 : f32
    %180 = vector.broadcast %cst_33 : f32 to vector<2x64xf32>
    %181 = arith.maximumf %179, %180 : vector<2x64xf32>
    %c512 = arith.constant 512 : index
    %c0_34 = arith.constant 0 : index
    %182 = vector.load %arg2[%c512, %c0_34] : memref<2048x32xf32, #tpu.memory_space<vmem>>, vector<64x32xf32>
    %cst_35 = arith.constant dense<0.000000e+00> : vector<2x32xf32>
    %183 = tpu.matmul %181, %182, %cst_35 {dimension_numbers = #tpu.dot_dimension_numbers<[1], [0], [0], [1], [0, 0, 1, 1], [], []>} : vector<2x64xf32>, vector<64x32xf32>, vector<2x32xf32> -> vector<2x32xf32>
    %184 = arith.addf %164, %183 : vector<2x32xf32>
    %c36 = arith.constant 36 : index
    %185 = memref.load %arg1[%c36] : memref<128xf32, #tpu.memory_space<smem>>
    %186 = vector.broadcast %185 : f32 to vector<2x64xf32>
    %187 = arith.mulf %0, %186 : vector<2x64xf32>
    %c37 = arith.constant 37 : index
    %188 = memref.load %arg1[%c37] : memref<128xf32, #tpu.memory_space<smem>>
    %189 = vector.broadcast %188 : f32 to vector<2x64xf32>
    %190 = arith.mulf %1, %189 : vector<2x64xf32>
    %191 = arith.addf %187, %190 : vector<2x64xf32>
    %c38 = arith.constant 38 : index
    %192 = memref.load %arg1[%c38] : memref<128xf32, #tpu.memory_space<smem>>
    %193 = vector.broadcast %192 : f32 to vector<2x64xf32>
    %194 = arith.mulf %2, %193 : vector<2x64xf32>
    %195 = arith.addf %191, %194 : vector<2x64xf32>
    %c39 = arith.constant 39 : index
    %196 = memref.load %arg1[%c39] : memref<128xf32, #tpu.memory_space<smem>>
    %197 = vector.broadcast %196 : f32 to vector<2x64xf32>
    %198 = arith.mulf %3, %197 : vector<2x64xf32>
    %199 = arith.addf %195, %198 : vector<2x64xf32>
    %cst_36 = arith.constant 0.000000e+00 : f32
    %200 = vector.broadcast %cst_36 : f32 to vector<2x64xf32>
    %201 = arith.maximumf %199, %200 : vector<2x64xf32>
    %c576 = arith.constant 576 : index
    %c0_37 = arith.constant 0 : index
    %202 = vector.load %arg2[%c576, %c0_37] : memref<2048x32xf32, #tpu.memory_space<vmem>>, vector<64x32xf32>
    %cst_38 = arith.constant dense<0.000000e+00> : vector<2x32xf32>
    %203 = tpu.matmul %201, %202, %cst_38 {dimension_numbers = #tpu.dot_dimension_numbers<[1], [0], [0], [1], [0, 0, 1, 1], [], []>} : vector<2x64xf32>, vector<64x32xf32>, vector<2x32xf32> -> vector<2x32xf32>
    %204 = arith.addf %184, %203 : vector<2x32xf32>
    %c40 = arith.constant 40 : index
    %205 = memref.load %arg1[%c40] : memref<128xf32, #tpu.memory_space<smem>>
    %206 = vector.broadcast %205 : f32 to vector<2x64xf32>
    %207 = arith.mulf %0, %206 : vector<2x64xf32>
    %c41 = arith.constant 41 : index
    %208 = memref.load %arg1[%c41] : memref<128xf32, #tpu.memory_space<smem>>
    %209 = vector.broadcast %208 : f32 to vector<2x64xf32>
    %210 = arith.mulf %1, %209 : vector<2x64xf32>
    %211 = arith.addf %207, %210 : vector<2x64xf32>
    %c42 = arith.constant 42 : index
    %212 = memref.load %arg1[%c42] : memref<128xf32, #tpu.memory_space<smem>>
    %213 = vector.broadcast %212 : f32 to vector<2x64xf32>
    %214 = arith.mulf %2, %213 : vector<2x64xf32>
    %215 = arith.addf %211, %214 : vector<2x64xf32>
    %c43 = arith.constant 43 : index
    %216 = memref.load %arg1[%c43] : memref<128xf32, #tpu.memory_space<smem>>
    %217 = vector.broadcast %216 : f32 to vector<2x64xf32>
    %218 = arith.mulf %3, %217 : vector<2x64xf32>
    %219 = arith.addf %215, %218 : vector<2x64xf32>
    %cst_39 = arith.constant 0.000000e+00 : f32
    %220 = vector.broadcast %cst_39 : f32 to vector<2x64xf32>
    %221 = arith.maximumf %219, %220 : vector<2x64xf32>
    %c640 = arith.constant 640 : index
    %c0_40 = arith.constant 0 : index
    %222 = vector.load %arg2[%c640, %c0_40] : memref<2048x32xf32, #tpu.memory_space<vmem>>, vector<64x32xf32>
    %cst_41 = arith.constant dense<0.000000e+00> : vector<2x32xf32>
    %223 = tpu.matmul %221, %222, %cst_41 {dimension_numbers = #tpu.dot_dimension_numbers<[1], [0], [0], [1], [0, 0, 1, 1], [], []>} : vector<2x64xf32>, vector<64x32xf32>, vector<2x32xf32> -> vector<2x32xf32>
    %224 = arith.addf %204, %223 : vector<2x32xf32>
    %c44 = arith.constant 44 : index
    %225 = memref.load %arg1[%c44] : memref<128xf32, #tpu.memory_space<smem>>
    %226 = vector.broadcast %225 : f32 to vector<2x64xf32>
    %227 = arith.mulf %0, %226 : vector<2x64xf32>
    %c45 = arith.constant 45 : index
    %228 = memref.load %arg1[%c45] : memref<128xf32, #tpu.memory_space<smem>>
    %229 = vector.broadcast %228 : f32 to vector<2x64xf32>
    %230 = arith.mulf %1, %229 : vector<2x64xf32>
    %231 = arith.addf %227, %230 : vector<2x64xf32>
    %c46 = arith.constant 46 : index
    %232 = memref.load %arg1[%c46] : memref<128xf32, #tpu.memory_space<smem>>
    %233 = vector.broadcast %232 : f32 to vector<2x64xf32>
    %234 = arith.mulf %2, %233 : vector<2x64xf32>
    %235 = arith.addf %231, %234 : vector<2x64xf32>
    %c47 = arith.constant 47 : index
    %236 = memref.load %arg1[%c47] : memref<128xf32, #tpu.memory_space<smem>>
    %237 = vector.broadcast %236 : f32 to vector<2x64xf32>
    %238 = arith.mulf %3, %237 : vector<2x64xf32>
    %239 = arith.addf %235, %238 : vector<2x64xf32>
    %cst_42 = arith.constant 0.000000e+00 : f32
    %240 = vector.broadcast %cst_42 : f32 to vector<2x64xf32>
    %241 = arith.maximumf %239, %240 : vector<2x64xf32>
    %c704 = arith.constant 704 : index
    %c0_43 = arith.constant 0 : index
    %242 = vector.load %arg2[%c704, %c0_43] : memref<2048x32xf32, #tpu.memory_space<vmem>>, vector<64x32xf32>
    %cst_44 = arith.constant dense<0.000000e+00> : vector<2x32xf32>
    %243 = tpu.matmul %241, %242, %cst_44 {dimension_numbers = #tpu.dot_dimension_numbers<[1], [0], [0], [1], [0, 0, 1, 1], [], []>} : vector<2x64xf32>, vector<64x32xf32>, vector<2x32xf32> -> vector<2x32xf32>
    %244 = arith.addf %224, %243 : vector<2x32xf32>
    %c48 = arith.constant 48 : index
    %245 = memref.load %arg1[%c48] : memref<128xf32, #tpu.memory_space<smem>>
    %246 = vector.broadcast %245 : f32 to vector<2x64xf32>
    %247 = arith.mulf %0, %246 : vector<2x64xf32>
    %c49 = arith.constant 49 : index
    %248 = memref.load %arg1[%c49] : memref<128xf32, #tpu.memory_space<smem>>
    %249 = vector.broadcast %248 : f32 to vector<2x64xf32>
    %250 = arith.mulf %1, %249 : vector<2x64xf32>
    %251 = arith.addf %247, %250 : vector<2x64xf32>
    %c50 = arith.constant 50 : index
    %252 = memref.load %arg1[%c50] : memref<128xf32, #tpu.memory_space<smem>>
    %253 = vector.broadcast %252 : f32 to vector<2x64xf32>
    %254 = arith.mulf %2, %253 : vector<2x64xf32>
    %255 = arith.addf %251, %254 : vector<2x64xf32>
    %c51 = arith.constant 51 : index
    %256 = memref.load %arg1[%c51] : memref<128xf32, #tpu.memory_space<smem>>
    %257 = vector.broadcast %256 : f32 to vector<2x64xf32>
    %258 = arith.mulf %3, %257 : vector<2x64xf32>
    %259 = arith.addf %255, %258 : vector<2x64xf32>
    %cst_45 = arith.constant 0.000000e+00 : f32
    %260 = vector.broadcast %cst_45 : f32 to vector<2x64xf32>
    %261 = arith.maximumf %259, %260 : vector<2x64xf32>
    %c768 = arith.constant 768 : index
    %c0_46 = arith.constant 0 : index
    %262 = vector.load %arg2[%c768, %c0_46] : memref<2048x32xf32, #tpu.memory_space<vmem>>, vector<64x32xf32>
    %cst_47 = arith.constant dense<0.000000e+00> : vector<2x32xf32>
    %263 = tpu.matmul %261, %262, %cst_47 {dimension_numbers = #tpu.dot_dimension_numbers<[1], [0], [0], [1], [0, 0, 1, 1], [], []>} : vector<2x64xf32>, vector<64x32xf32>, vector<2x32xf32> -> vector<2x32xf32>
    %264 = arith.addf %244, %263 : vector<2x32xf32>
    %c52 = arith.constant 52 : index
    %265 = memref.load %arg1[%c52] : memref<128xf32, #tpu.memory_space<smem>>
    %266 = vector.broadcast %265 : f32 to vector<2x64xf32>
    %267 = arith.mulf %0, %266 : vector<2x64xf32>
    %c53 = arith.constant 53 : index
    %268 = memref.load %arg1[%c53] : memref<128xf32, #tpu.memory_space<smem>>
    %269 = vector.broadcast %268 : f32 to vector<2x64xf32>
    %270 = arith.mulf %1, %269 : vector<2x64xf32>
    %271 = arith.addf %267, %270 : vector<2x64xf32>
    %c54 = arith.constant 54 : index
    %272 = memref.load %arg1[%c54] : memref<128xf32, #tpu.memory_space<smem>>
    %273 = vector.broadcast %272 : f32 to vector<2x64xf32>
    %274 = arith.mulf %2, %273 : vector<2x64xf32>
    %275 = arith.addf %271, %274 : vector<2x64xf32>
    %c55 = arith.constant 55 : index
    %276 = memref.load %arg1[%c55] : memref<128xf32, #tpu.memory_space<smem>>
    %277 = vector.broadcast %276 : f32 to vector<2x64xf32>
    %278 = arith.mulf %3, %277 : vector<2x64xf32>
    %279 = arith.addf %275, %278 : vector<2x64xf32>
    %cst_48 = arith.constant 0.000000e+00 : f32
    %280 = vector.broadcast %cst_48 : f32 to vector<2x64xf32>
    %281 = arith.maximumf %279, %280 : vector<2x64xf32>
    %c832 = arith.constant 832 : index
    %c0_49 = arith.constant 0 : index
    %282 = vector.load %arg2[%c832, %c0_49] : memref<2048x32xf32, #tpu.memory_space<vmem>>, vector<64x32xf32>
    %cst_50 = arith.constant dense<0.000000e+00> : vector<2x32xf32>
    %283 = tpu.matmul %281, %282, %cst_50 {dimension_numbers = #tpu.dot_dimension_numbers<[1], [0], [0], [1], [0, 0, 1, 1], [], []>} : vector<2x64xf32>, vector<64x32xf32>, vector<2x32xf32> -> vector<2x32xf32>
    %284 = arith.addf %264, %283 : vector<2x32xf32>
    %c56 = arith.constant 56 : index
    %285 = memref.load %arg1[%c56] : memref<128xf32, #tpu.memory_space<smem>>
    %286 = vector.broadcast %285 : f32 to vector<2x64xf32>
    %287 = arith.mulf %0, %286 : vector<2x64xf32>
    %c57 = arith.constant 57 : index
    %288 = memref.load %arg1[%c57] : memref<128xf32, #tpu.memory_space<smem>>
    %289 = vector.broadcast %288 : f32 to vector<2x64xf32>
    %290 = arith.mulf %1, %289 : vector<2x64xf32>
    %291 = arith.addf %287, %290 : vector<2x64xf32>
    %c58 = arith.constant 58 : index
    %292 = memref.load %arg1[%c58] : memref<128xf32, #tpu.memory_space<smem>>
    %293 = vector.broadcast %292 : f32 to vector<2x64xf32>
    %294 = arith.mulf %2, %293 : vector<2x64xf32>
    %295 = arith.addf %291, %294 : vector<2x64xf32>
    %c59 = arith.constant 59 : index
    %296 = memref.load %arg1[%c59] : memref<128xf32, #tpu.memory_space<smem>>
    %297 = vector.broadcast %296 : f32 to vector<2x64xf32>
    %298 = arith.mulf %3, %297 : vector<2x64xf32>
    %299 = arith.addf %295, %298 : vector<2x64xf32>
    %cst_51 = arith.constant 0.000000e+00 : f32
    %300 = vector.broadcast %cst_51 : f32 to vector<2x64xf32>
    %301 = arith.maximumf %299, %300 : vector<2x64xf32>
    %c896 = arith.constant 896 : index
    %c0_52 = arith.constant 0 : index
    %302 = vector.load %arg2[%c896, %c0_52] : memref<2048x32xf32, #tpu.memory_space<vmem>>, vector<64x32xf32>
    %cst_53 = arith.constant dense<0.000000e+00> : vector<2x32xf32>
    %303 = tpu.matmul %301, %302, %cst_53 {dimension_numbers = #tpu.dot_dimension_numbers<[1], [0], [0], [1], [0, 0, 1, 1], [], []>} : vector<2x64xf32>, vector<64x32xf32>, vector<2x32xf32> -> vector<2x32xf32>
    %304 = arith.addf %284, %303 : vector<2x32xf32>
    %c60 = arith.constant 60 : index
    %305 = memref.load %arg1[%c60] : memref<128xf32, #tpu.memory_space<smem>>
    %306 = vector.broadcast %305 : f32 to vector<2x64xf32>
    %307 = arith.mulf %0, %306 : vector<2x64xf32>
    %c61 = arith.constant 61 : index
    %308 = memref.load %arg1[%c61] : memref<128xf32, #tpu.memory_space<smem>>
    %309 = vector.broadcast %308 : f32 to vector<2x64xf32>
    %310 = arith.mulf %1, %309 : vector<2x64xf32>
    %311 = arith.addf %307, %310 : vector<2x64xf32>
    %c62 = arith.constant 62 : index
    %312 = memref.load %arg1[%c62] : memref<128xf32, #tpu.memory_space<smem>>
    %313 = vector.broadcast %312 : f32 to vector<2x64xf32>
    %314 = arith.mulf %2, %313 : vector<2x64xf32>
    %315 = arith.addf %311, %314 : vector<2x64xf32>
    %c63 = arith.constant 63 : index
    %316 = memref.load %arg1[%c63] : memref<128xf32, #tpu.memory_space<smem>>
    %317 = vector.broadcast %316 : f32 to vector<2x64xf32>
    %318 = arith.mulf %3, %317 : vector<2x64xf32>
    %319 = arith.addf %315, %318 : vector<2x64xf32>
    %cst_54 = arith.constant 0.000000e+00 : f32
    %320 = vector.broadcast %cst_54 : f32 to vector<2x64xf32>
    %321 = arith.maximumf %319, %320 : vector<2x64xf32>
    %c960 = arith.constant 960 : index
    %c0_55 = arith.constant 0 : index
    %322 = vector.load %arg2[%c960, %c0_55] : memref<2048x32xf32, #tpu.memory_space<vmem>>, vector<64x32xf32>
    %cst_56 = arith.constant dense<0.000000e+00> : vector<2x32xf32>
    %323 = tpu.matmul %321, %322, %cst_56 {dimension_numbers = #tpu.dot_dimension_numbers<[1], [0], [0], [1], [0, 0, 1, 1], [], []>} : vector<2x64xf32>, vector<64x32xf32>, vector<2x32xf32> -> vector<2x32xf32>
    %324 = arith.addf %304, %323 : vector<2x32xf32>
    %c64_57 = arith.constant 64 : index
    %325 = memref.load %arg1[%c64_57] : memref<128xf32, #tpu.memory_space<smem>>
    %326 = vector.broadcast %325 : f32 to vector<2x64xf32>
    %327 = arith.mulf %0, %326 : vector<2x64xf32>
    %c65 = arith.constant 65 : index
    %328 = memref.load %arg1[%c65] : memref<128xf32, #tpu.memory_space<smem>>
    %329 = vector.broadcast %328 : f32 to vector<2x64xf32>
    %330 = arith.mulf %1, %329 : vector<2x64xf32>
    %331 = arith.addf %327, %330 : vector<2x64xf32>
    %c66 = arith.constant 66 : index
    %332 = memref.load %arg1[%c66] : memref<128xf32, #tpu.memory_space<smem>>
    %333 = vector.broadcast %332 : f32 to vector<2x64xf32>
    %334 = arith.mulf %2, %333 : vector<2x64xf32>
    %335 = arith.addf %331, %334 : vector<2x64xf32>
    %c67 = arith.constant 67 : index
    %336 = memref.load %arg1[%c67] : memref<128xf32, #tpu.memory_space<smem>>
    %337 = vector.broadcast %336 : f32 to vector<2x64xf32>
    %338 = arith.mulf %3, %337 : vector<2x64xf32>
    %339 = arith.addf %335, %338 : vector<2x64xf32>
    %cst_58 = arith.constant 0.000000e+00 : f32
    %340 = vector.broadcast %cst_58 : f32 to vector<2x64xf32>
    %341 = arith.maximumf %339, %340 : vector<2x64xf32>
    %c1024 = arith.constant 1024 : index
    %c0_59 = arith.constant 0 : index
    %342 = vector.load %arg2[%c1024, %c0_59] : memref<2048x32xf32, #tpu.memory_space<vmem>>, vector<64x32xf32>
    %cst_60 = arith.constant dense<0.000000e+00> : vector<2x32xf32>
    %343 = tpu.matmul %341, %342, %cst_60 {dimension_numbers = #tpu.dot_dimension_numbers<[1], [0], [0], [1], [0, 0, 1, 1], [], []>} : vector<2x64xf32>, vector<64x32xf32>, vector<2x32xf32> -> vector<2x32xf32>
    %344 = arith.addf %324, %343 : vector<2x32xf32>
    %c68 = arith.constant 68 : index
    %345 = memref.load %arg1[%c68] : memref<128xf32, #tpu.memory_space<smem>>
    %346 = vector.broadcast %345 : f32 to vector<2x64xf32>
    %347 = arith.mulf %0, %346 : vector<2x64xf32>
    %c69 = arith.constant 69 : index
    %348 = memref.load %arg1[%c69] : memref<128xf32, #tpu.memory_space<smem>>
    %349 = vector.broadcast %348 : f32 to vector<2x64xf32>
    %350 = arith.mulf %1, %349 : vector<2x64xf32>
    %351 = arith.addf %347, %350 : vector<2x64xf32>
    %c70 = arith.constant 70 : index
    %352 = memref.load %arg1[%c70] : memref<128xf32, #tpu.memory_space<smem>>
    %353 = vector.broadcast %352 : f32 to vector<2x64xf32>
    %354 = arith.mulf %2, %353 : vector<2x64xf32>
    %355 = arith.addf %351, %354 : vector<2x64xf32>
    %c71 = arith.constant 71 : index
    %356 = memref.load %arg1[%c71] : memref<128xf32, #tpu.memory_space<smem>>
    %357 = vector.broadcast %356 : f32 to vector<2x64xf32>
    %358 = arith.mulf %3, %357 : vector<2x64xf32>
    %359 = arith.addf %355, %358 : vector<2x64xf32>
    %cst_61 = arith.constant 0.000000e+00 : f32
    %360 = vector.broadcast %cst_61 : f32 to vector<2x64xf32>
    %361 = arith.maximumf %359, %360 : vector<2x64xf32>
    %c1088 = arith.constant 1088 : index
    %c0_62 = arith.constant 0 : index
    %362 = vector.load %arg2[%c1088, %c0_62] : memref<2048x32xf32, #tpu.memory_space<vmem>>, vector<64x32xf32>
    %cst_63 = arith.constant dense<0.000000e+00> : vector<2x32xf32>
    %363 = tpu.matmul %361, %362, %cst_63 {dimension_numbers = #tpu.dot_dimension_numbers<[1], [0], [0], [1], [0, 0, 1, 1], [], []>} : vector<2x64xf32>, vector<64x32xf32>, vector<2x32xf32> -> vector<2x32xf32>
    %364 = arith.addf %344, %363 : vector<2x32xf32>
    %c72 = arith.constant 72 : index
    %365 = memref.load %arg1[%c72] : memref<128xf32, #tpu.memory_space<smem>>
    %366 = vector.broadcast %365 : f32 to vector<2x64xf32>
    %367 = arith.mulf %0, %366 : vector<2x64xf32>
    %c73 = arith.constant 73 : index
    %368 = memref.load %arg1[%c73] : memref<128xf32, #tpu.memory_space<smem>>
    %369 = vector.broadcast %368 : f32 to vector<2x64xf32>
    %370 = arith.mulf %1, %369 : vector<2x64xf32>
    %371 = arith.addf %367, %370 : vector<2x64xf32>
    %c74 = arith.constant 74 : index
    %372 = memref.load %arg1[%c74] : memref<128xf32, #tpu.memory_space<smem>>
    %373 = vector.broadcast %372 : f32 to vector<2x64xf32>
    %374 = arith.mulf %2, %373 : vector<2x64xf32>
    %375 = arith.addf %371, %374 : vector<2x64xf32>
    %c75 = arith.constant 75 : index
    %376 = memref.load %arg1[%c75] : memref<128xf32, #tpu.memory_space<smem>>
    %377 = vector.broadcast %376 : f32 to vector<2x64xf32>
    %378 = arith.mulf %3, %377 : vector<2x64xf32>
    %379 = arith.addf %375, %378 : vector<2x64xf32>
    %cst_64 = arith.constant 0.000000e+00 : f32
    %380 = vector.broadcast %cst_64 : f32 to vector<2x64xf32>
    %381 = arith.maximumf %379, %380 : vector<2x64xf32>
    %c1152 = arith.constant 1152 : index
    %c0_65 = arith.constant 0 : index
    %382 = vector.load %arg2[%c1152, %c0_65] : memref<2048x32xf32, #tpu.memory_space<vmem>>, vector<64x32xf32>
    %cst_66 = arith.constant dense<0.000000e+00> : vector<2x32xf32>
    %383 = tpu.matmul %381, %382, %cst_66 {dimension_numbers = #tpu.dot_dimension_numbers<[1], [0], [0], [1], [0, 0, 1, 1], [], []>} : vector<2x64xf32>, vector<64x32xf32>, vector<2x32xf32> -> vector<2x32xf32>
    %384 = arith.addf %364, %383 : vector<2x32xf32>
    %c76 = arith.constant 76 : index
    %385 = memref.load %arg1[%c76] : memref<128xf32, #tpu.memory_space<smem>>
    %386 = vector.broadcast %385 : f32 to vector<2x64xf32>
    %387 = arith.mulf %0, %386 : vector<2x64xf32>
    %c77 = arith.constant 77 : index
    %388 = memref.load %arg1[%c77] : memref<128xf32, #tpu.memory_space<smem>>
    %389 = vector.broadcast %388 : f32 to vector<2x64xf32>
    %390 = arith.mulf %1, %389 : vector<2x64xf32>
    %391 = arith.addf %387, %390 : vector<2x64xf32>
    %c78 = arith.constant 78 : index
    %392 = memref.load %arg1[%c78] : memref<128xf32, #tpu.memory_space<smem>>
    %393 = vector.broadcast %392 : f32 to vector<2x64xf32>
    %394 = arith.mulf %2, %393 : vector<2x64xf32>
    %395 = arith.addf %391, %394 : vector<2x64xf32>
    %c79 = arith.constant 79 : index
    %396 = memref.load %arg1[%c79] : memref<128xf32, #tpu.memory_space<smem>>
    %397 = vector.broadcast %396 : f32 to vector<2x64xf32>
    %398 = arith.mulf %3, %397 : vector<2x64xf32>
    %399 = arith.addf %395, %398 : vector<2x64xf32>
    %cst_67 = arith.constant 0.000000e+00 : f32
    %400 = vector.broadcast %cst_67 : f32 to vector<2x64xf32>
    %401 = arith.maximumf %399, %400 : vector<2x64xf32>
    %c1216 = arith.constant 1216 : index
    %c0_68 = arith.constant 0 : index
    %402 = vector.load %arg2[%c1216, %c0_68] : memref<2048x32xf32, #tpu.memory_space<vmem>>, vector<64x32xf32>
    %cst_69 = arith.constant dense<0.000000e+00> : vector<2x32xf32>
    %403 = tpu.matmul %401, %402, %cst_69 {dimension_numbers = #tpu.dot_dimension_numbers<[1], [0], [0], [1], [0, 0, 1, 1], [], []>} : vector<2x64xf32>, vector<64x32xf32>, vector<2x32xf32> -> vector<2x32xf32>
    %404 = arith.addf %384, %403 : vector<2x32xf32>
    %c80 = arith.constant 80 : index
    %405 = memref.load %arg1[%c80] : memref<128xf32, #tpu.memory_space<smem>>
    %406 = vector.broadcast %405 : f32 to vector<2x64xf32>
    %407 = arith.mulf %0, %406 : vector<2x64xf32>
    %c81 = arith.constant 81 : index
    %408 = memref.load %arg1[%c81] : memref<128xf32, #tpu.memory_space<smem>>
    %409 = vector.broadcast %408 : f32 to vector<2x64xf32>
    %410 = arith.mulf %1, %409 : vector<2x64xf32>
    %411 = arith.addf %407, %410 : vector<2x64xf32>
    %c82 = arith.constant 82 : index
    %412 = memref.load %arg1[%c82] : memref<128xf32, #tpu.memory_space<smem>>
    %413 = vector.broadcast %412 : f32 to vector<2x64xf32>
    %414 = arith.mulf %2, %413 : vector<2x64xf32>
    %415 = arith.addf %411, %414 : vector<2x64xf32>
    %c83 = arith.constant 83 : index
    %416 = memref.load %arg1[%c83] : memref<128xf32, #tpu.memory_space<smem>>
    %417 = vector.broadcast %416 : f32 to vector<2x64xf32>
    %418 = arith.mulf %3, %417 : vector<2x64xf32>
    %419 = arith.addf %415, %418 : vector<2x64xf32>
    %cst_70 = arith.constant 0.000000e+00 : f32
    %420 = vector.broadcast %cst_70 : f32 to vector<2x64xf32>
    %421 = arith.maximumf %419, %420 : vector<2x64xf32>
    %c1280 = arith.constant 1280 : index
    %c0_71 = arith.constant 0 : index
    %422 = vector.load %arg2[%c1280, %c0_71] : memref<2048x32xf32, #tpu.memory_space<vmem>>, vector<64x32xf32>
    %cst_72 = arith.constant dense<0.000000e+00> : vector<2x32xf32>
    %423 = tpu.matmul %421, %422, %cst_72 {dimension_numbers = #tpu.dot_dimension_numbers<[1], [0], [0], [1], [0, 0, 1, 1], [], []>} : vector<2x64xf32>, vector<64x32xf32>, vector<2x32xf32> -> vector<2x32xf32>
    %424 = arith.addf %404, %423 : vector<2x32xf32>
    %c84 = arith.constant 84 : index
    %425 = memref.load %arg1[%c84] : memref<128xf32, #tpu.memory_space<smem>>
    %426 = vector.broadcast %425 : f32 to vector<2x64xf32>
    %427 = arith.mulf %0, %426 : vector<2x64xf32>
    %c85 = arith.constant 85 : index
    %428 = memref.load %arg1[%c85] : memref<128xf32, #tpu.memory_space<smem>>
    %429 = vector.broadcast %428 : f32 to vector<2x64xf32>
    %430 = arith.mulf %1, %429 : vector<2x64xf32>
    %431 = arith.addf %427, %430 : vector<2x64xf32>
    %c86 = arith.constant 86 : index
    %432 = memref.load %arg1[%c86] : memref<128xf32, #tpu.memory_space<smem>>
    %433 = vector.broadcast %432 : f32 to vector<2x64xf32>
    %434 = arith.mulf %2, %433 : vector<2x64xf32>
    %435 = arith.addf %431, %434 : vector<2x64xf32>
    %c87 = arith.constant 87 : index
    %436 = memref.load %arg1[%c87] : memref<128xf32, #tpu.memory_space<smem>>
    %437 = vector.broadcast %436 : f32 to vector<2x64xf32>
    %438 = arith.mulf %3, %437 : vector<2x64xf32>
    %439 = arith.addf %435, %438 : vector<2x64xf32>
    %cst_73 = arith.constant 0.000000e+00 : f32
    %440 = vector.broadcast %cst_73 : f32 to vector<2x64xf32>
    %441 = arith.maximumf %439, %440 : vector<2x64xf32>
    %c1344 = arith.constant 1344 : index
    %c0_74 = arith.constant 0 : index
    %442 = vector.load %arg2[%c1344, %c0_74] : memref<2048x32xf32, #tpu.memory_space<vmem>>, vector<64x32xf32>
    %cst_75 = arith.constant dense<0.000000e+00> : vector<2x32xf32>
    %443 = tpu.matmul %441, %442, %cst_75 {dimension_numbers = #tpu.dot_dimension_numbers<[1], [0], [0], [1], [0, 0, 1, 1], [], []>} : vector<2x64xf32>, vector<64x32xf32>, vector<2x32xf32> -> vector<2x32xf32>
    %444 = arith.addf %424, %443 : vector<2x32xf32>
    %c88 = arith.constant 88 : index
    %445 = memref.load %arg1[%c88] : memref<128xf32, #tpu.memory_space<smem>>
    %446 = vector.broadcast %445 : f32 to vector<2x64xf32>
    %447 = arith.mulf %0, %446 : vector<2x64xf32>
    %c89 = arith.constant 89 : index
    %448 = memref.load %arg1[%c89] : memref<128xf32, #tpu.memory_space<smem>>
    %449 = vector.broadcast %448 : f32 to vector<2x64xf32>
    %450 = arith.mulf %1, %449 : vector<2x64xf32>
    %451 = arith.addf %447, %450 : vector<2x64xf32>
    %c90 = arith.constant 90 : index
    %452 = memref.load %arg1[%c90] : memref<128xf32, #tpu.memory_space<smem>>
    %453 = vector.broadcast %452 : f32 to vector<2x64xf32>
    %454 = arith.mulf %2, %453 : vector<2x64xf32>
    %455 = arith.addf %451, %454 : vector<2x64xf32>
    %c91 = arith.constant 91 : index
    %456 = memref.load %arg1[%c91] : memref<128xf32, #tpu.memory_space<smem>>
    %457 = vector.broadcast %456 : f32 to vector<2x64xf32>
    %458 = arith.mulf %3, %457 : vector<2x64xf32>
    %459 = arith.addf %455, %458 : vector<2x64xf32>
    %cst_76 = arith.constant 0.000000e+00 : f32
    %460 = vector.broadcast %cst_76 : f32 to vector<2x64xf32>
    %461 = arith.maximumf %459, %460 : vector<2x64xf32>
    %c1408 = arith.constant 1408 : index
    %c0_77 = arith.constant 0 : index
    %462 = vector.load %arg2[%c1408, %c0_77] : memref<2048x32xf32, #tpu.memory_space<vmem>>, vector<64x32xf32>
    %cst_78 = arith.constant dense<0.000000e+00> : vector<2x32xf32>
    %463 = tpu.matmul %461, %462, %cst_78 {dimension_numbers = #tpu.dot_dimension_numbers<[1], [0], [0], [1], [0, 0, 1, 1], [], []>} : vector<2x64xf32>, vector<64x32xf32>, vector<2x32xf32> -> vector<2x32xf32>
    %464 = arith.addf %444, %463 : vector<2x32xf32>
    %c92 = arith.constant 92 : index
    %465 = memref.load %arg1[%c92] : memref<128xf32, #tpu.memory_space<smem>>
    %466 = vector.broadcast %465 : f32 to vector<2x64xf32>
    %467 = arith.mulf %0, %466 : vector<2x64xf32>
    %c93 = arith.constant 93 : index
    %468 = memref.load %arg1[%c93] : memref<128xf32, #tpu.memory_space<smem>>
    %469 = vector.broadcast %468 : f32 to vector<2x64xf32>
    %470 = arith.mulf %1, %469 : vector<2x64xf32>
    %471 = arith.addf %467, %470 : vector<2x64xf32>
    %c94 = arith.constant 94 : index
    %472 = memref.load %arg1[%c94] : memref<128xf32, #tpu.memory_space<smem>>
    %473 = vector.broadcast %472 : f32 to vector<2x64xf32>
    %474 = arith.mulf %2, %473 : vector<2x64xf32>
    %475 = arith.addf %471, %474 : vector<2x64xf32>
    %c95 = arith.constant 95 : index
    %476 = memref.load %arg1[%c95] : memref<128xf32, #tpu.memory_space<smem>>
    %477 = vector.broadcast %476 : f32 to vector<2x64xf32>
    %478 = arith.mulf %3, %477 : vector<2x64xf32>
    %479 = arith.addf %475, %478 : vector<2x64xf32>
    %cst_79 = arith.constant 0.000000e+00 : f32
    %480 = vector.broadcast %cst_79 : f32 to vector<2x64xf32>
    %481 = arith.maximumf %479, %480 : vector<2x64xf32>
    %c1472 = arith.constant 1472 : index
    %c0_80 = arith.constant 0 : index
    %482 = vector.load %arg2[%c1472, %c0_80] : memref<2048x32xf32, #tpu.memory_space<vmem>>, vector<64x32xf32>
    %cst_81 = arith.constant dense<0.000000e+00> : vector<2x32xf32>
    %483 = tpu.matmul %481, %482, %cst_81 {dimension_numbers = #tpu.dot_dimension_numbers<[1], [0], [0], [1], [0, 0, 1, 1], [], []>} : vector<2x64xf32>, vector<64x32xf32>, vector<2x32xf32> -> vector<2x32xf32>
    %484 = arith.addf %464, %483 : vector<2x32xf32>
    %c96 = arith.constant 96 : index
    %485 = memref.load %arg1[%c96] : memref<128xf32, #tpu.memory_space<smem>>
    %486 = vector.broadcast %485 : f32 to vector<2x64xf32>
    %487 = arith.mulf %0, %486 : vector<2x64xf32>
    %c97 = arith.constant 97 : index
    %488 = memref.load %arg1[%c97] : memref<128xf32, #tpu.memory_space<smem>>
    %489 = vector.broadcast %488 : f32 to vector<2x64xf32>
    %490 = arith.mulf %1, %489 : vector<2x64xf32>
    %491 = arith.addf %487, %490 : vector<2x64xf32>
    %c98 = arith.constant 98 : index
    %492 = memref.load %arg1[%c98] : memref<128xf32, #tpu.memory_space<smem>>
    %493 = vector.broadcast %492 : f32 to vector<2x64xf32>
    %494 = arith.mulf %2, %493 : vector<2x64xf32>
    %495 = arith.addf %491, %494 : vector<2x64xf32>
    %c99 = arith.constant 99 : index
    %496 = memref.load %arg1[%c99] : memref<128xf32, #tpu.memory_space<smem>>
    %497 = vector.broadcast %496 : f32 to vector<2x64xf32>
    %498 = arith.mulf %3, %497 : vector<2x64xf32>
    %499 = arith.addf %495, %498 : vector<2x64xf32>
    %cst_82 = arith.constant 0.000000e+00 : f32
    %500 = vector.broadcast %cst_82 : f32 to vector<2x64xf32>
    %501 = arith.maximumf %499, %500 : vector<2x64xf32>
    %c1536 = arith.constant 1536 : index
    %c0_83 = arith.constant 0 : index
    %502 = vector.load %arg2[%c1536, %c0_83] : memref<2048x32xf32, #tpu.memory_space<vmem>>, vector<64x32xf32>
    %cst_84 = arith.constant dense<0.000000e+00> : vector<2x32xf32>
    %503 = tpu.matmul %501, %502, %cst_84 {dimension_numbers = #tpu.dot_dimension_numbers<[1], [0], [0], [1], [0, 0, 1, 1], [], []>} : vector<2x64xf32>, vector<64x32xf32>, vector<2x32xf32> -> vector<2x32xf32>
    %504 = arith.addf %484, %503 : vector<2x32xf32>
    %c100 = arith.constant 100 : index
    %505 = memref.load %arg1[%c100] : memref<128xf32, #tpu.memory_space<smem>>
    %506 = vector.broadcast %505 : f32 to vector<2x64xf32>
    %507 = arith.mulf %0, %506 : vector<2x64xf32>
    %c101 = arith.constant 101 : index
    %508 = memref.load %arg1[%c101] : memref<128xf32, #tpu.memory_space<smem>>
    %509 = vector.broadcast %508 : f32 to vector<2x64xf32>
    %510 = arith.mulf %1, %509 : vector<2x64xf32>
    %511 = arith.addf %507, %510 : vector<2x64xf32>
    %c102 = arith.constant 102 : index
    %512 = memref.load %arg1[%c102] : memref<128xf32, #tpu.memory_space<smem>>
    %513 = vector.broadcast %512 : f32 to vector<2x64xf32>
    %514 = arith.mulf %2, %513 : vector<2x64xf32>
    %515 = arith.addf %511, %514 : vector<2x64xf32>
    %c103 = arith.constant 103 : index
    %516 = memref.load %arg1[%c103] : memref<128xf32, #tpu.memory_space<smem>>
    %517 = vector.broadcast %516 : f32 to vector<2x64xf32>
    %518 = arith.mulf %3, %517 : vector<2x64xf32>
    %519 = arith.addf %515, %518 : vector<2x64xf32>
    %cst_85 = arith.constant 0.000000e+00 : f32
    %520 = vector.broadcast %cst_85 : f32 to vector<2x64xf32>
    %521 = arith.maximumf %519, %520 : vector<2x64xf32>
    %c1600 = arith.constant 1600 : index
    %c0_86 = arith.constant 0 : index
    %522 = vector.load %arg2[%c1600, %c0_86] : memref<2048x32xf32, #tpu.memory_space<vmem>>, vector<64x32xf32>
    %cst_87 = arith.constant dense<0.000000e+00> : vector<2x32xf32>
    %523 = tpu.matmul %521, %522, %cst_87 {dimension_numbers = #tpu.dot_dimension_numbers<[1], [0], [0], [1], [0, 0, 1, 1], [], []>} : vector<2x64xf32>, vector<64x32xf32>, vector<2x32xf32> -> vector<2x32xf32>
    %524 = arith.addf %504, %523 : vector<2x32xf32>
    %c104 = arith.constant 104 : index
    %525 = memref.load %arg1[%c104] : memref<128xf32, #tpu.memory_space<smem>>
    %526 = vector.broadcast %525 : f32 to vector<2x64xf32>
    %527 = arith.mulf %0, %526 : vector<2x64xf32>
    %c105 = arith.constant 105 : index
    %528 = memref.load %arg1[%c105] : memref<128xf32, #tpu.memory_space<smem>>
    %529 = vector.broadcast %528 : f32 to vector<2x64xf32>
    %530 = arith.mulf %1, %529 : vector<2x64xf32>
    %531 = arith.addf %527, %530 : vector<2x64xf32>
    %c106 = arith.constant 106 : index
    %532 = memref.load %arg1[%c106] : memref<128xf32, #tpu.memory_space<smem>>
    %533 = vector.broadcast %532 : f32 to vector<2x64xf32>
    %534 = arith.mulf %2, %533 : vector<2x64xf32>
    %535 = arith.addf %531, %534 : vector<2x64xf32>
    %c107 = arith.constant 107 : index
    %536 = memref.load %arg1[%c107] : memref<128xf32, #tpu.memory_space<smem>>
    %537 = vector.broadcast %536 : f32 to vector<2x64xf32>
    %538 = arith.mulf %3, %537 : vector<2x64xf32>
    %539 = arith.addf %535, %538 : vector<2x64xf32>
    %cst_88 = arith.constant 0.000000e+00 : f32
    %540 = vector.broadcast %cst_88 : f32 to vector<2x64xf32>
    %541 = arith.maximumf %539, %540 : vector<2x64xf32>
    %c1664 = arith.constant 1664 : index
    %c0_89 = arith.constant 0 : index
    %542 = vector.load %arg2[%c1664, %c0_89] : memref<2048x32xf32, #tpu.memory_space<vmem>>, vector<64x32xf32>
    %cst_90 = arith.constant dense<0.000000e+00> : vector<2x32xf32>
    %543 = tpu.matmul %541, %542, %cst_90 {dimension_numbers = #tpu.dot_dimension_numbers<[1], [0], [0], [1], [0, 0, 1, 1], [], []>} : vector<2x64xf32>, vector<64x32xf32>, vector<2x32xf32> -> vector<2x32xf32>
    %544 = arith.addf %524, %543 : vector<2x32xf32>
    %c108 = arith.constant 108 : index
    %545 = memref.load %arg1[%c108] : memref<128xf32, #tpu.memory_space<smem>>
    %546 = vector.broadcast %545 : f32 to vector<2x64xf32>
    %547 = arith.mulf %0, %546 : vector<2x64xf32>
    %c109 = arith.constant 109 : index
    %548 = memref.load %arg1[%c109] : memref<128xf32, #tpu.memory_space<smem>>
    %549 = vector.broadcast %548 : f32 to vector<2x64xf32>
    %550 = arith.mulf %1, %549 : vector<2x64xf32>
    %551 = arith.addf %547, %550 : vector<2x64xf32>
    %c110 = arith.constant 110 : index
    %552 = memref.load %arg1[%c110] : memref<128xf32, #tpu.memory_space<smem>>
    %553 = vector.broadcast %552 : f32 to vector<2x64xf32>
    %554 = arith.mulf %2, %553 : vector<2x64xf32>
    %555 = arith.addf %551, %554 : vector<2x64xf32>
    %c111 = arith.constant 111 : index
    %556 = memref.load %arg1[%c111] : memref<128xf32, #tpu.memory_space<smem>>
    %557 = vector.broadcast %556 : f32 to vector<2x64xf32>
    %558 = arith.mulf %3, %557 : vector<2x64xf32>
    %559 = arith.addf %555, %558 : vector<2x64xf32>
    %cst_91 = arith.constant 0.000000e+00 : f32
    %560 = vector.broadcast %cst_91 : f32 to vector<2x64xf32>
    %561 = arith.maximumf %559, %560 : vector<2x64xf32>
    %c1728 = arith.constant 1728 : index
    %c0_92 = arith.constant 0 : index
    %562 = vector.load %arg2[%c1728, %c0_92] : memref<2048x32xf32, #tpu.memory_space<vmem>>, vector<64x32xf32>
    %cst_93 = arith.constant dense<0.000000e+00> : vector<2x32xf32>
    %563 = tpu.matmul %561, %562, %cst_93 {dimension_numbers = #tpu.dot_dimension_numbers<[1], [0], [0], [1], [0, 0, 1, 1], [], []>} : vector<2x64xf32>, vector<64x32xf32>, vector<2x32xf32> -> vector<2x32xf32>
    %564 = arith.addf %544, %563 : vector<2x32xf32>
    %c112 = arith.constant 112 : index
    %565 = memref.load %arg1[%c112] : memref<128xf32, #tpu.memory_space<smem>>
    %566 = vector.broadcast %565 : f32 to vector<2x64xf32>
    %567 = arith.mulf %0, %566 : vector<2x64xf32>
    %c113 = arith.constant 113 : index
    %568 = memref.load %arg1[%c113] : memref<128xf32, #tpu.memory_space<smem>>
    %569 = vector.broadcast %568 : f32 to vector<2x64xf32>
    %570 = arith.mulf %1, %569 : vector<2x64xf32>
    %571 = arith.addf %567, %570 : vector<2x64xf32>
    %c114 = arith.constant 114 : index
    %572 = memref.load %arg1[%c114] : memref<128xf32, #tpu.memory_space<smem>>
    %573 = vector.broadcast %572 : f32 to vector<2x64xf32>
    %574 = arith.mulf %2, %573 : vector<2x64xf32>
    %575 = arith.addf %571, %574 : vector<2x64xf32>
    %c115 = arith.constant 115 : index
    %576 = memref.load %arg1[%c115] : memref<128xf32, #tpu.memory_space<smem>>
    %577 = vector.broadcast %576 : f32 to vector<2x64xf32>
    %578 = arith.mulf %3, %577 : vector<2x64xf32>
    %579 = arith.addf %575, %578 : vector<2x64xf32>
    %cst_94 = arith.constant 0.000000e+00 : f32
    %580 = vector.broadcast %cst_94 : f32 to vector<2x64xf32>
    %581 = arith.maximumf %579, %580 : vector<2x64xf32>
    %c1792 = arith.constant 1792 : index
    %c0_95 = arith.constant 0 : index
    %582 = vector.load %arg2[%c1792, %c0_95] : memref<2048x32xf32, #tpu.memory_space<vmem>>, vector<64x32xf32>
    %cst_96 = arith.constant dense<0.000000e+00> : vector<2x32xf32>
    %583 = tpu.matmul %581, %582, %cst_96 {dimension_numbers = #tpu.dot_dimension_numbers<[1], [0], [0], [1], [0, 0, 1, 1], [], []>} : vector<2x64xf32>, vector<64x32xf32>, vector<2x32xf32> -> vector<2x32xf32>
    %584 = arith.addf %564, %583 : vector<2x32xf32>
    %c116 = arith.constant 116 : index
    %585 = memref.load %arg1[%c116] : memref<128xf32, #tpu.memory_space<smem>>
    %586 = vector.broadcast %585 : f32 to vector<2x64xf32>
    %587 = arith.mulf %0, %586 : vector<2x64xf32>
    %c117 = arith.constant 117 : index
    %588 = memref.load %arg1[%c117] : memref<128xf32, #tpu.memory_space<smem>>
    %589 = vector.broadcast %588 : f32 to vector<2x64xf32>
    %590 = arith.mulf %1, %589 : vector<2x64xf32>
    %591 = arith.addf %587, %590 : vector<2x64xf32>
    %c118 = arith.constant 118 : index
    %592 = memref.load %arg1[%c118] : memref<128xf32, #tpu.memory_space<smem>>
    %593 = vector.broadcast %592 : f32 to vector<2x64xf32>
    %594 = arith.mulf %2, %593 : vector<2x64xf32>
    %595 = arith.addf %591, %594 : vector<2x64xf32>
    %c119 = arith.constant 119 : index
    %596 = memref.load %arg1[%c119] : memref<128xf32, #tpu.memory_space<smem>>
    %597 = vector.broadcast %596 : f32 to vector<2x64xf32>
    %598 = arith.mulf %3, %597 : vector<2x64xf32>
    %599 = arith.addf %595, %598 : vector<2x64xf32>
    %cst_97 = arith.constant 0.000000e+00 : f32
    %600 = vector.broadcast %cst_97 : f32 to vector<2x64xf32>
    %601 = arith.maximumf %599, %600 : vector<2x64xf32>
    %c1856 = arith.constant 1856 : index
    %c0_98 = arith.constant 0 : index
    %602 = vector.load %arg2[%c1856, %c0_98] : memref<2048x32xf32, #tpu.memory_space<vmem>>, vector<64x32xf32>
    %cst_99 = arith.constant dense<0.000000e+00> : vector<2x32xf32>
    %603 = tpu.matmul %601, %602, %cst_99 {dimension_numbers = #tpu.dot_dimension_numbers<[1], [0], [0], [1], [0, 0, 1, 1], [], []>} : vector<2x64xf32>, vector<64x32xf32>, vector<2x32xf32> -> vector<2x32xf32>
    %604 = arith.addf %584, %603 : vector<2x32xf32>
    %c120 = arith.constant 120 : index
    %605 = memref.load %arg1[%c120] : memref<128xf32, #tpu.memory_space<smem>>
    %606 = vector.broadcast %605 : f32 to vector<2x64xf32>
    %607 = arith.mulf %0, %606 : vector<2x64xf32>
    %c121 = arith.constant 121 : index
    %608 = memref.load %arg1[%c121] : memref<128xf32, #tpu.memory_space<smem>>
    %609 = vector.broadcast %608 : f32 to vector<2x64xf32>
    %610 = arith.mulf %1, %609 : vector<2x64xf32>
    %611 = arith.addf %607, %610 : vector<2x64xf32>
    %c122 = arith.constant 122 : index
    %612 = memref.load %arg1[%c122] : memref<128xf32, #tpu.memory_space<smem>>
    %613 = vector.broadcast %612 : f32 to vector<2x64xf32>
    %614 = arith.mulf %2, %613 : vector<2x64xf32>
    %615 = arith.addf %611, %614 : vector<2x64xf32>
    %c123 = arith.constant 123 : index
    %616 = memref.load %arg1[%c123] : memref<128xf32, #tpu.memory_space<smem>>
    %617 = vector.broadcast %616 : f32 to vector<2x64xf32>
    %618 = arith.mulf %3, %617 : vector<2x64xf32>
    %619 = arith.addf %615, %618 : vector<2x64xf32>
    %cst_100 = arith.constant 0.000000e+00 : f32
    %620 = vector.broadcast %cst_100 : f32 to vector<2x64xf32>
    %621 = arith.maximumf %619, %620 : vector<2x64xf32>
    %c1920 = arith.constant 1920 : index
    %c0_101 = arith.constant 0 : index
    %622 = vector.load %arg2[%c1920, %c0_101] : memref<2048x32xf32, #tpu.memory_space<vmem>>, vector<64x32xf32>
    %cst_102 = arith.constant dense<0.000000e+00> : vector<2x32xf32>
    %623 = tpu.matmul %621, %622, %cst_102 {dimension_numbers = #tpu.dot_dimension_numbers<[1], [0], [0], [1], [0, 0, 1, 1], [], []>} : vector<2x64xf32>, vector<64x32xf32>, vector<2x32xf32> -> vector<2x32xf32>
    %624 = arith.addf %604, %623 : vector<2x32xf32>
    %c124 = arith.constant 124 : index
    %625 = memref.load %arg1[%c124] : memref<128xf32, #tpu.memory_space<smem>>
    %626 = vector.broadcast %625 : f32 to vector<2x64xf32>
    %627 = arith.mulf %0, %626 : vector<2x64xf32>
    %c125 = arith.constant 125 : index
    %628 = memref.load %arg1[%c125] : memref<128xf32, #tpu.memory_space<smem>>
    %629 = vector.broadcast %628 : f32 to vector<2x64xf32>
    %630 = arith.mulf %1, %629 : vector<2x64xf32>
    %631 = arith.addf %627, %630 : vector<2x64xf32>
    %c126 = arith.constant 126 : index
    %632 = memref.load %arg1[%c126] : memref<128xf32, #tpu.memory_space<smem>>
    %633 = vector.broadcast %632 : f32 to vector<2x64xf32>
    %634 = arith.mulf %2, %633 : vector<2x64xf32>
    %635 = arith.addf %631, %634 : vector<2x64xf32>
    %c127 = arith.constant 127 : index
    %636 = memref.load %arg1[%c127] : memref<128xf32, #tpu.memory_space<smem>>
    %637 = vector.broadcast %636 : f32 to vector<2x64xf32>
    %638 = arith.mulf %3, %637 : vector<2x64xf32>
    %639 = arith.addf %635, %638 : vector<2x64xf32>
    %cst_103 = arith.constant 0.000000e+00 : f32
    %640 = vector.broadcast %cst_103 : f32 to vector<2x64xf32>
    %641 = arith.maximumf %639, %640 : vector<2x64xf32>
    %c1984 = arith.constant 1984 : index
    %c0_104 = arith.constant 0 : index
    %642 = vector.load %arg2[%c1984, %c0_104] : memref<2048x32xf32, #tpu.memory_space<vmem>>, vector<64x32xf32>
    %cst_105 = arith.constant dense<0.000000e+00> : vector<2x32xf32>
    %643 = tpu.matmul %641, %642, %cst_105 {dimension_numbers = #tpu.dot_dimension_numbers<[1], [0], [0], [1], [0, 0, 1, 1], [], []>} : vector<2x64xf32>, vector<64x32xf32>, vector<2x32xf32> -> vector<2x32xf32>
    %644 = arith.addf %624, %643 : vector<2x32xf32>
    %c0_106 = arith.constant 0 : index
    %c0_107 = arith.constant 0 : index
    %645 = vector.load %arg3[%c0_106, %c0_107] : memref<1x32xf32, #tpu.memory_space<vmem>>, vector<1x32xf32>
    %646 = vector.broadcast %645 : vector<1x32xf32> to vector<2x32xf32>
    %647 = arith.addf %644, %646 : vector<2x32xf32>
    %cst_108 = arith.constant 0.000000e+00 : f32
    %648 = vector.broadcast %cst_108 : f32 to vector<2x32xf32>
    %649 = arith.maximumf %647, %648 : vector<2x32xf32>
    %c0_109 = arith.constant 0 : index
    %c0_110 = arith.constant 0 : index
    %650 = vector.load %arg4[%c0_109, %c0_110] : memref<32x384xf32, #tpu.memory_space<vmem>>, vector<32x384xf32>
    %cst_111 = arith.constant dense<0.000000e+00> : vector<2x384xf32>
    %651 = tpu.matmul %649, %650, %cst_111 {dimension_numbers = #tpu.dot_dimension_numbers<[1], [0], [0], [1], [0, 0, 1, 1], [], []>} : vector<2x32xf32>, vector<32x384xf32>, vector<2x384xf32> -> vector<2x384xf32>
    %c0_112 = arith.constant 0 : index
    %c0_113 = arith.constant 0 : index
    %652 = vector.load %arg5[%c0_112, %c0_113] : memref<1x384xf32, #tpu.memory_space<vmem>>, vector<1x384xf32>
    %653 = vector.broadcast %652 : vector<1x384xf32> to vector<2x384xf32>
    %654 = arith.addf %651, %653 : vector<2x384xf32>
    %655 = vector.extract_strided_slice %654 {offsets = [0, 0], sizes = [2, 128], strides = [1, 1]} : vector<2x384xf32> to vector<2x128xf32>
    %656 = arith.negf %655 : vector<2x128xf32>
    %657 = math.exp %656 : vector<2x128xf32>
    %cst_114 = arith.constant 1.000000e+00 : f32
    %658 = vector.broadcast %cst_114 : f32 to vector<2x128xf32>
    %659 = arith.addf %658, %657 : vector<2x128xf32>
    %660 = arith.divf %658, %659 : vector<2x128xf32>
    %661 = vector.extract_strided_slice %654 {offsets = [0, 128], sizes = [2, 128], strides = [1, 1]} : vector<2x384xf32> to vector<2x128xf32>
    %662 = arith.negf %661 : vector<2x128xf32>
    %663 = math.exp %662 : vector<2x128xf32>
    %cst_115 = arith.constant 1.000000e+00 : f32
    %664 = vector.broadcast %cst_115 : f32 to vector<2x128xf32>
    %665 = arith.addf %664, %663 : vector<2x128xf32>
    %666 = arith.divf %664, %665 : vector<2x128xf32>
    %667 = vector.extract_strided_slice %654 {offsets = [0, 256], sizes = [2, 128], strides = [1, 1]} : vector<2x384xf32> to vector<2x128xf32>
    %c0_116 = arith.constant 0 : index
    %c0_117 = arith.constant 0 : index
    %668 = vector.load %arg6[%c0_116, %c0_117] : memref<1x128xf32, #tpu.memory_space<vmem>>, vector<1x128xf32>
    %669 = vector.broadcast %668 : vector<1x128xf32> to vector<2x128xf32>
    %670 = arith.mulf %660, %669 : vector<2x128xf32>
    %671 = arith.addf %667, %670 : vector<2x128xf32>
    %672 = math.tanh %671 : vector<2x128xf32>
    %cst_118 = arith.constant 1.000000e+00 : f32
    %673 = vector.broadcast %cst_118 : f32 to vector<2x128xf32>
    %674 = arith.subf %673, %666 : vector<2x128xf32>
    %675 = arith.mulf %674, %672 : vector<2x128xf32>
    %c0_119 = arith.constant 0 : index
    %c0_120 = arith.constant 0 : index
    %676 = vector.load %arg7[%c0_119, %c0_120] : memref<128x2xf32, #tpu.memory_space<vmem>>, vector<128x2xf32>
    %cst_121 = arith.constant dense<0.000000e+00> : vector<2x2xf32>
    %677 = tpu.matmul %675, %676, %cst_121 {dimension_numbers = #tpu.dot_dimension_numbers<[1], [0], [0], [1], [0, 0, 1, 1], [], []>} : vector<2x128xf32>, vector<128x2xf32>, vector<2x2xf32> -> vector<2x2xf32>
    %c0_122 = arith.constant 0 : index
    %c0_123 = arith.constant 0 : index
    %678 = vector.load %arg8[%c0_122, %c0_123] : memref<1x2xf32, #tpu.memory_space<vmem>>, vector<1x2xf32>
    %679 = vector.broadcast %678 : vector<1x2xf32> to vector<2x2xf32>
    %680 = arith.addf %677, %679 : vector<2x2xf32>
    %681 = arith.negf %680 : vector<2x2xf32>
    %682 = math.exp %681 : vector<2x2xf32>
    %cst_124 = arith.constant 1.000000e+00 : f32
    %683 = vector.broadcast %cst_124 : f32 to vector<2x2xf32>
    %684 = arith.addf %683, %682 : vector<2x2xf32>
    %685 = arith.divf %683, %684 : vector<2x2xf32>
    %c0_125 = arith.constant 0 : index
    %c0_126 = arith.constant 0 : index
    %686 = vector.load %arg9[%c0_125, %c0_126] : memref<2x256xf32, #tpu.memory_space<vmem>>, vector<2x128xf32>
    tpu.vector_store %arg9[%c0_125, %c0_126], %675 {strides = array<i32>} : memref<2x256xf32, #tpu.memory_space<vmem>>, vector<2x128xf32>,
    %c0_127 = arith.constant 0 : index
    %c128_128 = arith.constant 128 : index
    %687 = vector.load %arg9[%c0_127, %c128_128] : memref<2x256xf32, #tpu.memory_space<vmem>>, vector<2x2xf32>
    tpu.vector_store %arg9[%c0_127, %c128_128], %685 {strides = array<i32>} : memref<2x256xf32, #tpu.memory_space<vmem>>, vector<2x2xf32>,
    return
  }
}

</mosaic_0001>

<llo_original>
// kernel: actor_critic_act.1
$region0: #{actor_critic_act.1}
  #allocation0 [shape = 'u32[]', space=smem, size = 0x4, offset = 0x4, fixed_abs, tag = 'smem constant byte address 0x4 - core index']
  #allocation1 [shape = 'u32[72,128]{1,0:T(1,128)}', space=vmem, size = 0x9000, scoped, tag = 'internal scratch']
  %s0 = inlined_call_operand.vmem [shape: f32[2,256], index: 0, kind: input, shape index: {}]
  %s1 = inlined_call_operand.vmem [shape: f32[128], index: 1, kind: input, shape index: {}]
  %s2 = inlined_call_operand.vmem [shape: f32[2048,32], index: 2, kind: input, shape index: {}]
  %s3 = inlined_call_operand.vmem [shape: f32[1,32], index: 3, kind: input, shape index: {}]
  %s4 = inlined_call_operand.vmem [shape: f32[32,384], index: 4, kind: input, shape index: {}]
  %s5 = inlined_call_operand.vmem [shape: f32[1,384], index: 5, kind: input, shape index: {}]
  %s6 = inlined_call_operand.vmem [shape: f32[1,128], index: 6, kind: input, shape index: {}]
  %s7 = inlined_call_operand.vmem [shape: f32[128,2], index: 7, kind: input, shape index: {}]
  %s8 = inlined_call_operand.vmem [shape: f32[1,2], index: 8, kind: input, shape index: {}]
  %s9 = inlined_call_operand.vmem [shape: f32[2,256], index: 9, kind: output, shape index: {}]
  %s10 = sld [smem:[#allocation0]]
  $region50: #{actor_critic_act.1} parent=0
    _
  %s12 = ssub.s32 1, %s10
  %s13 = scalar_select 0, %s12, %s10
  $region1: #{actor_critic_act.1} parent=0
    #allocation2 [shape = 'u8[512]{0}', space=smem, size = 0x200, scoped, tag = 'input window, operand 1, single buffered']
    #allocation3 [shape = 's32[1]{0}', space=sflag, size = 0x4, scoped, tag = 'scoped memory for actor_critic_act.1']
    %14 = vsyncpa [#allocation3], 0
    // Predicated region
    $region2: #{actor_critic_act.1} parent=1 // pred_check
      _
    $region3: #{actor_critic_act.1} parent=1 // pred_check_branch
      %16 = sbr.rel (0) target = $region5
    $region4: #{actor_critic_act.1} parent=1 // pred_region
      _
    $region5: #{actor_critic_act.1} parent=1 // pred_fallthru
      _
    // Predicated region
    $region6: #{actor_critic_act.1} parent=1 // pred_check
      _
    $region7: #{actor_critic_act.1} parent=1 // pred_check_branch
      %18 = sbr.rel (0) target = $region9
    $region8: #{actor_critic_act.1} parent=1 // pred_region
      %20 = vsyncadd [#allocation3], 0
      %s22 = sshll.u32 %s1, 4
      %s23 = int_to_ptr.vmem [resolvable:$true] %s22
      %25 = dma.vmem_to_smem %s23, 16, [#allocation2], [#allocation3]
    $region9: #{actor_critic_act.1} parent=1 // pred_fallthru
      _
    // Predicated region
    $region10: #{actor_critic_act.1} parent=1 // pred_check
      _
    $region11: #{actor_critic_act.1} parent=1 // pred_check_branch
      %27 = sbr.rel (0) target = $region13
    $region12: #{actor_critic_act.1} parent=1 // pred_region
      _
    $region13: #{actor_critic_act.1} parent=1 // pred_fallthru
      _
    // Predicated region
    $region14: #{actor_critic_act.1} parent=1 // pred_check
      _
    $region15: #{actor_critic_act.1} parent=1 // pred_check_branch
      %29 = sbr.rel (0) target = $region17
    $region16: #{actor_critic_act.1} parent=1 // pred_region
      _
    $region17: #{actor_critic_act.1} parent=1 // pred_fallthru
      _
    // Predicated region
    $region18: #{actor_critic_act.1} parent=1 // pred_check
      _
    $region19: #{actor_critic_act.1} parent=1 // pred_check_branch
      %31 = sbr.rel (0) target = $region21
    $region20: #{actor_critic_act.1} parent=1 // pred_region
      _
    $region21: #{actor_critic_act.1} parent=1 // pred_fallthru
      _
    // Predicated region
    $region22: #{actor_critic_act.1} parent=1 // pred_check
      _
    $region23: #{actor_critic_act.1} parent=1 // pred_check_branch
      %33 = sbr.rel (0) target = $region25
    $region24: #{actor_critic_act.1} parent=1 // pred_region
      _
    $region25: #{actor_critic_act.1} parent=1 // pred_fallthru
      _
    // Predicated region
    $region26: #{actor_critic_act.1} parent=1 // pred_check
      _
    $region27: #{actor_critic_act.1} parent=1 // pred_check_branch
      %35 = sbr.rel (0) target = $region29
    $region28: #{actor_critic_act.1} parent=1 // pred_region
      _
    $region29: #{actor_critic_act.1} parent=1 // pred_fallthru
      _
    // Predicated region
    $region30: #{actor_critic_act.1} parent=1 // pred_check
      _
    $region31: #{actor_critic_act.1} parent=1 // pred_check_branch
      %37 = sbr.rel (0) target = $region33
    $region32: #{actor_critic_act.1} parent=1 // pred_region
      _
    $region33: #{actor_critic_act.1} parent=1 // pred_fallthru
      _
    // Predicated region
    $region34: #{actor_critic_act.1} parent=1 // pred_check
      _
    $region35: #{actor_critic_act.1} parent=1 // pred_check_branch
      %39 = sbr.rel (0) target = $region37
    $region36: #{actor_critic_act.1} parent=1 // pred_region
      _
    $region37: #{actor_critic_act.1} parent=1 // pred_fallthru
      _
    // Predicated region
    $region38: #{actor_critic_act.1} parent=1 // pred_check
      _
    $region39: #{actor_critic_act.1} parent=1 // pred_check_branch
      %41 = sbr.rel (0) target = $region41
    $region40: #{actor_critic_act.1} parent=1 // pred_region
      %43 = dma.done [#allocation3], 16
    $region41: #{actor_critic_act.1} parent=1 // pred_fallthru
      _
    %44 = sfence
    %v45 = vld [vmem:[%s0] sm:$0x3]
    %v46 = vld [vmem:[%s0 + $0x2] sm:$0x3]
    %s47 = sld [smem:[#allocation2]]
    %v48 = vstv %s47
    %v49 = vmul.f32 %v45, %v48
    %s50 = sld [smem:[#allocation2 + $0x1]]
    %v51 = vstv %s50
    %v52 = vmul.f32 %v45, %v51
    %54 = vrot.lane.b32.xlu0 %v52, 64
    %v55 = vpop.permute.xlu0 %54
    %v57 = vadd.f32 %v49, %v55
    %s58 = sld [smem:[#allocation2 + $0x2]]
    %v59 = vstv %s58
    %v60 = vmul.f32 %v46, %v59
    %v61 = vadd.f32 %v57, %v60
    %s62 = sld [smem:[#allocation2 + $0x3]]
    %v63 = vstv %s62
    %v64 = vmul.f32 %v46, %v63
    %66 = vrot.lane.b32.xlu0 %v64, 64
    %v67 = vpop.permute.xlu0 %66
    %v69 = vadd.f32 %v61, %v67
    %v70 = vmax.f32 %v69, 0.0
    %v71 = vld [vmem:[%s2] sm:$0xff]
    %v72 = vld [vmem:[%s2 + $0x8] sm:$0xff]
    %v73 = vld [vmem:[%s2 + $0x10] sm:$0xff]
    %v74 = vld [vmem:[%s2 + $0x18] sm:$0xff]
    %v75 = vld [vmem:[%s2 + $0x20] sm:$0xff]
    %v76 = vld [vmem:[%s2 + $0x28] sm:$0xff]
    %v77 = vld [vmem:[%s2 + $0x30] sm:$0xff]
    %v78 = vld [vmem:[%s2 + $0x38] sm:$0xff]
    %s79 = sld [smem:[#allocation2 + $0x4]]
    %v80 = vstv %s79
    %v81 = vmul.f32 %v45, %v80
    %s82 = sld [smem:[#allocation2 + $0x5]]
    %v83 = vstv %s82
    %v84 = vmul.f32 %v45, %v83
    %86 = vrot.lane.b32.xlu0 %v84, 64
    %v87 = vpop.permute.xlu0 %86
    %v89 = vadd.f32 %v81, %v87
    %s90 = sld [smem:[#allocation2 + $0x6]]
    %v91 = vstv %s90
    %v92 = vmul.f32 %v46, %v91
    %v93 = vadd.f32 %v89, %v92
    %s94 = sld [smem:[#allocation2 + $0x7]]
    %v95 = vstv %s94
    %v96 = vmul.f32 %v46, %v95
    %98 = vrot.lane.b32.xlu0 %v96, 64
    %v99 = vpop.permute.xlu0 %98
    %v101 = vadd.f32 %v93, %v99
    %v102 = vmax.f32 %v101, 0.0
    %v103 = vld [vmem:[%s2 + $0x40] sm:$0xff]
    %v104 = vld [vmem:[%s2 + $0x48] sm:$0xff]
    %v105 = vld [vmem:[%s2 + $0x50] sm:$0xff]
    %v106 = vld [vmem:[%s2 + $0x58] sm:$0xff]
    %v107 = vld [vmem:[%s2 + $0x60] sm:$0xff]
    %v108 = vld [vmem:[%s2 + $0x68] sm:$0xff]
    %v109 = vld [vmem:[%s2 + $0x70] sm:$0xff]
    %v110 = vld [vmem:[%s2 + $0x78] sm:$0xff]
    %vm111 = vcmask 523264
    %v113 = vsel %vm111, %v102, 0
    %115 = vmatpush.msra.mxu0 0.0
    %116 = vmatpush.msra.mxu0 0.0
    %117 = vmatpush.msra.mxu0 0.0
    %118 = vmatpush.msra.mxu0 0.0
    %119 = vmatpush.msra.mxu0 0.0
    %120 = vmatpush.msra.mxu0 0.0
    %121 = vmatpush.msra.mxu0 0.0
    %122 = vmatpush.msra.mxu0 0.0
    %123 = vmatpush.msra.mxu0 %v110
    %124 = vmatpush.msra.mxu0 %v109
    %125 = vmatpush.msra.mxu0 %v108
    %126 = vmatpush.msra.mxu0 %v107
    %127 = vmatpush.msra.mxu0 %v106
    %128 = vmatpush.msra.mxu0 %v105
    %129 = vmatpush.msra.mxu0 %v104
    %130 = vmatpush.msra.mxu0 %v103
    %131 = vmatmul.f32.gmra.mxu0 %v113
    %v132 = vpop.f32.mrf.mxu0
    %v133 = vadd.f32 0.0, %v132
    %134 = vdwg.mxu0
    %v136 = vsel %vm111, %v70, 0
    %138 = vmatpush.msra.mxu0 0.0
    %139 = vmatpush.msra.mxu0 0.0
    %140 = vmatpush.msra.mxu0 0.0
    %141 = vmatpush.msra.mxu0 0.0
    %142 = vmatpush.msra.mxu0 0.0
    %143 = vmatpush.msra.mxu0 0.0
    %144 = vmatpush.msra.mxu0 0.0
    %145 = vmatpush.msra.mxu0 0.0
    %146 = vmatpush.msra.mxu0 %v78
    %147 = vmatpush.msra.mxu0 %v77
    %148 = vmatpush.msra.mxu0 %v76
    %149 = vmatpush.msra.mxu0 %v75
    %150 = vmatpush.msra.mxu0 %v74
    %151 = vmatpush.msra.mxu0 %v73
    %152 = vmatpush.msra.mxu0 %v72
    %153 = vmatpush.msra.mxu0 %v71
    %154 = vmatmul.f32.gmra.mxu0 %v136
    %v155 = vpop.f32.mrf.mxu0
    %v156 = vadd.f32 %v133, %v155
    %157 = vdwg.mxu0
    %s158 = sld [smem:[#allocation2 + $0x8]]
    %v159 = vstv %s158
    %v160 = vmul.f32 %v45, %v159
    %s161 = sld [smem:[#allocation2 + $0x9]]
    %v162 = vstv %s161
    %v163 = vmul.f32 %v45, %v162
    %165 = vrot.lane.b32.xlu0 %v163, 64
    %v166 = vpop.permute.xlu0 %165
    %v168 = vadd.f32 %v160, %v166
    %s169 = sld [smem:[#allocation2 + $0xa]]
    %v170 = vstv %s169
    %v171 = vmul.f32 %v46, %v170
    %v172 = vadd.f32 %v168, %v171
    %s173 = sld [smem:[#allocation2 + $0xb]]
    %v174 = vstv %s173
    %v175 = vmul.f32 %v46, %v174
    %177 = vrot.lane.b32.xlu0 %v175, 64
    %v178 = vpop.permute.xlu0 %177
    %v180 = vadd.f32 %v172, %v178
    %v181 = vmax.f32 %v180, 0.0
    %v182 = vld [vmem:[%s2 + $0x80] sm:$0xff]
    %v183 = vld [vmem:[%s2 + $0x88] sm:$0xff]
    %v184 = vld [vmem:[%s2 + $0x90] sm:$0xff]
    %v185 = vld [vmem:[%s2 + $0x98] sm:$0xff]
    %v186 = vld [vmem:[%s2 + $0xa0] sm:$0xff]
    %v187 = vld [vmem:[%s2 + $0xa8] sm:$0xff]
    %v188 = vld [vmem:[%s2 + $0xb0] sm:$0xff]
    %v189 = vld [vmem:[%s2 + $0xb8] sm:$0xff]
    %v191 = vsel %vm111, %v181, 0
    %193 = vmatpush.msra.mxu0 0.0
    %194 = vmatpush.msra.mxu0 0.0
    %195 = vmatpush.msra.mxu0 0.0
    %196 = vmatpush.msra.mxu0 0.0
    %197 = vmatpush.msra.mxu0 0.0
    %198 = vmatpush.msra.mxu0 0.0
    %199 = vmatpush.msra.mxu0 0.0
    %200 = vmatpush.msra.mxu0 0.0
    %201 = vmatpush.msra.mxu0 %v189
    %202 = vmatpush.msra.mxu0 %v188
    %203 = vmatpush.msra.mxu0 %v187
    %204 = vmatpush.msra.mxu0 %v186
    %205 = vmatpush.msra.mxu0 %v185
    %206 = vmatpush.msra.mxu0 %v184
    %207 = vmatpush.msra.mxu0 %v183
    %208 = vmatpush.msra.mxu0 %v182
    %209 = vmatmul.f32.gmra.mxu0 %v191
    %v210 = vpop.f32.mrf.mxu0
    %v211 = vadd.f32 0.0, %v210
    %212 = vdwg.mxu0
    %v213 = vadd.f32 %v156, %v211
    %s214 = sld [smem:[#allocation2 + $0xc]]
    %v215 = vstv %s214
    %v216 = vmul.f32 %v45, %v215
    %s217 = sld [smem:[#allocation2 + $0xd]]
    %v218 = vstv %s217
    %v219 = vmul.f32 %v45, %v218
    %221 = vrot.lane.b32.xlu0 %v219, 64
    %v222 = vpop.permute.xlu0 %221
    %v224 = vadd.f32 %v216, %v222
    %s225 = sld [smem:[#allocation2 + $0xe]]
    %v226 = vstv %s225
    %v227 = vmul.f32 %v46, %v226
    %v228 = vadd.f32 %v224, %v227
    %s229 = sld [smem:[#allocation2 + $0xf]]
    %v230 = vstv %s229
    %v231 = vmul.f32 %v46, %v230
    %233 = vrot.lane.b32.xlu0 %v231, 64
    %v234 = vpop.permute.xlu0 %233
    %v236 = vadd.f32 %v228, %v234
    %v237 = vmax.f32 %v236, 0.0
    %v238 = vld [vmem:[%s2 + $0xc0] sm:$0xff]
    %v239 = vld [vmem:[%s2 + $0xc8] sm:$0xff]
    %v240 = vld [vmem:[%s2 + $0xd0] sm:$0xff]
    %v241 = vld [vmem:[%s2 + $0xd8] sm:$0xff]
    %v242 = vld [vmem:[%s2 + $0xe0] sm:$0xff]
    %v243 = vld [vmem:[%s2 + $0xe8] sm:$0xff]
    %v244 = vld [vmem:[%s2 + $0xf0] sm:$0xff]
    %v245 = vld [vmem:[%s2 + $0xf8] sm:$0xff]
    %v247 = vsel %vm111, %v237, 0
    %249 = vmatpush.msra.mxu0 0.0
    %250 = vmatpush.msra.mxu0 0.0
    %251 = vmatpush.msra.mxu0 0.0
    %252 = vmatpush.msra.mxu0 0.0
    %253 = vmatpush.msra.mxu0 0.0
    %254 = vmatpush.msra.mxu0 0.0
    %255 = vmatpush.msra.mxu0 0.0
    %256 = vmatpush.msra.mxu0 0.0
    %257 = vmatpush.msra.mxu0 %v245
    %258 = vmatpush.msra.mxu0 %v244
    %259 = vmatpush.msra.mxu0 %v243
    %260 = vmatpush.msra.mxu0 %v242
    %261 = vmatpush.msra.mxu0 %v241
    %262 = vmatpush.msra.mxu0 %v240
    %263 = vmatpush.msra.mxu0 %v239
    %264 = vmatpush.msra.mxu0 %v238
    %265 = vmatmul.f32.gmra.mxu0 %v247
    %v266 = vpop.f32.mrf.mxu0
    %v267 = vadd.f32 0.0, %v266
    %268 = vdwg.mxu0
    %v269 = vadd.f32 %v213, %v267
    %s270 = sld [smem:[#allocation2 + $0x10]]
    %v271 = vstv %s270
    %v272 = vmul.f32 %v45, %v271
    %s273 = sld [smem:[#allocation2 + $0x11]]
    %v274 = vstv %s273
    %v275 = vmul.f32 %v45, %v274
    %277 = vrot.lane.b32.xlu0 %v275, 64
    %v278 = vpop.permute.xlu0 %277
    %v280 = vadd.f32 %v272, %v278
    %s281 = sld [smem:[#allocation2 + $0x12]]
    %v282 = vstv %s281
    %v283 = vmul.f32 %v46, %v282
    %v284 = vadd.f32 %v280, %v283
    %s285 = sld [smem:[#allocation2 + $0x13]]
    %v286 = vstv %s285
    %v287 = vmul.f32 %v46, %v286
    %289 = vrot.lane.b32.xlu0 %v287, 64
    %v290 = vpop.permute.xlu0 %289
    %v292 = vadd.f32 %v284, %v290
    %v293 = vmax.f32 %v292, 0.0
    %v294 = vld [vmem:[%s2 + $0x100] sm:$0xff]
    %v295 = vld [vmem:[%s2 + $0x108] sm:$0xff]
    %v296 = vld [vmem:[%s2 + $0x110] sm:$0xff]
    %v297 = vld [vmem:[%s2 + $0x118] sm:$0xff]
    %v298 = vld [vmem:[%s2 + $0x120] sm:$0xff]
    %v299 = vld [vmem:[%s2 + $0x128] sm:$0xff]
    %v300 = vld [vmem:[%s2 + $0x130] sm:$0xff]
    %v301 = vld [vmem:[%s2 + $0x138] sm:$0xff]
    %v303 = vsel %vm111, %v293, 0
    %305 = vmatpush.msra.mxu0 0.0
    %306 = vmatpush.msra.mxu0 0.0
    %307 = vmatpush.msra.mxu0 0.0
    %308 = vmatpush.msra.mxu0 0.0
    %309 = vmatpush.msra.mxu0 0.0
    %310 = vmatpush.msra.mxu0 0.0
    %311 = vmatpush.msra.mxu0 0.0
    %312 = vmatpush.msra.mxu0 0.0
    %313 = vmatpush.msra.mxu0 %v301
    %314 = vmatpush.msra.mxu0 %v300
    %315 = vmatpush.msra.mxu0 %v299
    %316 = vmatpush.msra.mxu0 %v298
    %317 = vmatpush.msra.mxu0 %v297
    %318 = vmatpush.msra.mxu0 %v296
    %319 = vmatpush.msra.mxu0 %v295
    %320 = vmatpush.msra.mxu0 %v294
    %321 = vmatmul.f32.gmra.mxu0 %v303
    %v322 = vpop.f32.mrf.mxu0
    %v323 = vadd.f32 0.0, %v322
    %324 = vdwg.mxu0
    %v325 = vadd.f32 %v269, %v323
    %s326 = sld [smem:[#allocation2 + $0x14]]
    %v327 = vstv %s326
    %v328 = vmul.f32 %v45, %v327
    %s329 = sld [smem:[#allocation2 + $0x15]]
    %v330 = vstv %s329
    %v331 = vmul.f32 %v45, %v330
    %333 = vrot.lane.b32.xlu0 %v331, 64
    %v334 = vpop.permute.xlu0 %333
    %v336 = vadd.f32 %v328, %v334
    %s337 = sld [smem:[#allocation2 + $0x16]]
    %v338 = vstv %s337
    %v339 = vmul.f32 %v46, %v338
    %v340 = vadd.f32 %v336, %v339
    %s341 = sld [smem:[#allocation2 + $0x17]]
    %v342 = vstv %s341
    %v343 = vmul.f32 %v46, %v342
    %345 = vrot.lane.b32.xlu0 %v343, 64
    %v346 = vpop.permute.xlu0 %345
    %v348 = vadd.f32 %v340, %v346
    %v349 = vmax.f32 %v348, 0.0
    %v350 = vld [vmem:[%s2 + $0x140] sm:$0xff]
    %v351 = vld [vmem:[%s2 + $0x148] sm:$0xff]
    %v352 = vld [vmem:[%s2 + $0x150] sm:$0xff]
    %v353 = vld [vmem:[%s2 + $0x158] sm:$0xff]
    %v354 = vld [vmem:[%s2 + $0x160] sm:$0xff]
    %v355 = vld [vmem:[%s2 + $0x168] sm:$0xff]
    %v356 = vld [vmem:[%s2 + $0x170] sm:$0xff]
    %v357 = vld [vmem:[%s2 + $0x178] sm:$0xff]
    %v359 = vsel %vm111, %v349, 0
    %361 = vmatpush.msra.mxu0 0.0
    %362 = vmatpush.msra.mxu0 0.0
    %363 = vmatpush.msra.mxu0 0.0
    %364 = vmatpush.msra.mxu0 0.0
    %365 = vmatpush.msra.mxu0 0.0
    %366 = vmatpush.msra.mxu0 0.0
    %367 = vmatpush.msra.mxu0 0.0
    %368 = vmatpush.msra.mxu0 0.0
    %369 = vmatpush.msra.mxu0 %v357
    %370 = vmatpush.msra.mxu0 %v356
    %371 = vmatpush.msra.mxu0 %v355
    %372 = vmatpush.msra.mxu0 %v354
    %373 = vmatpush.msra.mxu0 %v353
    %374 = vmatpush.msra.mxu0 %v352
    %375 = vmatpush.msra.mxu0 %v351
    %376 = vmatpush.msra.mxu0 %v350
    %377 = vmatmul.f32.gmra.mxu0 %v359
    %v378 = vpop.f32.mrf.mxu0
    %v379 = vadd.f32 0.0, %v378
    %380 = vdwg.mxu0
    %v381 = vadd.f32 %v325, %v379
    %s382 = sld [smem:[#allocation2 + $0x18]]
    %v383 = vstv %s382
    %v384 = vmul.f32 %v45, %v383
    %s385 = sld [smem:[#allocation2 + $0x19]]
    %v386 = vstv %s385
    %v387 = vmul.f32 %v45, %v386
    %389 = vrot.lane.b32.xlu0 %v387, 64
    %v390 = vpop.permute.xlu0 %389
    %v392 = vadd.f32 %v384, %v390
    %s393 = sld [smem:[#allocation2 + $0x1a]]
    %v394 = vstv %s393
    %v395 = vmul.f32 %v46, %v394
    %v396 = vadd.f32 %v392, %v395
    %s397 = sld [smem:[#allocation2 + $0x1b]]
    %v398 = vstv %s397
    %v399 = vmul.f32 %v46, %v398
    %401 = vrot.lane.b32.xlu0 %v399, 64
    %v402 = vpop.permute.xlu0 %401
    %v404 = vadd.f32 %v396, %v402
    %v405 = vmax.f32 %v404, 0.0
    %v406 = vld [vmem:[%s2 + $0x180] sm:$0xff]
    %v407 = vld [vmem:[%s2 + $0x188] sm:$0xff]
    %v408 = vld [vmem:[%s2 + $0x190] sm:$0xff]
    %v409 = vld [vmem:[%s2 + $0x198] sm:$0xff]
    %v410 = vld [vmem:[%s2 + $0x1a0] sm:$0xff]
    %v411 = vld [vmem:[%s2 + $0x1a8] sm:$0xff]
    %v412 = vld [vmem:[%s2 + $0x1b0] sm:$0xff]
    %v413 = vld [vmem:[%s2 + $0x1b8] sm:$0xff]
    %v415 = vsel %vm111, %v405, 0
    %417 = vmatpush.msra.mxu0 0.0
    %418 = vmatpush.msra.mxu0 0.0
    %419 = vmatpush.msra.mxu0 0.0
    %420 = vmatpush.msra.mxu0 0.0
    %421 = vmatpush.msra.mxu0 0.0
    %422 = vmatpush.msra.mxu0 0.0
    %423 = vmatpush.msra.mxu0 0.0
    %424 = vmatpush.msra.mxu0 0.0
    %425 = vmatpush.msra.mxu0 %v413
    %426 = vmatpush.msra.mxu0 %v412
    %427 = vmatpush.msra.mxu0 %v411
    %428 = vmatpush.msra.mxu0 %v410
    %429 = vmatpush.msra.mxu0 %v409
    %430 = vmatpush.msra.mxu0 %v408
    %431 = vmatpush.msra.mxu0 %v407
    %432 = vmatpush.msra.mxu0 %v406
    %433 = vmatmul.f32.gmra.mxu0 %v415
    %v434 = vpop.f32.mrf.mxu0
    %v435 = vadd.f32 0.0, %v434
    %436 = vdwg.mxu0
    %v437 = vadd.f32 %v381, %v435
    %s438 = sld [smem:[#allocation2 + $0x1c]]
    %v439 = vstv %s438
    %v440 = vmul.f32 %v45, %v439
    %s441 = sld [smem:[#allocation2 + $0x1d]]
    %v442 = vstv %s441
    %v443 = vmul.f32 %v45, %v442
    %445 = vrot.lane.b32.xlu0 %v443, 64
    %v446 = vpop.permute.xlu0 %445
    %v448 = vadd.f32 %v440, %v446
    %s449 = sld [smem:[#allocation2 + $0x1e]]
    %v450 = vstv %s449
    %v451 = vmul.f32 %v46, %v450
    %v452 = vadd.f32 %v448, %v451
    %s453 = sld [smem:[#allocation2 + $0x1f]]
    %v454 = vstv %s453
    %v455 = vmul.f32 %v46, %v454
    %457 = vrot.lane.b32.xlu0 %v455, 64
    %v458 = vpop.permute.xlu0 %457
    %v460 = vadd.f32 %v452, %v458
    %v461 = vmax.f32 %v460, 0.0
    %v462 = vld [vmem:[%s2 + $0x1c0] sm:$0xff]
    %v463 = vld [vmem:[%s2 + $0x1c8] sm:$0xff]
    %v464 = vld [vmem:[%s2 + $0x1d0] sm:$0xff]
    %v465 = vld [vmem:[%s2 + $0x1d8] sm:$0xff]
    %v466 = vld [vmem:[%s2 + $0x1e0] sm:$0xff]
    %v467 = vld [vmem:[%s2 + $0x1e8] sm:$0xff]
    %v468 = vld [vmem:[%s2 + $0x1f0] sm:$0xff]
    %v469 = vld [vmem:[%s2 + $0x1f8] sm:$0xff]
    %v471 = vsel %vm111, %v461, 0
    %473 = vmatpush.msra.mxu0 0.0
    %474 = vmatpush.msra.mxu0 0.0
    %475 = vmatpush.msra.mxu0 0.0
    %476 = vmatpush.msra.mxu0 0.0
    %477 = vmatpush.msra.mxu0 0.0
    %478 = vmatpush.msra.mxu0 0.0
    %479 = vmatpush.msra.mxu0 0.0
    %480 = vmatpush.msra.mxu0 0.0
    %481 = vmatpush.msra.mxu0 %v469
    %482 = vmatpush.msra.mxu0 %v468
    %483 = vmatpush.msra.mxu0 %v467
    %484 = vmatpush.msra.mxu0 %v466
    %485 = vmatpush.msra.mxu0 %v465
    %486 = vmatpush.msra.mxu0 %v464
    %487 = vmatpush.msra.mxu0 %v463
    %488 = vmatpush.msra.mxu0 %v462
    %489 = vmatmul.f32.gmra.mxu0 %v471
    %v490 = vpop.f32.mrf.mxu0
    %v491 = vadd.f32 0.0, %v490
    %492 = vdwg.mxu0
    %v493 = vadd.f32 %v437, %v491
    %s494 = sld [smem:[#allocation2 + $0x20]]
    %v495 = vstv %s494
    %v496 = vmul.f32 %v45, %v495
    %s497 = sld [smem:[#allocation2 + $0x21]]
    %v498 = vstv %s497
    %v499 = vmul.f32 %v45, %v498
    %501 = vrot.lane.b32.xlu0 %v499, 64
    %v502 = vpop.permute.xlu0 %501
    %v504 = vadd.f32 %v496, %v502
    %s505 = sld [smem:[#allocation2 + $0x22]]
    %v506 = vstv %s505
    %v507 = vmul.f32 %v46, %v506
    %v508 = vadd.f32 %v504, %v507
    %s509 = sld [smem:[#allocation2 + $0x23]]
    %v510 = vstv %s509
    %v511 = vmul.f32 %v46, %v510
    %513 = vrot.lane.b32.xlu0 %v511, 64
    %v514 = vpop.permute.xlu0 %513
    %v516 = vadd.f32 %v508, %v514
    %v517 = vmax.f32 %v516, 0.0
    %v518 = vld [vmem:[%s2 + $0x200] sm:$0xff]
    %v519 = vld [vmem:[%s2 + $0x208] sm:$0xff]
    %v520 = vld [vmem:[%s2 + $0x210] sm:$0xff]
    %v521 = vld [vmem:[%s2 + $0x218] sm:$0xff]
    %v522 = vld [vmem:[%s2 + $0x220] sm:$0xff]
    %v523 = vld [vmem:[%s2 + $0x228] sm:$0xff]
    %v524 = vld [vmem:[%s2 + $0x230] sm:$0xff]
    %v525 = vld [vmem:[%s2 + $0x238] sm:$0xff]
    %v527 = vsel %vm111, %v517, 0
    %529 = vmatpush.msra.mxu0 0.0
    %530 = vmatpush.msra.mxu0 0.0
    %531 = vmatpush.msra.mxu0 0.0
    %532 = vmatpush.msra.mxu0 0.0
    %533 = vmatpush.msra.mxu0 0.0
    %534 = vmatpush.msra.mxu0 0.0
    %535 = vmatpush.msra.mxu0 0.0
    %536 = vmatpush.msra.mxu0 0.0
    %537 = vmatpush.msra.mxu0 %v525
    %538 = vmatpush.msra.mxu0 %v524
    %539 = vmatpush.msra.mxu0 %v523
    %540 = vmatpush.msra.mxu0 %v522
    %541 = vmatpush.msra.mxu0 %v521
    %542 = vmatpush.msra.mxu0 %v520
    %543 = vmatpush.msra.mxu0 %v519
    %544 = vmatpush.msra.mxu0 %v518
    %545 = vmatmul.f32.gmra.mxu0 %v527
    %v546 = vpop.f32.mrf.mxu0
    %v547 = vadd.f32 0.0, %v546
    %548 = vdwg.mxu0
    %v549 = vadd.f32 %v493, %v547
    %s550 = sld [smem:[#allocation2 + $0x24]]
    %v551 = vstv %s550
    %v552 = vmul.f32 %v45, %v551
    %s553 = sld [smem:[#allocation2 + $0x25]]
    %v554 = vstv %s553
    %v555 = vmul.f32 %v45, %v554
    %557 = vrot.lane.b32.xlu0 %v555, 64
    %v558 = vpop.permute.xlu0 %557
    %v560 = vadd.f32 %v552, %v558
    %s561 = sld [smem:[#allocation2 + $0x26]]
    %v562 = vstv %s561
    %v563 = vmul.f32 %v46, %v562
    %v564 = vadd.f32 %v560, %v563
    %s565 = sld [smem:[#allocation2 + $0x27]]
    %v566 = vstv %s565
    %v567 = vmul.f32 %v46, %v566
    %569 = vrot.lane.b32.xlu0 %v567, 64
    %v570 = vpop.permute.xlu0 %569
    %v572 = vadd.f32 %v564, %v570
    %v573 = vmax.f32 %v572, 0.0
    %v574 = vld [vmem:[%s2 + $0x240] sm:$0xff]
    %v575 = vld [vmem:[%s2 + $0x248] sm:$0xff]
    %v576 = vld [vmem:[%s2 + $0x250] sm:$0xff]
    %v577 = vld [vmem:[%s2 + $0x258] sm:$0xff]
    %v578 = vld [vmem:[%s2 + $0x260] sm:$0xff]
    %v579 = vld [vmem:[%s2 + $0x268] sm:$0xff]
    %v580 = vld [vmem:[%s2 + $0x270] sm:$0xff]
    %v581 = vld [vmem:[%s2 + $0x278] sm:$0xff]
    %v583 = vsel %vm111, %v573, 0
    %585 = vmatpush.msra.mxu0 0.0
    %586 = vmatpush.msra.mxu0 0.0
    %587 = vmatpush.msra.mxu0 0.0
    %588 = vmatpush.msra.mxu0 0.0
    %589 = vmatpush.msra.mxu0 0.0
    %590 = vmatpush.msra.mxu0 0.0
    %591 = vmatpush.msra.mxu0 0.0
    %592 = vmatpush.msra.mxu0 0.0
    %593 = vmatpush.msra.mxu0 %v581
    %594 = vmatpush.msra.mxu0 %v580
    %595 = vmatpush.msra.mxu0 %v579
    %596 = vmatpush.msra.mxu0 %v578
    %597 = vmatpush.msra.mxu0 %v577
    %598 = vmatpush.msra.mxu0 %v576
    %599 = vmatpush.msra.mxu0 %v575
    %600 = vmatpush.msra.mxu0 %v574
    %601 = vmatmul.f32.gmra.mxu0 %v583
    %v602 = vpop.f32.mrf.mxu0
    %v603 = vadd.f32 0.0, %v602
    %604 = vdwg.mxu0
    %v605 = vadd.f32 %v549, %v603
    %s606 = sld [smem:[#allocation2 + $0x28]]
    %v607 = vstv %s606
    %v608 = vmul.f32 %v45, %v607
    %s609 = sld [smem:[#allocation2 + $0x29]]
    %v610 = vstv %s609
    %v611 = vmul.f32 %v45, %v610
    %613 = vrot.lane.b32.xlu0 %v611, 64
    %v614 = vpop.permute.xlu0 %613
    %v616 = vadd.f32 %v608, %v614
    %s617 = sld [smem:[#allocation2 + $0x2a]]
    %v618 = vstv %s617
    %v619 = vmul.f32 %v46, %v618
    %v620 = vadd.f32 %v616, %v619
    %s621 = sld [smem:[#allocation2 + $0x2b]]
    %v622 = vstv %s621
    %v623 = vmul.f32 %v46, %v622
    %625 = vrot.lane.b32.xlu0 %v623, 64
    %v626 = vpop.permute.xlu0 %625
    %v628 = vadd.f32 %v620, %v626
    %v629 = vmax.f32 %v628, 0.0
    %v630 = vld [vmem:[%s2 + $0x280] sm:$0xff]
    %v631 = vld [vmem:[%s2 + $0x288] sm:$0xff]
    %v632 = vld [vmem:[%s2 + $0x290] sm:$0xff]
    %v633 = vld [vmem:[%s2 + $0x298] sm:$0xff]
    %v634 = vld [vmem:[%s2 + $0x2a0] sm:$0xff]
    %v635 = vld [vmem:[%s2 + $0x2a8] sm:$0xff]
    %v636 = vld [vmem:[%s2 + $0x2b0] sm:$0xff]
    %v637 = vld [vmem:[%s2 + $0x2b8] sm:$0xff]
    %v639 = vsel %vm111, %v629, 0
    %641 = vmatpush.msra.mxu0 0.0
    %642 = vmatpush.msra.mxu0 0.0
    %643 = vmatpush.msra.mxu0 0.0
    %644 = vmatpush.msra.mxu0 0.0
    %645 = vmatpush.msra.mxu0 0.0
    %646 = vmatpush.msra.mxu0 0.0
    %647 = vmatpush.msra.mxu0 0.0
    %648 = vmatpush.msra.mxu0 0.0
    %649 = vmatpush.msra.mxu0 %v637
    %650 = vmatpush.msra.mxu0 %v636
    %651 = vmatpush.msra.mxu0 %v635
    %652 = vmatpush.msra.mxu0 %v634
    %653 = vmatpush.msra.mxu0 %v633
    %654 = vmatpush.msra.mxu0 %v632
    %655 = vmatpush.msra.mxu0 %v631
    %656 = vmatpush.msra.mxu0 %v630
    %657 = vmatmul.f32.gmra.mxu0 %v639
    %v658 = vpop.f32.mrf.mxu0
    %v659 = vadd.f32 0.0, %v658
    %660 = vdwg.mxu0
    %v661 = vadd.f32 %v605, %v659
    %s662 = sld [smem:[#allocation2 + $0x2c]]
    %v663 = vstv %s662
    %v664 = vmul.f32 %v45, %v663
    %s665 = sld [smem:[#allocation2 + $0x2d]]
    %v666 = vstv %s665
    %v667 = vmul.f32 %v45, %v666
    %669 = vrot.lane.b32.xlu0 %v667, 64
    %v670 = vpop.permute.xlu0 %669
    %v672 = vadd.f32 %v664, %v670
    %s673 = sld [smem:[#allocation2 + $0x2e]]
    %v674 = vstv %s673
    %v675 = vmul.f32 %v46, %v674
    %v676 = vadd.f32 %v672, %v675
    %s677 = sld [smem:[#allocation2 + $0x2f]]
    %v678 = vstv %s677
    %v679 = vmul.f32 %v46, %v678
    %681 = vrot.lane.b32.xlu0 %v679, 64
    %v682 = vpop.permute.xlu0 %681
    %v684 = vadd.f32 %v676, %v682
    %v685 = vmax.f32 %v684, 0.0
    %v686 = vld [vmem:[%s2 + $0x2c0] sm:$0xff]
    %v687 = vld [vmem:[%s2 + $0x2c8] sm:$0xff]
    %v688 = vld [vmem:[%s2 + $0x2d0] sm:$0xff]
    %v689 = vld [vmem:[%s2 + $0x2d8] sm:$0xff]
    %v690 = vld [vmem:[%s2 + $0x2e0] sm:$0xff]
    %v691 = vld [vmem:[%s2 + $0x2e8] sm:$0xff]
    %v692 = vld [vmem:[%s2 + $0x2f0] sm:$0xff]
    %v693 = vld [vmem:[%s2 + $0x2f8] sm:$0xff]
    %v695 = vsel %vm111, %v685, 0
    %697 = vmatpush.msra.mxu0 0.0
    %698 = vmatpush.msra.mxu0 0.0
    %699 = vmatpush.msra.mxu0 0.0
    %700 = vmatpush.msra.mxu0 0.0
    %701 = vmatpush.msra.mxu0 0.0
    %702 = vmatpush.msra.mxu0 0.0
    %703 = vmatpush.msra.mxu0 0.0
    %704 = vmatpush.msra.mxu0 0.0
    %705 = vmatpush.msra.mxu0 %v693
    %706 = vmatpush.msra.mxu0 %v692
    %707 = vmatpush.msra.mxu0 %v691
    %708 = vmatpush.msra.mxu0 %v690
    %709 = vmatpush.msra.mxu0 %v689
    %710 = vmatpush.msra.mxu0 %v688
    %711 = vmatpush.msra.mxu0 %v687
    %712 = vmatpush.msra.mxu0 %v686
    %713 = vmatmul.f32.gmra.mxu0 %v695
    %v714 = vpop.f32.mrf.mxu0
    %v715 = vadd.f32 0.0, %v714
    %716 = vdwg.mxu0
    %v717 = vadd.f32 %v661, %v715
    %s718 = sld [smem:[#allocation2 + $0x30]]
    %v719 = vstv %s718
    %v720 = vmul.f32 %v45, %v719
    %s721 = sld [smem:[#allocation2 + $0x31]]
    %v722 = vstv %s721
    %v723 = vmul.f32 %v45, %v722
    %725 = vrot.lane.b32.xlu0 %v723, 64
    %v726 = vpop.permute.xlu0 %725
    %v728 = vadd.f32 %v720, %v726
    %s729 = sld [smem:[#allocation2 + $0x32]]
    %v730 = vstv %s729
    %v731 = vmul.f32 %v46, %v730
    %v732 = vadd.f32 %v728, %v731
    %s733 = sld [smem:[#allocation2 + $0x33]]
    %v734 = vstv %s733
    %v735 = vmul.f32 %v46, %v734
    %737 = vrot.lane.b32.xlu0 %v735, 64
    %v738 = vpop.permute.xlu0 %737
    %v740 = vadd.f32 %v732, %v738
    %v741 = vmax.f32 %v740, 0.0
    %v742 = vld [vmem:[%s2 + $0x300] sm:$0xff]
    %v743 = vld [vmem:[%s2 + $0x308] sm:$0xff]
    %v744 = vld [vmem:[%s2 + $0x310] sm:$0xff]
    %v745 = vld [vmem:[%s2 + $0x318] sm:$0xff]
    %v746 = vld [vmem:[%s2 + $0x320] sm:$0xff]
    %v747 = vld [vmem:[%s2 + $0x328] sm:$0xff]
    %v748 = vld [vmem:[%s2 + $0x330] sm:$0xff]
    %v749 = vld [vmem:[%s2 + $0x338] sm:$0xff]
    %v751 = vsel %vm111, %v741, 0
    %753 = vmatpush.msra.mxu0 0.0
    %754 = vmatpush.msra.mxu0 0.0
    %755 = vmatpush.msra.mxu0 0.0
    %756 = vmatpush.msra.mxu0 0.0
    %757 = vmatpush.msra.mxu0 0.0
    %758 = vmatpush.msra.mxu0 0.0
    %759 = vmatpush.msra.mxu0 0.0
    %760 = vmatpush.msra.mxu0 0.0
    %761 = vmatpush.msra.mxu0 %v749
    %762 = vmatpush.msra.mxu0 %v748
    %763 = vmatpush.msra.mxu0 %v747
    %764 = vmatpush.msra.mxu0 %v746
    %765 = vmatpush.msra.mxu0 %v745
    %766 = vmatpush.msra.mxu0 %v744
    %767 = vmatpush.msra.mxu0 %v743
    %768 = vmatpush.msra.mxu0 %v742
    %769 = vmatmul.f32.gmra.mxu0 %v751
    %v770 = vpop.f32.mrf.mxu0
    %v771 = vadd.f32 0.0, %v770
    %772 = vdwg.mxu0
    %v773 = vadd.f32 %v717, %v771
    %s774 = sld [smem:[#allocation2 + $0x34]]
    %v775 = vstv %s774
    %v776 = vmul.f32 %v45, %v775
    %s777 = sld [smem:[#allocation2 + $0x35]]
    %v778 = vstv %s777
    %v779 = vmul.f32 %v45, %v778
    %781 = vrot.lane.b32.xlu0 %v779, 64
    %v782 = vpop.permute.xlu0 %781
    %v784 = vadd.f32 %v776, %v782
    %s785 = sld [smem:[#allocation2 + $0x36]]
    %v786 = vstv %s785
    %v787 = vmul.f32 %v46, %v786
    %v788 = vadd.f32 %v784, %v787
    %s789 = sld [smem:[#allocation2 + $0x37]]
    %v790 = vstv %s789
    %v791 = vmul.f32 %v46, %v790
    %793 = vrot.lane.b32.xlu0 %v791, 64
    %v794 = vpop.permute.xlu0 %793
    %v796 = vadd.f32 %v788, %v794
    %v797 = vmax.f32 %v796, 0.0
    %v798 = vld [vmem:[%s2 + $0x340] sm:$0xff]
    %v799 = vld [vmem:[%s2 + $0x348] sm:$0xff]
    %v800 = vld [vmem:[%s2 + $0x350] sm:$0xff]
    %v801 = vld [vmem:[%s2 + $0x358] sm:$0xff]
    %v802 = vld [vmem:[%s2 + $0x360] sm:$0xff]
    %v803 = vld [vmem:[%s2 + $0x368] sm:$0xff]
    %v804 = vld [vmem:[%s2 + $0x370] sm:$0xff]
    %v805 = vld [vmem:[%s2 + $0x378] sm:$0xff]
    %v807 = vsel %vm111, %v797, 0
    %809 = vmatpush.msra.mxu0 0.0
    %810 = vmatpush.msra.mxu0 0.0
    %811 = vmatpush.msra.mxu0 0.0
    %812 = vmatpush.msra.mxu0 0.0
    %813 = vmatpush.msra.mxu0 0.0
    %814 = vmatpush.msra.mxu0 0.0
    %815 = vmatpush.msra.mxu0 0.0
    %816 = vmatpush.msra.mxu0 0.0
    %817 = vmatpush.msra.mxu0 %v805
    %818 = vmatpush.msra.mxu0 %v804
    %819 = vmatpush.msra.mxu0 %v803
    %820 = vmatpush.msra.mxu0 %v802
    %821 = vmatpush.msra.mxu0 %v801
    %822 = vmatpush.msra.mxu0 %v800
    %823 = vmatpush.msra.mxu0 %v799
    %824 = vmatpush.msra.mxu0 %v798
    %825 = vmatmul.f32.gmra.mxu0 %v807
    %v826 = vpop.f32.mrf.mxu0
    %v827 = vadd.f32 0.0, %v826
    %828 = vdwg.mxu0
    %v829 = vadd.f32 %v773, %v827
    %s830 = sld [smem:[#allocation2 + $0x38]]
    %v831 = vstv %s830
    %v832 = vmul.f32 %v45, %v831
    %s833 = sld [smem:[#allocation2 + $0x39]]
    %v834 = vstv %s833
    %v835 = vmul.f32 %v45, %v834
    %837 = vrot.lane.b32.xlu0 %v835, 64
    %v838 = vpop.permute.xlu0 %837
    %v840 = vadd.f32 %v832, %v838
    %s841 = sld [smem:[#allocation2 + $0x3a]]
    %v842 = vstv %s841
    %v843 = vmul.f32 %v46, %v842
    %v844 = vadd.f32 %v840, %v843
    %s845 = sld [smem:[#allocation2 + $0x3b]]
    %v846 = vstv %s845
    %v847 = vmul.f32 %v46, %v846
    %849 = vrot.lane.b32.xlu0 %v847, 64
    %v850 = vpop.permute.xlu0 %849
    %v852 = vadd.f32 %v844, %v850
    %v853 = vmax.f32 %v852, 0.0
    %v854 = vld [vmem:[%s2 + $0x380] sm:$0xff]
    %v855 = vld [vmem:[%s2 + $0x388] sm:$0xff]
    %v856 = vld [vmem:[%s2 + $0x390] sm:$0xff]
    %v857 = vld [vmem:[%s2 + $0x398] sm:$0xff]
    %v858 = vld [vmem:[%s2 + $0x3a0] sm:$0xff]
    %v859 = vld [vmem:[%s2 + $0x3a8] sm:$0xff]
    %v860 = vld [vmem:[%s2 + $0x3b0] sm:$0xff]
    %v861 = vld [vmem:[%s2 + $0x3b8] sm:$0xff]
    %v863 = vsel %vm111, %v853, 0
    %865 = vmatpush.msra.mxu0 0.0
    %866 = vmatpush.msra.mxu0 0.0
    %867 = vmatpush.msra.mxu0 0.0
    %868 = vmatpush.msra.mxu0 0.0
    %869 = vmatpush.msra.mxu0 0.0
    %870 = vmatpush.msra.mxu0 0.0
    %871 = vmatpush.msra.mxu0 0.0
    %872 = vmatpush.msra.mxu0 0.0
    %873 = vmatpush.msra.mxu0 %v861
    %874 = vmatpush.msra.mxu0 %v860
    %875 = vmatpush.msra.mxu0 %v859
    %876 = vmatpush.msra.mxu0 %v858
    %877 = vmatpush.msra.mxu0 %v857
    %878 = vmatpush.msra.mxu0 %v856
    %879 = vmatpush.msra.mxu0 %v855
    %880 = vmatpush.msra.mxu0 %v854
    %881 = vmatmul.f32.gmra.mxu0 %v863
    %v882 = vpop.f32.mrf.mxu0
    %v883 = vadd.f32 0.0, %v882
    %884 = vdwg.mxu0
    %v885 = vadd.f32 %v829, %v883
    %s886 = sld [smem:[#allocation2 + $0x3c]]
    %v887 = vstv %s886
    %v888 = vmul.f32 %v45, %v887
    %s889 = sld [smem:[#allocation2 + $0x3d]]
    %v890 = vstv %s889
    %v891 = vmul.f32 %v45, %v890
    %893 = vrot.lane.b32.xlu0 %v891, 64
    %v894 = vpop.permute.xlu0 %893
    %v896 = vadd.f32 %v888, %v894
    %s897 = sld [smem:[#allocation2 + $0x3e]]
    %v898 = vstv %s897
    %v899 = vmul.f32 %v46, %v898
    %v900 = vadd.f32 %v896, %v899
    %s901 = sld [smem:[#allocation2 + $0x3f]]
    %v902 = vstv %s901
    %v903 = vmul.f32 %v46, %v902
    %905 = vrot.lane.b32.xlu0 %v903, 64
    %v906 = vpop.permute.xlu0 %905
    %v908 = vadd.f32 %v900, %v906
    %v909 = vmax.f32 %v908, 0.0
    %v910 = vld [vmem:[%s2 + $0x3c0] sm:$0xff]
    %v911 = vld [vmem:[%s2 + $0x3c8] sm:$0xff]
    %v912 = vld [vmem:[%s2 + $0x3d0] sm:$0xff]
    %v913 = vld [vmem:[%s2 + $0x3d8] sm:$0xff]
    %v914 = vld [vmem:[%s2 + $0x3e0] sm:$0xff]
    %v915 = vld [vmem:[%s2 + $0x3e8] sm:$0xff]
    %v916 = vld [vmem:[%s2 + $0x3f0] sm:$0xff]
    %v917 = vld [vmem:[%s2 + $0x3f8] sm:$0xff]
    %v919 = vsel %vm111, %v909, 0
    %921 = vmatpush.msra.mxu0 0.0
    %922 = vmatpush.msra.mxu0 0.0
    %923 = vmatpush.msra.mxu0 0.0
    %924 = vmatpush.msra.mxu0 0.0
    %925 = vmatpush.msra.mxu0 0.0
    %926 = vmatpush.msra.mxu0 0.0
    %927 = vmatpush.msra.mxu0 0.0
    %928 = vmatpush.msra.mxu0 0.0
    %929 = vmatpush.msra.mxu0 %v917
    %930 = vmatpush.msra.mxu0 %v916
    %931 = vmatpush.msra.mxu0 %v915
    %932 = vmatpush.msra.mxu0 %v914
    %933 = vmatpush.msra.mxu0 %v913
    %934 = vmatpush.msra.mxu0 %v912
    %935 = vmatpush.msra.mxu0 %v911
    %936 = vmatpush.msra.mxu0 %v910
    %937 = vmatmul.f32.gmra.mxu0 %v919
    %v938 = vpop.f32.mrf.mxu0
    %v939 = vadd.f32 0.0, %v938
    %940 = vdwg.mxu0
    %v941 = vadd.f32 %v885, %v939
    %s942 = sld [smem:[#allocation2 + $0x40]]
    %v943 = vstv %s942
    %v944 = vmul.f32 %v45, %v943
    %s945 = sld [smem:[#allocation2 + $0x41]]
    %v946 = vstv %s945
    %v947 = vmul.f32 %v45, %v946
    %949 = vrot.lane.b32.xlu0 %v947, 64
    %v950 = vpop.permute.xlu0 %949
    %v952 = vadd.f32 %v944, %v950
    %s953 = sld [smem:[#allocation2 + $0x42]]
    %v954 = vstv %s953
    %v955 = vmul.f32 %v46, %v954
    %v956 = vadd.f32 %v952, %v955
    %s957 = sld [smem:[#allocation2 + $0x43]]
    %v958 = vstv %s957
    %v959 = vmul.f32 %v46, %v958
    %961 = vrot.lane.b32.xlu0 %v959, 64
    %v962 = vpop.permute.xlu0 %961
    %v964 = vadd.f32 %v956, %v962
    %v965 = vmax.f32 %v964, 0.0
    %v966 = vld [vmem:[%s2 + $0x400] sm:$0xff]
    %v967 = vld [vmem:[%s2 + $0x408] sm:$0xff]
    %v968 = vld [vmem:[%s2 + $0x410] sm:$0xff]
    %v969 = vld [vmem:[%s2 + $0x418] sm:$0xff]
    %v970 = vld [vmem:[%s2 + $0x420] sm:$0xff]
    %v971 = vld [vmem:[%s2 + $0x428] sm:$0xff]
    %v972 = vld [vmem:[%s2 + $0x430] sm:$0xff]
    %v973 = vld [vmem:[%s2 + $0x438] sm:$0xff]
    %v975 = vsel %vm111, %v965, 0
    %977 = vmatpush.msra.mxu0 0.0
    %978 = vmatpush.msra.mxu0 0.0
    %979 = vmatpush.msra.mxu0 0.0
    %980 = vmatpush.msra.mxu0 0.0
    %981 = vmatpush.msra.mxu0 0.0
    %982 = vmatpush.msra.mxu0 0.0
    %983 = vmatpush.msra.mxu0 0.0
    %984 = vmatpush.msra.mxu0 0.0
    %985 = vmatpush.msra.mxu0 %v973
    %986 = vmatpush.msra.mxu0 %v972
    %987 = vmatpush.msra.mxu0 %v971
    %988 = vmatpush.msra.mxu0 %v970
    %989 = vmatpush.msra.mxu0 %v969
    %990 = vmatpush.msra.mxu0 %v968
    %991 = vmatpush.msra.mxu0 %v967
    %992 = vmatpush.msra.mxu0 %v966
    %993 = vmatmul.f32.gmra.mxu0 %v975
    %v994 = vpop.f32.mrf.mxu0
    %v995 = vadd.f32 0.0, %v994
    %996 = vdwg.mxu0
    %v997 = vadd.f32 %v941, %v995
    %s998 = sld [smem:[#allocation2 + $0x44]]
    %v999 = vstv %s998
    %v1000 = vmul.f32 %v45, %v999
    %s1001 = sld [smem:[#allocation2 + $0x45]]
    %v1002 = vstv %s1001
    %v1003 = vmul.f32 %v45, %v1002
    %1005 = vrot.lane.b32.xlu0 %v1003, 64
    %v1006 = vpop.permute.xlu0 %1005
    %v1008 = vadd.f32 %v1000, %v1006
    %s1009 = sld [smem:[#allocation2 + $0x46]]
    %v1010 = vstv %s1009
    %v1011 = vmul.f32 %v46, %v1010
    %v1012 = vadd.f32 %v1008, %v1011
    %s1013 = sld [smem:[#allocation2 + $0x47]]
    %v1014 = vstv %s1013
    %v1015 = vmul.f32 %v46, %v1014
    %1017 = vrot.lane.b32.xlu0 %v1015, 64
    %v1018 = vpop.permute.xlu0 %1017
    %v1020 = vadd.f32 %v1012, %v1018
    %v1021 = vmax.f32 %v1020, 0.0
    %v1022 = vld [vmem:[%s2 + $0x440] sm:$0xff]
    %v1023 = vld [vmem:[%s2 + $0x448] sm:$0xff]
    %v1024 = vld [vmem:[%s2 + $0x450] sm:$0xff]
    %v1025 = vld [vmem:[%s2 + $0x458] sm:$0xff]
    %v1026 = vld [vmem:[%s2 + $0x460] sm:$0xff]
    %v1027 = vld [vmem:[%s2 + $0x468] sm:$0xff]
    %v1028 = vld [vmem:[%s2 + $0x470] sm:$0xff]
    %v1029 = vld [vmem:[%s2 + $0x478] sm:$0xff]
    %v1031 = vsel %vm111, %v1021, 0
    %1033 = vmatpush.msra.mxu0 0.0
    %1034 = vmatpush.msra.mxu0 0.0
    %1035 = vmatpush.msra.mxu0 0.0
    %1036 = vmatpush.msra.mxu0 0.0
    %1037 = vmatpush.msra.mxu0 0.0
    %1038 = vmatpush.msra.mxu0 0.0
    %1039 = vmatpush.msra.mxu0 0.0
    %1040 = vmatpush.msra.mxu0 0.0
    %1041 = vmatpush.msra.mxu0 %v1029
    %1042 = vmatpush.msra.mxu0 %v1028
    %1043 = vmatpush.msra.mxu0 %v1027
    %1044 = vmatpush.msra.mxu0 %v1026
    %1045 = vmatpush.msra.mxu0 %v1025
    %1046 = vmatpush.msra.mxu0 %v1024
    %1047 = vmatpush.msra.mxu0 %v1023
    %1048 = vmatpush.msra.mxu0 %v1022
    %1049 = vmatmul.f32.gmra.mxu0 %v1031
    %v1050 = vpop.f32.mrf.mxu0
    %v1051 = vadd.f32 0.0, %v1050
    %1052 = vdwg.mxu0
    %v1053 = vadd.f32 %v997, %v1051
    %s1054 = sld [smem:[#allocation2 + $0x48]]
    %v1055 = vstv %s1054
    %v1056 = vmul.f32 %v45, %v1055
    %s1057 = sld [smem:[#allocation2 + $0x49]]
    %v1058 = vstv %s1057
    %v1059 = vmul.f32 %v45, %v1058
    %1061 = vrot.lane.b32.xlu0 %v1059, 64
    %v1062 = vpop.permute.xlu0 %1061
    %v1064 = vadd.f32 %v1056, %v1062
    %s1065 = sld [smem:[#allocation2 + $0x4a]]
    %v1066 = vstv %s1065
    %v1067 = vmul.f32 %v46, %v1066
    %v1068 = vadd.f32 %v1064, %v1067
    %s1069 = sld [smem:[#allocation2 + $0x4b]]
    %v1070 = vstv %s1069
    %v1071 = vmul.f32 %v46, %v1070
    %1073 = vrot.lane.b32.xlu0 %v1071, 64
    %v1074 = vpop.permute.xlu0 %1073
    %v1076 = vadd.f32 %v1068, %v1074
    %v1077 = vmax.f32 %v1076, 0.0
    %v1078 = vld [vmem:[%s2 + $0x480] sm:$0xff]
    %v1079 = vld [vmem:[%s2 + $0x488] sm:$0xff]
    %v1080 = vld [vmem:[%s2 + $0x490] sm:$0xff]
    %v1081 = vld [vmem:[%s2 + $0x498] sm:$0xff]
    %v1082 = vld [vmem:[%s2 + $0x4a0] sm:$0xff]
    %v1083 = vld [vmem:[%s2 + $0x4a8] sm:$0xff]
    %v1084 = vld [vmem:[%s2 + $0x4b0] sm:$0xff]
    %v1085 = vld [vmem:[%s2 + $0x4b8] sm:$0xff]
    %v1087 = vsel %vm111, %v1077, 0
    %1089 = vmatpush.msra.mxu0 0.0
    %1090 = vmatpush.msra.mxu0 0.0
    %1091 = vmatpush.msra.mxu0 0.0
    %1092 = vmatpush.msra.mxu0 0.0
    %1093 = vmatpush.msra.mxu0 0.0
    %1094 = vmatpush.msra.mxu0 0.0
    %1095 = vmatpush.msra.mxu0 0.0
    %1096 = vmatpush.msra.mxu0 0.0
    %1097 = vmatpush.msra.mxu0 %v1085
    %1098 = vmatpush.msra.mxu0 %v1084
    %1099 = vmatpush.msra.mxu0 %v1083
    %1100 = vmatpush.msra.mxu0 %v1082
    %1101 = vmatpush.msra.mxu0 %v1081
    %1102 = vmatpush.msra.mxu0 %v1080
    %1103 = vmatpush.msra.mxu0 %v1079
    %1104 = vmatpush.msra.mxu0 %v1078
    %1105 = vmatmul.f32.gmra.mxu0 %v1087
    %v1106 = vpop.f32.mrf.mxu0
    %v1107 = vadd.f32 0.0, %v1106
    %1108 = vdwg.mxu0
    %v1109 = vadd.f32 %v1053, %v1107
    %s1110 = sld [smem:[#allocation2 + $0x4c]]
    %v1111 = vstv %s1110
    %v1112 = vmul.f32 %v45, %v1111
    %s1113 = sld [smem:[#allocation2 + $0x4d]]
    %v1114 = vstv %s1113
    %v1115 = vmul.f32 %v45, %v1114
    %1117 = vrot.lane.b32.xlu0 %v1115, 64
    %v1118 = vpop.permute.xlu0 %1117
    %v1120 = vadd.f32 %v1112, %v1118
    %s1121 = sld [smem:[#allocation2 + $0x4e]]
    %v1122 = vstv %s1121
    %v1123 = vmul.f32 %v46, %v1122
    %v1124 = vadd.f32 %v1120, %v1123
    %s1125 = sld [smem:[#allocation2 + $0x4f]]
    %v1126 = vstv %s1125
    %v1127 = vmul.f32 %v46, %v1126
    %1129 = vrot.lane.b32.xlu0 %v1127, 64
    %v1130 = vpop.permute.xlu0 %1129
    %v1132 = vadd.f32 %v1124, %v1130
    %v1133 = vmax.f32 %v1132, 0.0
    %v1134 = vld [vmem:[%s2 + $0x4c0] sm:$0xff]
    %v1135 = vld [vmem:[%s2 + $0x4c8] sm:$0xff]
    %v1136 = vld [vmem:[%s2 + $0x4d0] sm:$0xff]
    %v1137 = vld [vmem:[%s2 + $0x4d8] sm:$0xff]
    %v1138 = vld [vmem:[%s2 + $0x4e0] sm:$0xff]
    %v1139 = vld [vmem:[%s2 + $0x4e8] sm:$0xff]
    %v1140 = vld [vmem:[%s2 + $0x4f0] sm:$0xff]
    %v1141 = vld [vmem:[%s2 + $0x4f8] sm:$0xff]
    %v1143 = vsel %vm111, %v1133, 0
    %1145 = vmatpush.msra.mxu0 0.0
    %1146 = vmatpush.msra.mxu0 0.0
    %1147 = vmatpush.msra.mxu0 0.0
    %1148 = vmatpush.msra.mxu0 0.0
    %1149 = vmatpush.msra.mxu0 0.0
    %1150 = vmatpush.msra.mxu0 0.0
    %1151 = vmatpush.msra.mxu0 0.0
    %1152 = vmatpush.msra.mxu0 0.0
    %1153 = vmatpush.msra.mxu0 %v1141
    %1154 = vmatpush.msra.mxu0 %v1140
    %1155 = vmatpush.msra.mxu0 %v1139
    %1156 = vmatpush.msra.mxu0 %v1138
    %1157 = vmatpush.msra.mxu0 %v1137
    %1158 = vmatpush.msra.mxu0 %v1136
    %1159 = vmatpush.msra.mxu0 %v1135
    %1160 = vmatpush.msra.mxu0 %v1134
    %1161 = vmatmul.f32.gmra.mxu0 %v1143
    %v1162 = vpop.f32.mrf.mxu0
    %v1163 = vadd.f32 0.0, %v1162
    %1164 = vdwg.mxu0
    %v1165 = vadd.f32 %v1109, %v1163
    %s1166 = sld [smem:[#allocation2 + $0x50]]
    %v1167 = vstv %s1166
    %v1168 = vmul.f32 %v45, %v1167
    %s1169 = sld [smem:[#allocation2 + $0x51]]
    %v1170 = vstv %s1169
    %v1171 = vmul.f32 %v45, %v1170
    %1173 = vrot.lane.b32.xlu0 %v1171, 64
    %v1174 = vpop.permute.xlu0 %1173
    %v1176 = vadd.f32 %v1168, %v1174
    %s1177 = sld [smem:[#allocation2 + $0x52]]
    %v1178 = vstv %s1177
    %v1179 = vmul.f32 %v46, %v1178
    %v1180 = vadd.f32 %v1176, %v1179
    %s1181 = sld [smem:[#allocation2 + $0x53]]
    %v1182 = vstv %s1181
    %v1183 = vmul.f32 %v46, %v1182
    %1185 = vrot.lane.b32.xlu0 %v1183, 64
    %v1186 = vpop.permute.xlu0 %1185
    %v1188 = vadd.f32 %v1180, %v1186
    %v1189 = vmax.f32 %v1188, 0.0
    %v1190 = vld [vmem:[%s2 + $0x500] sm:$0xff]
    %v1191 = vld [vmem:[%s2 + $0x508] sm:$0xff]
    %v1192 = vld [vmem:[%s2 + $0x510] sm:$0xff]
    %v1193 = vld [vmem:[%s2 + $0x518] sm:$0xff]
    %v1194 = vld [vmem:[%s2 + $0x520] sm:$0xff]
    %v1195 = vld [vmem:[%s2 + $0x528] sm:$0xff]
    %v1196 = vld [vmem:[%s2 + $0x530] sm:$0xff]
    %v1197 = vld [vmem:[%s2 + $0x538] sm:$0xff]
    %v1199 = vsel %vm111, %v1189, 0
    %1201 = vmatpush.msra.mxu0 0.0
    %1202 = vmatpush.msra.mxu0 0.0
    %1203 = vmatpush.msra.mxu0 0.0
    %1204 = vmatpush.msra.mxu0 0.0
    %1205 = vmatpush.msra.mxu0 0.0
    %1206 = vmatpush.msra.mxu0 0.0
    %1207 = vmatpush.msra.mxu0 0.0
    %1208 = vmatpush.msra.mxu0 0.0
    %1209 = vmatpush.msra.mxu0 %v1197
    %1210 = vmatpush.msra.mxu0 %v1196
    %1211 = vmatpush.msra.mxu0 %v1195
    %1212 = vmatpush.msra.mxu0 %v1194
    %1213 = vmatpush.msra.mxu0 %v1193
    %1214 = vmatpush.msra.mxu0 %v1192
    %1215 = vmatpush.msra.mxu0 %v1191
    %1216 = vmatpush.msra.mxu0 %v1190
    %1217 = vmatmul.f32.gmra.mxu0 %v1199
    %v1218 = vpop.f32.mrf.mxu0
    %v1219 = vadd.f32 0.0, %v1218
    %1220 = vdwg.mxu0
    %v1221 = vadd.f32 %v1165, %v1219
    %s1222 = sld [smem:[#allocation2 + $0x54]]
    %v1223 = vstv %s1222
    %v1224 = vmul.f32 %v45, %v1223
    %s1225 = sld [smem:[#allocation2 + $0x55]]
    %v1226 = vstv %s1225
    %v1227 = vmul.f32 %v45, %v1226
    %1229 = vrot.lane.b32.xlu0 %v1227, 64
    %v1230 = vpop.permute.xlu0 %1229
    %v1232 = vadd.f32 %v1224, %v1230
    %s1233 = sld [smem:[#allocation2 + $0x56]]
    %v1234 = vstv %s1233
    %v1235 = vmul.f32 %v46, %v1234
    %v1236 = vadd.f32 %v1232, %v1235
    %s1237 = sld [smem:[#allocation2 + $0x57]]
    %v1238 = vstv %s1237
    %v1239 = vmul.f32 %v46, %v1238
    %1241 = vrot.lane.b32.xlu0 %v1239, 64
    %v1242 = vpop.permute.xlu0 %1241
    %v1244 = vadd.f32 %v1236, %v1242
    %v1245 = vmax.f32 %v1244, 0.0
    %v1246 = vld [vmem:[%s2 + $0x540] sm:$0xff]
    %v1247 = vld [vmem:[%s2 + $0x548] sm:$0xff]
    %v1248 = vld [vmem:[%s2 + $0x550] sm:$0xff]
    %v1249 = vld [vmem:[%s2 + $0x558] sm:$0xff]
    %v1250 = vld [vmem:[%s2 + $0x560] sm:$0xff]
    %v1251 = vld [vmem:[%s2 + $0x568] sm:$0xff]
    %v1252 = vld [vmem:[%s2 + $0x570] sm:$0xff]
    %v1253 = vld [vmem:[%s2 + $0x578] sm:$0xff]
    %v1255 = vsel %vm111, %v1245, 0
    %1257 = vmatpush.msra.mxu0 0.0
    %1258 = vmatpush.msra.mxu0 0.0
    %1259 = vmatpush.msra.mxu0 0.0
    %1260 = vmatpush.msra.mxu0 0.0
    %1261 = vmatpush.msra.mxu0 0.0
    %1262 = vmatpush.msra.mxu0 0.0
    %1263 = vmatpush.msra.mxu0 0.0
    %1264 = vmatpush.msra.mxu0 0.0
    %1265 = vmatpush.msra.mxu0 %v1253
    %1266 = vmatpush.msra.mxu0 %v1252
    %1267 = vmatpush.msra.mxu0 %v1251
    %1268 = vmatpush.msra.mxu0 %v1250
    %1269 = vmatpush.msra.mxu0 %v1249
    %1270 = vmatpush.msra.mxu0 %v1248
    %1271 = vmatpush.msra.mxu0 %v1247
    %1272 = vmatpush.msra.mxu0 %v1246
    %1273 = vmatmul.f32.gmra.mxu0 %v1255
    %v1274 = vpop.f32.mrf.mxu0
    %v1275 = vadd.f32 0.0, %v1274
    %1276 = vdwg.mxu0
    %v1277 = vadd.f32 %v1221, %v1275
    %s1278 = sld [smem:[#allocation2 + $0x58]]
    %v1279 = vstv %s1278
    %v1280 = vmul.f32 %v45, %v1279
    %s1281 = sld [smem:[#allocation2 + $0x59]]
    %v1282 = vstv %s1281
    %v1283 = vmul.f32 %v45, %v1282
    %1285 = vrot.lane.b32.xlu0 %v1283, 64
    %v1286 = vpop.permute.xlu0 %1285
    %v1288 = vadd.f32 %v1280, %v1286
    %s1289 = sld [smem:[#allocation2 + $0x5a]]
    %v1290 = vstv %s1289
    %v1291 = vmul.f32 %v46, %v1290
    %v1292 = vadd.f32 %v1288, %v1291
    %s1293 = sld [smem:[#allocation2 + $0x5b]]
    %v1294 = vstv %s1293
    %v1295 = vmul.f32 %v46, %v1294
    %1297 = vrot.lane.b32.xlu0 %v1295, 64
    %v1298 = vpop.permute.xlu0 %1297
    %v1300 = vadd.f32 %v1292, %v1298
    %v1301 = vmax.f32 %v1300, 0.0
    %v1302 = vld [vmem:[%s2 + $0x580] sm:$0xff]
    %v1303 = vld [vmem:[%s2 + $0x588] sm:$0xff]
    %v1304 = vld [vmem:[%s2 + $0x590] sm:$0xff]
    %v1305 = vld [vmem:[%s2 + $0x598] sm:$0xff]
    %v1306 = vld [vmem:[%s2 + $0x5a0] sm:$0xff]
    %v1307 = vld [vmem:[%s2 + $0x5a8] sm:$0xff]
    %v1308 = vld [vmem:[%s2 + $0x5b0] sm:$0xff]
    %v1309 = vld [vmem:[%s2 + $0x5b8] sm:$0xff]
    %v1311 = vsel %vm111, %v1301, 0
    %1313 = vmatpush.msra.mxu0 0.0
    %1314 = vmatpush.msra.mxu0 0.0
    %1315 = vmatpush.msra.mxu0 0.0
    %1316 = vmatpush.msra.mxu0 0.0
    %1317 = vmatpush.msra.mxu0 0.0
    %1318 = vmatpush.msra.mxu0 0.0
    %1319 = vmatpush.msra.mxu0 0.0
    %1320 = vmatpush.msra.mxu0 0.0
    %1321 = vmatpush.msra.mxu0 %v1309
    %1322 = vmatpush.msra.mxu0 %v1308
    %1323 = vmatpush.msra.mxu0 %v1307
    %1324 = vmatpush.msra.mxu0 %v1306
    %1325 = vmatpush.msra.mxu0 %v1305
    %1326 = vmatpush.msra.mxu0 %v1304
    %1327 = vmatpush.msra.mxu0 %v1303
    %1328 = vmatpush.msra.mxu0 %v1302
    %1329 = vmatmul.f32.gmra.mxu0 %v1311
    %v1330 = vpop.f32.mrf.mxu0
    %v1331 = vadd.f32 0.0, %v1330
    %1332 = vdwg.mxu0
    %v1333 = vadd.f32 %v1277, %v1331
    %s1334 = sld [smem:[#allocation2 + $0x5c]]
    %v1335 = vstv %s1334
    %v1336 = vmul.f32 %v45, %v1335
    %s1337 = sld [smem:[#allocation2 + $0x5d]]
    %v1338 = vstv %s1337
    %v1339 = vmul.f32 %v45, %v1338
    %1341 = vrot.lane.b32.xlu0 %v1339, 64
    %v1342 = vpop.permute.xlu0 %1341
    %v1344 = vadd.f32 %v1336, %v1342
    %s1345 = sld [smem:[#allocation2 + $0x5e]]
    %v1346 = vstv %s1345
    %v1347 = vmul.f32 %v46, %v1346
    %v1348 = vadd.f32 %v1344, %v1347
    %s1349 = sld [smem:[#allocation2 + $0x5f]]
    %v1350 = vstv %s1349
    %v1351 = vmul.f32 %v46, %v1350
    %1353 = vrot.lane.b32.xlu0 %v1351, 64
    %v1354 = vpop.permute.xlu0 %1353
    %v1356 = vadd.f32 %v1348, %v1354
    %v1357 = vmax.f32 %v1356, 0.0
    %v1358 = vld [vmem:[%s2 + $0x5c0] sm:$0xff]
    %v1359 = vld [vmem:[%s2 + $0x5c8] sm:$0xff]
    %v1360 = vld [vmem:[%s2 + $0x5d0] sm:$0xff]
    %v1361 = vld [vmem:[%s2 + $0x5d8] sm:$0xff]
    %v1362 = vld [vmem:[%s2 + $0x5e0] sm:$0xff]
    %v1363 = vld [vmem:[%s2 + $0x5e8] sm:$0xff]
    %v1364 = vld [vmem:[%s2 + $0x5f0] sm:$0xff]
    %v1365 = vld [vmem:[%s2 + $0x5f8] sm:$0xff]
    %v1367 = vsel %vm111, %v1357, 0
    %1369 = vmatpush.msra.mxu0 0.0
    %1370 = vmatpush.msra.mxu0 0.0
    %1371 = vmatpush.msra.mxu0 0.0
    %1372 = vmatpush.msra.mxu0 0.0
    %1373 = vmatpush.msra.mxu0 0.0
    %1374 = vmatpush.msra.mxu0 0.0
    %1375 = vmatpush.msra.mxu0 0.0
    %1376 = vmatpush.msra.mxu0 0.0
    %1377 = vmatpush.msra.mxu0 %v1365
    %1378 = vmatpush.msra.mxu0 %v1364
    %1379 = vmatpush.msra.mxu0 %v1363
    %1380 = vmatpush.msra.mxu0 %v1362
    %1381 = vmatpush.msra.mxu0 %v1361
    %1382 = vmatpush.msra.mxu0 %v1360
    %1383 = vmatpush.msra.mxu0 %v1359
    %1384 = vmatpush.msra.mxu0 %v1358
    %1385 = vmatmul.f32.gmra.mxu0 %v1367
    %v1386 = vpop.f32.mrf.mxu0
    %v1387 = vadd.f32 0.0, %v1386
    %1388 = vdwg.mxu0
    %v1389 = vadd.f32 %v1333, %v1387
    %s1390 = sld [smem:[#allocation2 + $0x60]]
    %v1391 = vstv %s1390
    %v1392 = vmul.f32 %v45, %v1391
    %s1393 = sld [smem:[#allocation2 + $0x61]]
    %v1394 = vstv %s1393
    %v1395 = vmul.f32 %v45, %v1394
    %1397 = vrot.lane.b32.xlu0 %v1395, 64
    %v1398 = vpop.permute.xlu0 %1397
    %v1400 = vadd.f32 %v1392, %v1398
    %s1401 = sld [smem:[#allocation2 + $0x62]]
    %v1402 = vstv %s1401
    %v1403 = vmul.f32 %v46, %v1402
    %v1404 = vadd.f32 %v1400, %v1403
    %s1405 = sld [smem:[#allocation2 + $0x63]]
    %v1406 = vstv %s1405
    %v1407 = vmul.f32 %v46, %v1406
    %1409 = vrot.lane.b32.xlu0 %v1407, 64
    %v1410 = vpop.permute.xlu0 %1409
    %v1412 = vadd.f32 %v1404, %v1410
    %v1413 = vmax.f32 %v1412, 0.0
    %v1414 = vld [vmem:[%s2 + $0x600] sm:$0xff]
    %v1415 = vld [vmem:[%s2 + $0x608] sm:$0xff]
    %v1416 = vld [vmem:[%s2 + $0x610] sm:$0xff]
    %v1417 = vld [vmem:[%s2 + $0x618] sm:$0xff]
    %v1418 = vld [vmem:[%s2 + $0x620] sm:$0xff]
    %v1419 = vld [vmem:[%s2 + $0x628] sm:$0xff]
    %v1420 = vld [vmem:[%s2 + $0x630] sm:$0xff]
    %v1421 = vld [vmem:[%s2 + $0x638] sm:$0xff]
    %v1423 = vsel %vm111, %v1413, 0
    %1425 = vmatpush.msra.mxu0 0.0
    %1426 = vmatpush.msra.mxu0 0.0
    %1427 = vmatpush.msra.mxu0 0.0
    %1428 = vmatpush.msra.mxu0 0.0
    %1429 = vmatpush.msra.mxu0 0.0
    %1430 = vmatpush.msra.mxu0 0.0
    %1431 = vmatpush.msra.mxu0 0.0
    %1432 = vmatpush.msra.mxu0 0.0
    %1433 = vmatpush.msra.mxu0 %v1421
    %1434 = vmatpush.msra.mxu0 %v1420
    %1435 = vmatpush.msra.mxu0 %v1419
    %1436 = vmatpush.msra.mxu0 %v1418
    %1437 = vmatpush.msra.mxu0 %v1417
    %1438 = vmatpush.msra.mxu0 %v1416
    %1439 = vmatpush.msra.mxu0 %v1415
    %1440 = vmatpush.msra.mxu0 %v1414
    %1441 = vmatmul.f32.gmra.mxu0 %v1423
    %v1442 = vpop.f32.mrf.mxu0
    %v1443 = vadd.f32 0.0, %v1442
    %1444 = vdwg.mxu0
    %v1445 = vadd.f32 %v1389, %v1443
    %s1446 = sld [smem:[#allocation2 + $0x64]]
    %v1447 = vstv %s1446
    %v1448 = vmul.f32 %v45, %v1447
    %s1449 = sld [smem:[#allocation2 + $0x65]]
    %v1450 = vstv %s1449
    %v1451 = vmul.f32 %v45, %v1450
    %1453 = vrot.lane.b32.xlu0 %v1451, 64
    %v1454 = vpop.permute.xlu0 %1453
    %v1456 = vadd.f32 %v1448, %v1454
    %s1457 = sld [smem:[#allocation2 + $0x66]]
    %v1458 = vstv %s1457
    %v1459 = vmul.f32 %v46, %v1458
    %v1460 = vadd.f32 %v1456, %v1459
    %s1461 = sld [smem:[#allocation2 + $0x67]]
    %v1462 = vstv %s1461
    %v1463 = vmul.f32 %v46, %v1462
    %1465 = vrot.lane.b32.xlu0 %v1463, 64
    %v1466 = vpop.permute.xlu0 %1465
    %v1468 = vadd.f32 %v1460, %v1466
    %v1469 = vmax.f32 %v1468, 0.0
    %v1470 = vld [vmem:[%s2 + $0x640] sm:$0xff]
    %v1471 = vld [vmem:[%s2 + $0x648] sm:$0xff]
    %v1472 = vld [vmem:[%s2 + $0x650] sm:$0xff]
    %v1473 = vld [vmem:[%s2 + $0x658] sm:$0xff]
    %v1474 = vld [vmem:[%s2 + $0x660] sm:$0xff]
    %v1475 = vld [vmem:[%s2 + $0x668] sm:$0xff]
    %v1476 = vld [vmem:[%s2 + $0x670] sm:$0xff]
    %v1477 = vld [vmem:[%s2 + $0x678] sm:$0xff]
    %v1479 = vsel %vm111, %v1469, 0
    %1481 = vmatpush.msra.mxu0 0.0
    %1482 = vmatpush.msra.mxu0 0.0
    %1483 = vmatpush.msra.mxu0 0.0
    %1484 = vmatpush.msra.mxu0 0.0
    %1485 = vmatpush.msra.mxu0 0.0
    %1486 = vmatpush.msra.mxu0 0.0
    %1487 = vmatpush.msra.mxu0 0.0
    %1488 = vmatpush.msra.mxu0 0.0
    %1489 = vmatpush.msra.mxu0 %v1477
    %1490 = vmatpush.msra.mxu0 %v1476
    %1491 = vmatpush.msra.mxu0 %v1475
    %1492 = vmatpush.msra.mxu0 %v1474
    %1493 = vmatpush.msra.mxu0 %v1473
    %1494 = vmatpush.msra.mxu0 %v1472
    %1495 = vmatpush.msra.mxu0 %v1471
    %1496 = vmatpush.msra.mxu0 %v1470
    %1497 = vmatmul.f32.gmra.mxu0 %v1479
    %v1498 = vpop.f32.mrf.mxu0
    %v1499 = vadd.f32 0.0, %v1498
    %1500 = vdwg.mxu0
    %v1501 = vadd.f32 %v1445, %v1499
    %s1502 = sld [smem:[#allocation2 + $0x68]]
    %v1503 = vstv %s1502
    %v1504 = vmul.f32 %v45, %v1503
    %s1505 = sld [smem:[#allocation2 + $0x69]]
    %v1506 = vstv %s1505
    %v1507 = vmul.f32 %v45, %v1506
    %1509 = vrot.lane.b32.xlu0 %v1507, 64
    %v1510 = vpop.permute.xlu0 %1509
    %v1512 = vadd.f32 %v1504, %v1510
    %s1513 = sld [smem:[#allocation2 + $0x6a]]
    %v1514 = vstv %s1513
    %v1515 = vmul.f32 %v46, %v1514
    %v1516 = vadd.f32 %v1512, %v1515
    %s1517 = sld [smem:[#allocation2 + $0x6b]]
    %v1518 = vstv %s1517
    %v1519 = vmul.f32 %v46, %v1518
    %1521 = vrot.lane.b32.xlu0 %v1519, 64
    %v1522 = vpop.permute.xlu0 %1521
    %v1524 = vadd.f32 %v1516, %v1522
    %v1525 = vmax.f32 %v1524, 0.0
    %v1526 = vld [vmem:[%s2 + $0x680] sm:$0xff]
    %v1527 = vld [vmem:[%s2 + $0x688] sm:$0xff]
    %v1528 = vld [vmem:[%s2 + $0x690] sm:$0xff]
    %v1529 = vld [vmem:[%s2 + $0x698] sm:$0xff]
    %v1530 = vld [vmem:[%s2 + $0x6a0] sm:$0xff]
    %v1531 = vld [vmem:[%s2 + $0x6a8] sm:$0xff]
    %v1532 = vld [vmem:[%s2 + $0x6b0] sm:$0xff]
    %v1533 = vld [vmem:[%s2 + $0x6b8] sm:$0xff]
    %v1535 = vsel %vm111, %v1525, 0
    %1537 = vmatpush.msra.mxu0 0.0
    %1538 = vmatpush.msra.mxu0 0.0
    %1539 = vmatpush.msra.mxu0 0.0
    %1540 = vmatpush.msra.mxu0 0.0
    %1541 = vmatpush.msra.mxu0 0.0
    %1542 = vmatpush.msra.mxu0 0.0
    %1543 = vmatpush.msra.mxu0 0.0
    %1544 = vmatpush.msra.mxu0 0.0
    %1545 = vmatpush.msra.mxu0 %v1533
    %1546 = vmatpush.msra.mxu0 %v1532
    %1547 = vmatpush.msra.mxu0 %v1531
    %1548 = vmatpush.msra.mxu0 %v1530
    %1549 = vmatpush.msra.mxu0 %v1529
    %1550 = vmatpush.msra.mxu0 %v1528
    %1551 = vmatpush.msra.mxu0 %v1527
    %1552 = vmatpush.msra.mxu0 %v1526
    %1553 = vmatmul.f32.gmra.mxu0 %v1535
    %v1554 = vpop.f32.mrf.mxu0
    %v1555 = vadd.f32 0.0, %v1554
    %1556 = vdwg.mxu0
    %v1557 = vadd.f32 %v1501, %v1555
    %s1558 = sld [smem:[#allocation2 + $0x6c]]
    %v1559 = vstv %s1558
    %v1560 = vmul.f32 %v45, %v1559
    %s1561 = sld [smem:[#allocation2 + $0x6d]]
    %v1562 = vstv %s1561
    %v1563 = vmul.f32 %v45, %v1562
    %1565 = vrot.lane.b32.xlu0 %v1563, 64
    %v1566 = vpop.permute.xlu0 %1565
    %v1568 = vadd.f32 %v1560, %v1566
    %s1569 = sld [smem:[#allocation2 + $0x6e]]
    %v1570 = vstv %s1569
    %v1571 = vmul.f32 %v46, %v1570
    %v1572 = vadd.f32 %v1568, %v1571
    %s1573 = sld [smem:[#allocation2 + $0x6f]]
    %v1574 = vstv %s1573
    %v1575 = vmul.f32 %v46, %v1574
    %1577 = vrot.lane.b32.xlu0 %v1575, 64
    %v1578 = vpop.permute.xlu0 %1577
    %v1580 = vadd.f32 %v1572, %v1578
    %v1581 = vmax.f32 %v1580, 0.0
    %v1582 = vld [vmem:[%s2 + $0x6c0] sm:$0xff]
    %v1583 = vld [vmem:[%s2 + $0x6c8] sm:$0xff]
    %v1584 = vld [vmem:[%s2 + $0x6d0] sm:$0xff]
    %v1585 = vld [vmem:[%s2 + $0x6d8] sm:$0xff]
    %v1586 = vld [vmem:[%s2 + $0x6e0] sm:$0xff]
    %v1587 = vld [vmem:[%s2 + $0x6e8] sm:$0xff]
    %v1588 = vld [vmem:[%s2 + $0x6f0] sm:$0xff]
    %v1589 = vld [vmem:[%s2 + $0x6f8] sm:$0xff]
    %v1591 = vsel %vm111, %v1581, 0
    %1593 = vmatpush.msra.mxu0 0.0
    %1594 = vmatpush.msra.mxu0 0.0
    %1595 = vmatpush.msra.mxu0 0.0
    %1596 = vmatpush.msra.mxu0 0.0
    %1597 = vmatpush.msra.mxu0 0.0
    %1598 = vmatpush.msra.mxu0 0.0
    %1599 = vmatpush.msra.mxu0 0.0
    %1600 = vmatpush.msra.mxu0 0.0
    %1601 = vmatpush.msra.mxu0 %v1589
    %1602 = vmatpush.msra.mxu0 %v1588
    %1603 = vmatpush.msra.mxu0 %v1587
    %1604 = vmatpush.msra.mxu0 %v1586
    %1605 = vmatpush.msra.mxu0 %v1585
    %1606 = vmatpush.msra.mxu0 %v1584
    %1607 = vmatpush.msra.mxu0 %v1583
    %1608 = vmatpush.msra.mxu0 %v1582
    %1609 = vmatmul.f32.gmra.mxu0 %v1591
    %v1610 = vpop.f32.mrf.mxu0
    %v1611 = vadd.f32 0.0, %v1610
    %1612 = vdwg.mxu0
    %v1613 = vadd.f32 %v1557, %v1611
    %s1614 = sld [smem:[#allocation2 + $0x70]]
    %v1615 = vstv %s1614
    %v1616 = vmul.f32 %v45, %v1615
    %s1617 = sld [smem:[#allocation2 + $0x71]]
    %v1618 = vstv %s1617
    %v1619 = vmul.f32 %v45, %v1618
    %1621 = vrot.lane.b32.xlu0 %v1619, 64
    %v1622 = vpop.permute.xlu0 %1621
    %v1624 = vadd.f32 %v1616, %v1622
    %s1625 = sld [smem:[#allocation2 + $0x72]]
    %v1626 = vstv %s1625
    %v1627 = vmul.f32 %v46, %v1626
    %v1628 = vadd.f32 %v1624, %v1627
    %s1629 = sld [smem:[#allocation2 + $0x73]]
    %v1630 = vstv %s1629
    %v1631 = vmul.f32 %v46, %v1630
    %1633 = vrot.lane.b32.xlu0 %v1631, 64
    %v1634 = vpop.permute.xlu0 %1633
    %v1636 = vadd.f32 %v1628, %v1634
    %v1637 = vmax.f32 %v1636, 0.0
    %v1638 = vld [vmem:[%s2 + $0x700] sm:$0xff]
    %v1639 = vld [vmem:[%s2 + $0x708] sm:$0xff]
    %v1640 = vld [vmem:[%s2 + $0x710] sm:$0xff]
    %v1641 = vld [vmem:[%s2 + $0x718] sm:$0xff]
    %v1642 = vld [vmem:[%s2 + $0x720] sm:$0xff]
    %v1643 = vld [vmem:[%s2 + $0x728] sm:$0xff]
    %v1644 = vld [vmem:[%s2 + $0x730] sm:$0xff]
    %v1645 = vld [vmem:[%s2 + $0x738] sm:$0xff]
    %v1647 = vsel %vm111, %v1637, 0
    %1649 = vmatpush.msra.mxu0 0.0
    %1650 = vmatpush.msra.mxu0 0.0
    %1651 = vmatpush.msra.mxu0 0.0
    %1652 = vmatpush.msra.mxu0 0.0
    %1653 = vmatpush.msra.mxu0 0.0
    %1654 = vmatpush.msra.mxu0 0.0
    %1655 = vmatpush.msra.mxu0 0.0
    %1656 = vmatpush.msra.mxu0 0.0
    %1657 = vmatpush.msra.mxu0 %v1645
    %1658 = vmatpush.msra.mxu0 %v1644
    %1659 = vmatpush.msra.mxu0 %v1643
    %1660 = vmatpush.msra.mxu0 %v1642
    %1661 = vmatpush.msra.mxu0 %v1641
    %1662 = vmatpush.msra.mxu0 %v1640
    %1663 = vmatpush.msra.mxu0 %v1639
    %1664 = vmatpush.msra.mxu0 %v1638
    %1665 = vmatmul.f32.gmra.mxu0 %v1647
    %v1666 = vpop.f32.mrf.mxu0
    %v1667 = vadd.f32 0.0, %v1666
    %1668 = vdwg.mxu0
    %v1669 = vadd.f32 %v1613, %v1667
    %s1670 = sld [smem:[#allocation2 + $0x74]]
    %v1671 = vstv %s1670
    %v1672 = vmul.f32 %v45, %v1671
    %s1673 = sld [smem:[#allocation2 + $0x75]]
    %v1674 = vstv %s1673
    %v1675 = vmul.f32 %v45, %v1674
    %1677 = vrot.lane.b32.xlu0 %v1675, 64
    %v1678 = vpop.permute.xlu0 %1677
    %v1680 = vadd.f32 %v1672, %v1678
    %s1681 = sld [smem:[#allocation2 + $0x76]]
    %v1682 = vstv %s1681
    %v1683 = vmul.f32 %v46, %v1682
    %v1684 = vadd.f32 %v1680, %v1683
    %s1685 = sld [smem:[#allocation2 + $0x77]]
    %v1686 = vstv %s1685
    %v1687 = vmul.f32 %v46, %v1686
    %1689 = vrot.lane.b32.xlu0 %v1687, 64
    %v1690 = vpop.permute.xlu0 %1689
    %v1692 = vadd.f32 %v1684, %v1690
    %v1693 = vmax.f32 %v1692, 0.0
    %v1694 = vld [vmem:[%s2 + $0x740] sm:$0xff]
    %v1695 = vld [vmem:[%s2 + $0x748] sm:$0xff]
    %v1696 = vld [vmem:[%s2 + $0x750] sm:$0xff]
    %v1697 = vld [vmem:[%s2 + $0x758] sm:$0xff]
    %v1698 = vld [vmem:[%s2 + $0x760] sm:$0xff]
    %v1699 = vld [vmem:[%s2 + $0x768] sm:$0xff]
    %v1700 = vld [vmem:[%s2 + $0x770] sm:$0xff]
    %v1701 = vld [vmem:[%s2 + $0x778] sm:$0xff]
    %v1703 = vsel %vm111, %v1693, 0
    %1705 = vmatpush.msra.mxu0 0.0
    %1706 = vmatpush.msra.mxu0 0.0
    %1707 = vmatpush.msra.mxu0 0.0
    %1708 = vmatpush.msra.mxu0 0.0
    %1709 = vmatpush.msra.mxu0 0.0
    %1710 = vmatpush.msra.mxu0 0.0
    %1711 = vmatpush.msra.mxu0 0.0
    %1712 = vmatpush.msra.mxu0 0.0
    %1713 = vmatpush.msra.mxu0 %v1701
    %1714 = vmatpush.msra.mxu0 %v1700
    %1715 = vmatpush.msra.mxu0 %v1699
    %1716 = vmatpush.msra.mxu0 %v1698
    %1717 = vmatpush.msra.mxu0 %v1697
    %1718 = vmatpush.msra.mxu0 %v1696
    %1719 = vmatpush.msra.mxu0 %v1695
    %1720 = vmatpush.msra.mxu0 %v1694
    %1721 = vmatmul.f32.gmra.mxu0 %v1703
    %v1722 = vpop.f32.mrf.mxu0
    %v1723 = vadd.f32 0.0, %v1722
    %1724 = vdwg.mxu0
    %v1725 = vadd.f32 %v1669, %v1723
    %s1726 = sld [smem:[#allocation2 + $0x78]]
    %v1727 = vstv %s1726
    %v1728 = vmul.f32 %v45, %v1727
    %s1729 = sld [smem:[#allocation2 + $0x79]]
    %v1730 = vstv %s1729
    %v1731 = vmul.f32 %v45, %v1730
    %1733 = vrot.lane.b32.xlu0 %v1731, 64
    %v1734 = vpop.permute.xlu0 %1733
    %v1736 = vadd.f32 %v1728, %v1734
    %s1737 = sld [smem:[#allocation2 + $0x7a]]
    %v1738 = vstv %s1737
    %v1739 = vmul.f32 %v46, %v1738
    %v1740 = vadd.f32 %v1736, %v1739
    %s1741 = sld [smem:[#allocation2 + $0x7b]]
    %v1742 = vstv %s1741
    %v1743 = vmul.f32 %v46, %v1742
    %1745 = vrot.lane.b32.xlu0 %v1743, 64
    %v1746 = vpop.permute.xlu0 %1745
    %v1748 = vadd.f32 %v1740, %v1746
    %v1749 = vmax.f32 %v1748, 0.0
    %v1750 = vld [vmem:[%s2 + $0x780] sm:$0xff]
    %v1751 = vld [vmem:[%s2 + $0x788] sm:$0xff]
    %v1752 = vld [vmem:[%s2 + $0x790] sm:$0xff]
    %v1753 = vld [vmem:[%s2 + $0x798] sm:$0xff]
    %v1754 = vld [vmem:[%s2 + $0x7a0] sm:$0xff]
    %v1755 = vld [vmem:[%s2 + $0x7a8] sm:$0xff]
    %v1756 = vld [vmem:[%s2 + $0x7b0] sm:$0xff]
    %v1757 = vld [vmem:[%s2 + $0x7b8] sm:$0xff]
    %v1759 = vsel %vm111, %v1749, 0
    %1761 = vmatpush.msra.mxu0 0.0
    %1762 = vmatpush.msra.mxu0 0.0
    %1763 = vmatpush.msra.mxu0 0.0
    %1764 = vmatpush.msra.mxu0 0.0
    %1765 = vmatpush.msra.mxu0 0.0
    %1766 = vmatpush.msra.mxu0 0.0
    %1767 = vmatpush.msra.mxu0 0.0
    %1768 = vmatpush.msra.mxu0 0.0
    %1769 = vmatpush.msra.mxu0 %v1757
    %1770 = vmatpush.msra.mxu0 %v1756
    %1771 = vmatpush.msra.mxu0 %v1755
    %1772 = vmatpush.msra.mxu0 %v1754
    %1773 = vmatpush.msra.mxu0 %v1753
    %1774 = vmatpush.msra.mxu0 %v1752
    %1775 = vmatpush.msra.mxu0 %v1751
    %1776 = vmatpush.msra.mxu0 %v1750
    %1777 = vmatmul.f32.gmra.mxu0 %v1759
    %v1778 = vpop.f32.mrf.mxu0
    %v1779 = vadd.f32 0.0, %v1778
    %1780 = vdwg.mxu0
    %v1781 = vadd.f32 %v1725, %v1779
    %s1782 = sld [smem:[#allocation2 + $0x7c]]
    %v1783 = vstv %s1782
    %v1784 = vmul.f32 %v45, %v1783
    %s1785 = sld [smem:[#allocation2 + $0x7d]]
    %v1786 = vstv %s1785
    %v1787 = vmul.f32 %v45, %v1786
    %1789 = vrot.lane.b32.xlu0 %v1787, 64
    %v1790 = vpop.permute.xlu0 %1789
    %v1792 = vadd.f32 %v1784, %v1790
    %s1793 = sld [smem:[#allocation2 + $0x7e]]
    %v1794 = vstv %s1793
    %v1795 = vmul.f32 %v46, %v1794
    %v1796 = vadd.f32 %v1792, %v1795
    %s1797 = sld [smem:[#allocation2 + $0x7f]]
    %v1798 = vstv %s1797
    %v1799 = vmul.f32 %v46, %v1798
    %1801 = vrot.lane.b32.xlu0 %v1799, 64
    %v1802 = vpop.permute.xlu0 %1801
    %v1804 = vadd.f32 %v1796, %v1802
    %v1805 = vmax.f32 %v1804, 0.0
    %v1806 = vld [vmem:[%s2 + $0x7c0] sm:$0xff]
    %v1807 = vld [vmem:[%s2 + $0x7c8] sm:$0xff]
    %v1808 = vld [vmem:[%s2 + $0x7d0] sm:$0xff]
    %v1809 = vld [vmem:[%s2 + $0x7d8] sm:$0xff]
    %v1810 = vld [vmem:[%s2 + $0x7e0] sm:$0xff]
    %v1811 = vld [vmem:[%s2 + $0x7e8] sm:$0xff]
    %v1812 = vld [vmem:[%s2 + $0x7f0] sm:$0xff]
    %v1813 = vld [vmem:[%s2 + $0x7f8] sm:$0xff]
    %v1815 = vsel %vm111, %v1805, 0
    %1817 = vmatpush.msra.mxu0 0.0
    %1818 = vmatpush.msra.mxu0 0.0
    %1819 = vmatpush.msra.mxu0 0.0
    %1820 = vmatpush.msra.mxu0 0.0
    %1821 = vmatpush.msra.mxu0 0.0
    %1822 = vmatpush.msra.mxu0 0.0
    %1823 = vmatpush.msra.mxu0 0.0
    %1824 = vmatpush.msra.mxu0 0.0
    %1825 = vmatpush.msra.mxu0 %v1813
    %1826 = vmatpush.msra.mxu0 %v1812
    %1827 = vmatpush.msra.mxu0 %v1811
    %1828 = vmatpush.msra.mxu0 %v1810
    %1829 = vmatpush.msra.mxu0 %v1809
    %1830 = vmatpush.msra.mxu0 %v1808
    %1831 = vmatpush.msra.mxu0 %v1807
    %1832 = vmatpush.msra.mxu0 %v1806
    %1833 = vmatmul.f32.gmra.mxu0 %v1815
    %v1834 = vpop.f32.mrf.mxu0
    %v1835 = vadd.f32 0.0, %v1834
    %1836 = vdwg.mxu0
    %v1837 = vadd.f32 %v1781, %v1835
    %v1838 = vld [vmem:[%s3] sm:$0x1]
    %v1840 = vperm.slane %v1838, 0
    %v1842 = vadd.f32 %v1837, %v1840
    %v1843 = vmax.f32 %v1842, 0.0
    %v1844 = vld [vmem:[%s4] sm:$0xff]
    %v1845 = vld [vmem:[%s4 + $0x8] sm:$0xff]
    %v1846 = vld [vmem:[%s4 + $0x10] sm:$0xff]
    %v1847 = vld [vmem:[%s4 + $0x18] sm:$0xff]
    %v1848 = vld [vmem:[%s4 + $0x20] sm:$0xff]
    %v1849 = vld [vmem:[%s4 + $0x28] sm:$0xff]
    %v1850 = vld [vmem:[%s4 + $0x30] sm:$0xff]
    %v1851 = vld [vmem:[%s4 + $0x38] sm:$0xff]
    %v1852 = vld [vmem:[%s4 + $0x40] sm:$0xff]
    %v1853 = vld [vmem:[%s4 + $0x48] sm:$0xff]
    %v1854 = vld [vmem:[%s4 + $0x50] sm:$0xff]
    %v1855 = vld [vmem:[%s4 + $0x58] sm:$0xff]
    %v1856 = vld [vmem:[%s5] sm:$0x7]
    %v1858 = vperm.slane %v1856, 0
    %v1859 = vperm.slane %v1856, 1
    %v1860 = vperm.slane %v1856, 2
    %vm1864 = vcmask 261120
    %v1866 = vsel %vm1864, %v1843, 0
    %1868 = vmatpush.msra.mxu0 0.0
    %1869 = vmatpush.msra.mxu0 0.0
    %1870 = vmatpush.msra.mxu0 0.0
    %1871 = vmatpush.msra.mxu0 0.0
    %1872 = vmatpush.msra.mxu0 0.0
    %1873 = vmatpush.msra.mxu0 0.0
    %1874 = vmatpush.msra.mxu0 0.0
    %1875 = vmatpush.msra.mxu0 0.0
    %1876 = vmatpush.msra.mxu0 0.0
    %1877 = vmatpush.msra.mxu0 0.0
    %1878 = vmatpush.msra.mxu0 0.0
    %1879 = vmatpush.msra.mxu0 0.0
    %1880 = vmatpush.msra.mxu0 %v1853
    %1881 = vmatpush.msra.mxu0 %v1850
    %1882 = vmatpush.msra.mxu0 %v1847
    %1883 = vmatpush.msra.mxu0 %v1844
    %1884 = vmatmul.f32.gmra.mxu0 %v1866
    %v1885 = vpop.f32.mrf.mxu0
    %v1886 = vadd.f32 %v1858, %v1885
    %1887 = vdwg.mxu0
    %1888 = vmatpush.msra.mxu0 0.0
    %1889 = vmatpush.msra.mxu0 0.0
    %1890 = vmatpush.msra.mxu0 0.0
    %1891 = vmatpush.msra.mxu0 0.0
    %1892 = vmatpush.msra.mxu0 0.0
    %1893 = vmatpush.msra.mxu0 0.0
    %1894 = vmatpush.msra.mxu0 0.0
    %1895 = vmatpush.msra.mxu0 0.0
    %1896 = vmatpush.msra.mxu0 0.0
    %1897 = vmatpush.msra.mxu0 0.0
    %1898 = vmatpush.msra.mxu0 0.0
    %1899 = vmatpush.msra.mxu0 0.0
    %1900 = vmatpush.msra.mxu0 %v1854
    %1901 = vmatpush.msra.mxu0 %v1851
    %1902 = vmatpush.msra.mxu0 %v1848
    %1903 = vmatpush.msra.mxu0 %v1845
    %1904 = vmatmul.f32.gmra.mxu0 %v1866
    %v1905 = vpop.f32.mrf.mxu0
    %v1906 = vadd.f32 %v1859, %v1905
    %1907 = vdwg.mxu0
    %1908 = vmatpush.msra.mxu0 0.0
    %1909 = vmatpush.msra.mxu0 0.0
    %1910 = vmatpush.msra.mxu0 0.0
    %1911 = vmatpush.msra.mxu0 0.0
    %1912 = vmatpush.msra.mxu0 0.0
    %1913 = vmatpush.msra.mxu0 0.0
    %1914 = vmatpush.msra.mxu0 0.0
    %1915 = vmatpush.msra.mxu0 0.0
    %1916 = vmatpush.msra.mxu0 0.0
    %1917 = vmatpush.msra.mxu0 0.0
    %1918 = vmatpush.msra.mxu0 0.0
    %1919 = vmatpush.msra.mxu0 0.0
    %1920 = vmatpush.msra.mxu0 %v1855
    %1921 = vmatpush.msra.mxu0 %v1852
    %1922 = vmatpush.msra.mxu0 %v1849
    %1923 = vmatpush.msra.mxu0 %v1846
    %1924 = vmatmul.f32.gmra.mxu0 %v1866
    %v1925 = vpop.f32.mrf.mxu0
    %v1926 = vadd.f32 %v1860, %v1925
    %1927 = vdwg.mxu0
    %v1928 = vxor.u32 %v1886, 2147483648
    %v1929 = vmul.f32 %v1928, 1.442695
    %v1930 = vpow.pop %v1929
    %v1931 = vadd.f32 %v1930, 1.0
    %v1932 = vrcp.pop %v1931
    %v1933 = vmul.f32 %v1931, %v1932
    %v1934 = vsub.f32 1.0, %v1933
    %v1935 = vmul.f32 %v1932, %v1934
    %v1936 = vadd.f32 %v1932, %v1935
    %vm1937 = vweird.f32 %v1931
    %vm1938 = vweird.f32 %v1932
    %vm1939 = vmor %vm1937, %vm1938
    %v1940 = vsel %vm1939, %v1932, %v1936
    %v1941 = vand.u32 2147483647, %v1931
    %vm1942 = vcmp.eq.f32.partialorder %v1941, 8.507059e+37
    %v1943 = vand.u32 %v1931, 2147483648
    %v1944 = vor.u32 1.1754944e-38, %v1943
    %v1945 = vsel %vm1942, %v1944, %v1940
    %v1946 = vmul.f32 1.0, %v1945
    %v1947 = vxor.u32 %v1906, 2147483648
    %v1948 = vmul.f32 %v1947, 1.442695
    %v1949 = vpow.pop %v1948
    %v1950 = vadd.f32 %v1949, 1.0
    %v1951 = vrcp.pop %v1950
    %v1952 = vmul.f32 %v1950, %v1951
    %v1953 = vsub.f32 1.0, %v1952
    %v1954 = vmul.f32 %v1951, %v1953
    %v1955 = vadd.f32 %v1951, %v1954
    %vm1956 = vweird.f32 %v1950
    %vm1957 = vweird.f32 %v1951
    %vm1958 = vmor %vm1956, %vm1957
    %v1959 = vsel %vm1958, %v1951, %v1955
    %v1960 = vand.u32 2147483647, %v1950
    %vm1961 = vcmp.eq.f32.partialorder %v1960, 8.507059e+37
    %v1962 = vand.u32 %v1950, 2147483648
    %v1963 = vor.u32 1.1754944e-38, %v1962
    %v1964 = vsel %vm1961, %v1963, %v1959
    %v1965 = vmul.f32 1.0, %v1964
    %v1966 = vld [vmem:[%s6] sm:$0x1]
    %v1968 = vperm.slane %v1966, 0
    %v1970 = vmul.f32 %v1946, %v1968
    %v1971 = vadd.f32 %v1926, %v1970
    %v1972 = vtanh.pop %v1971
    %v1973 = vsub.f32 1.0, %v1965
    %v1974 = vmul.f32 %v1973, %v1972
    %v1975 = vld [vmem:[%s7] sm:$0xff]
    %v1976 = vld [vmem:[%s7 + $0x8] sm:$0xff]
    %v1977 = vld [vmem:[%s7 + $0x10] sm:$0xff]
    %v1978 = vld [vmem:[%s7 + $0x18] sm:$0xff]
    %v1979 = vld [vmem:[%s7 + $0x20] sm:$0xff]
    %v1980 = vld [vmem:[%s7 + $0x28] sm:$0xff]
    %v1981 = vld [vmem:[%s7 + $0x30] sm:$0xff]
    %v1982 = vld [vmem:[%s7 + $0x38] sm:$0xff]
    %v1983 = vld [vmem:[%s7 + $0x40] sm:$0xff]
    %v1984 = vld [vmem:[%s7 + $0x48] sm:$0xff]
    %v1985 = vld [vmem:[%s7 + $0x50] sm:$0xff]
    %v1986 = vld [vmem:[%s7 + $0x58] sm:$0xff]
    %v1987 = vld [vmem:[%s7 + $0x60] sm:$0xff]
    %v1988 = vld [vmem:[%s7 + $0x68] sm:$0xff]
    %v1989 = vld [vmem:[%s7 + $0x70] sm:$0xff]
    %v1990 = vld [vmem:[%s7 + $0x78] sm:$0xff]
    %v1991 = vld [vmem:[%s8] sm:$0x1]
    %v1993 = vperm.slane %v1991, 0
    %1995 = vmatpush.msra.mxu0 %v1990
    %1996 = vmatpush.msra.mxu0 %v1989
    %1997 = vmatpush.msra.mxu0 %v1988
    %1998 = vmatpush.msra.mxu0 %v1987
    %1999 = vmatpush.msra.mxu0 %v1986
    %2000 = vmatpush.msra.mxu0 %v1985
    %2001 = vmatpush.msra.mxu0 %v1984
    %2002 = vmatpush.msra.mxu0 %v1983
    %2003 = vmatpush.msra.mxu0 %v1982
    %2004 = vmatpush.msra.mxu0 %v1981
    %2005 = vmatpush.msra.mxu0 %v1980
    %2006 = vmatpush.msra.mxu0 %v1979
    %2007 = vmatpush.msra.mxu0 %v1978
    %2008 = vmatpush.msra.mxu0 %v1977
    %2009 = vmatpush.msra.mxu0 %v1976
    %2010 = vmatpush.msra.mxu0 %v1975
    %2011 = vmatmul.f32.gmra.mxu0 %v1974
    %v2012 = vpop.f32.mrf.mxu0
    %v2013 = vadd.f32 %v1993, %v2012
    %2014 = vdwg.mxu0
    %v2015 = vxor.u32 %v2013, 2147483648
    %v2016 = vmul.f32 %v2015, 1.442695
    %v2017 = vpow.pop %v2016
    %v2018 = vadd.f32 %v2017, 1.0
    %v2019 = vrcp.pop %v2018
    %v2020 = vmul.f32 %v2018, %v2019
    %v2021 = vsub.f32 1.0, %v2020
    %v2022 = vmul.f32 %v2019, %v2021
    %v2023 = vadd.f32 %v2019, %v2022
    %vm2024 = vweird.f32 %v2018
    %vm2025 = vweird.f32 %v2019
    %vm2026 = vmor %vm2024, %vm2025
    %v2027 = vsel %vm2026, %v2019, %v2023
    %v2028 = vand.u32 2147483647, %v2018
    %vm2029 = vcmp.eq.f32.partialorder %v2028, 8.507059e+37
    %v2030 = vand.u32 %v2018, 2147483648
    %v2031 = vor.u32 1.1754944e-38, %v2030
    %v2032 = vsel %vm2029, %v2031, %v2027
    %v2033 = vmul.f32 1.0, %v2032
    %2034 = vst [vmem:[%s9] sm:$0x3] %v1974
    %vm2035 = vcmask 9216
    %2036 = vst.msk [vmem:[%s9 + $0x2] sm:$0x3] %vm2035, %v2033
    // Predicated region
    $region42: #{actor_critic_act.1} parent=1 // pred_check
      _
    $region43: #{actor_critic_act.1} parent=1 // pred_check_branch
      %2038 = sbr.rel (0) target = $region45
    $region44: #{actor_critic_act.1} parent=1 // pred_region
      _
    $region45: #{actor_critic_act.1} parent=1 // pred_fallthru
      _
    // Predicated region
    $region46: #{actor_critic_act.1} parent=1 // pred_check
      _
    $region47: #{actor_critic_act.1} parent=1 // pred_check_branch
      %2040 = sbr.rel (0) target = $region49
    $region48: #{actor_critic_act.1} parent=1 // pred_region
      _
    $region49: #{actor_critic_act.1} parent=1 // pred_fallthru
      _
    %2041 = vsyncpa [#allocation3], 1

</llo_original>
